<compile_context>
chip_gen: v7x
topology: tpu7x:2x2x1
jax: 0.10.0
libtpu: 0.0.40
codegen_flags: <defaults>
</compile_context>

<pallas_src>
from functools import partial

import jax
import jax.numpy as jnp
from jax.experimental import pallas as pl
from jax.experimental.pallas import tpu as pltpu

EPS = 1e-5  # torch.nn.LayerNorm default eps


# ---------------------------------------------------------------- helpers ---
def _layernorm(x, gamma, beta):
    mu = jnp.mean(x, axis=-1, keepdims=True)
    var = jnp.mean((x - mu) ** 2, axis=-1, keepdims=True)      # biased var (torch LN)
    return (x - mu) * jax.lax.rsqrt(var + EPS) * gamma + beta   # rsqrt -> EUP


def _leaky_relu(x, slope):
    return jnp.where(x >= 0, x, slope * x)


def _pick_tile(n, candidates=(128, 64, 32, 16, 8)):
    for t in candidates:
        if n % t == 0:
            return t
    return n


# ------------------------------------------------------------ Pallas kernels
def linear_act_kernel(x_ref, wt_ref, b_ref, o_ref, *, slope):
    # y = LeakyReLU(x @ W^T + b)   x:(tr,Din)  wt = W^T:(Din,H)  b:(1,H)
    y = jnp.dot(x_ref[...], wt_ref[...], preferred_element_type=jnp.float32)
    y = y + b_ref[...]
    o_ref[...] = _leaky_relu(y, slope).astype(o_ref.dtype)


def hgnn_layers_kernel(adj_ref, u0_ref, i0_ref,
                       wfcu_ref, wfci_ref,
                       g1u_ref, b1u_ref, g2u_ref, b2u_ref,
                       g1i_ref, b1i_ref, g2i_ref, b2i_ref,
                       u_out_ref, i_out_ref, adjt_ref,
                       *, slope, n_layers):
    # Grid axis 0 iterates the HGNN layers sequentially ("arbitrary").
    # adj / u0 / i0 / outputs use constant block indices -> DMA'd once, resident
    # in VMEM for the entire network; per-layer weights stream per grid step.
    k = pl.program_id(0)
    bf16 = jnp.bfloat16

    @pl.when(k == 0)
    def _init():
        # adj.T computed once for the whole network, kept in persistent scratch.
        adjt_ref[...] = adj_ref[...].T
        u_out_ref[...] = u0_ref[...]
        i_out_ref[...] = i0_ref[...]

    adj = adj_ref[...]        # (U, I)  bf16 (exact for 0/1 adjacency)
    adjt = adjt_ref[...]      # (I, U)  bf16
    u = u_out_ref[...]        # (U, H)  f32 residual carry
    i = i_out_ref[...]        # (I, H)  f32 residual carry

    wfcu_t = wfcu_ref[0]      # (H, H) = Wfc_u^T (pre-transposed in wrapper)
    wfci_t = wfci_ref[0]

    # ---- user path: LeakyReLU(LN2(adj @ LN1((adj.T @ u) @ Wfc_u^T))) -------
    tmp_u = jnp.dot(adjt, u.astype(bf16), preferred_element_type=jnp.float32)      # (I,H)
    lat_u = jnp.dot(tmp_u, wfcu_t, preferred_element_type=jnp.float32)              # (I,H)
    lat_u = _layernorm(lat_u, g1u_ref[0], b1u_ref[0])
    agg_u = jnp.dot(adj, lat_u.astype(bf16), preferred_element_type=jnp.float32)    # (U,H)
    hyper_u = _leaky_relu(_layernorm(agg_u, g2u_ref[0], b2u_ref[0]), slope)

    # ---- item path (conv receives adj.T): ----------------------------------
    #      LeakyReLU(LN2(adj.T @ LN1((adj @ i) @ Wfc_i^T)))
    tmp_i = jnp.dot(adj, i.astype(bf16), preferred_element_type=jnp.float32)        # (U,H)
    lat_i = jnp.dot(tmp_i, wfci_t, preferred_element_type=jnp.float32)               # (U,H)
    lat_i = _layernorm(lat_i, g1i_ref[0], b1i_ref[0])
    agg_i = jnp.dot(adjt, lat_i.astype(bf16), preferred_element_type=jnp.float32)    # (I,H)
    hyper_i = _leaky_relu(_layernorm(agg_i, g2i_ref[0], b2i_ref[0]), slope)

    # residual carry; on the last layer fold in the stacked-mean (== /(L+1)).
    scale = jnp.where(k == n_layers - 1, 1.0 / (n_layers + 1), 1.0).astype(jnp.float32)
    u_out_ref[...] = (u + hyper_u) * scale
    i_out_ref[...] = (i + hyper_i) * scale


# ------------------------------------------------------------ call wrappers -
def linear_act(x, w, b, slope):
    # y = LeakyReLU(x @ W^T + b); W given in torch layout (H, Din).
    n, din = x.shape
    h = w.shape[0]
    wt = w.T                      # pre-transpose -> native (M,K)@(K,N) in-kernel
    tile_r = _pick_tile(n)
    return pl.pallas_call(
        partial(linear_act_kernel, slope=slope),
        out_shape=jax.ShapeDtypeStruct((n, h), jnp.float32),
        grid=(n // tile_r,),
        in_specs=[pl.BlockSpec((tile_r, din), lambda r: (r, 0)),
                  pl.BlockSpec((din, h), lambda r: (0, 0)),
                  pl.BlockSpec((1, h), lambda r: (0, 0))],
        out_specs=pl.BlockSpec((tile_r, h), lambda r: (r, 0)),
        compiler_params=pltpu.CompilerParams(dimension_semantics=("parallel",)),
        cost_estimate=pl.CostEstimate(
            flops=2 * n * din * h, transcendentals=0,
            bytes_accessed=4 * (n * din + din * h + n * h + h)),
    )(x, wt, b)


def hgnn_layers(adj_bf16, u0, i0, wfcu, wfci,
                g1u, b1u, g2u, b2u, g1i, b1i, g2i, b2i, *, slope, n_layers):
    U, I = adj_bf16.shape
    H = u0.shape[1]

    def full(shape):
        return pl.BlockSpec(shape, lambda k, _n=len(shape): (0,) * _n)

    w_spec = pl.BlockSpec((1, H, H), lambda k: (k, 0, 0))
    ln_spec = pl.BlockSpec((1, 1, H), lambda k: (k, 0, 0))

    grid_spec = pltpu.PrefetchScalarGridSpec(
        num_scalar_prefetch=0,
        grid=(n_layers,),
        in_specs=[full((U, I)), full((U, H)), full((I, H)),
                  w_spec, w_spec,
                  ln_spec, ln_spec, ln_spec, ln_spec,
                  ln_spec, ln_spec, ln_spec, ln_spec],
        out_specs=[full((U, H)), full((I, H))],
        scratch_shapes=[pltpu.VMEM((I, U), jnp.bfloat16)],   # persistent adj.T
    )

    flops = n_layers * (8 * U * I * H + 2 * H * H * (U + I))
    bytes_accessed = (U * I * 2 + 2 * (U + I) * H * 4
                      + n_layers * (2 * H * H + 8 * H) * 4)
    cost = pl.CostEstimate(flops=flops,
                           transcendentals=n_layers * 2 * (U + I),
                           bytes_accessed=bytes_accessed)

    # TODO(synk): for graphs whose adj does not fit VMEM, split each conv into a
    # two-phase tiled/pipelined structure (lat = LN1((A^T x)Wfc^T) tiled over
    # hyperedges; out = A @ lat tiled over rows) instead of this resident form.
    return pl.pallas_call(
        partial(hgnn_layers_kernel, slope=slope, n_layers=n_layers),
        out_shape=(jax.ShapeDtypeStruct((U, H), jnp.float32),
                   jax.ShapeDtypeStruct((I, H), jnp.float32)),
        grid_spec=grid_spec,
        compiler_params=pltpu.CompilerParams(
            dimension_semantics=("arbitrary",),          # layers carry a residual
            vmem_limit_bytes=48 * 1024 * 1024),          # safe on v5e/v6e/v7x
        cost_estimate=cost,
    )(adj_bf16, u0, i0, wfcu, wfci, g1u, b1u, g2u, b2u, g1i, b1i, g2i, b2i)


# ----------------------------------------------------------- model forward --
def hgnn_model_forward_cf(params, adj, user_indices, item_indices, *,
                          slope, n_layers):
    emb_table = params["user_entity_emb"]
    # TODO(synk): for very large entity tables, fuse this gather into the FC
    # kernel via PrefetchScalarGridSpec (indices in SMEM) instead of XLA gather.
    u0 = emb_table[user_indices]
    i0 = emb_table[item_indices]

    # dropout(act(fc(.))) — Dropout is identity in eval mode.
    # TODO(synk): training-mode Dropout (stateful RNG) not implemented; eval semantics used.
    u0 = linear_act(u0, params["fc_u_w"], params["fc_u_b"], slope)
    i0 = linear_act(i0, params["fc_i_w"], params["fc_i_b"], slope)

    if n_layers == 0:
        return u0, i0

    adj_bf = adj.astype(jnp.bfloat16)   # exact for a 0/1 adjacency
    # pre-transpose + stack per-layer params so the kernel streams them per layer
    wfcu = jnp.stack([params["hgnn_u"][k]["w_fc"].T for k in range(n_layers)])
    wfci = jnp.stack([params["hgnn_i"][k]["w_fc"].T for k in range(n_layers)])

    def stack_ln(path, name):
        return jnp.stack([params[path][k][name] for k in range(n_layers)])  # (L,1,H)

    u_mean, i_mean = hgnn_layers(
        adj_bf, u0, i0, wfcu, wfci,
        stack_ln("hgnn_u", "ln1_g"), stack_ln("hgnn_u", "ln1_b"),
        stack_ln("hgnn_u", "ln2_g"), stack_ln("hgnn_u", "ln2_b"),
        stack_ln("hgnn_i", "ln1_g"), stack_ln("hgnn_i", "ln1_b"),
        stack_ln("hgnn_i", "ln2_g"), stack_ln("hgnn_i", "ln2_b"),
        slope=slope, n_layers=n_layers)
    return u_mean, i_mean


# -------------------------------------------------- pure-JAX reference ------
def _reference_forward(params, adj, user_indices, item_indices, *, slope, n_layers):
    emb = params["user_entity_emb"]

    def lrelu(x):
        return jnp.where(x >= 0, x, slope * x)

    def ln(x, g, b):
        mu = x.mean(-1, keepdims=True)
        var = ((x - mu) ** 2).mean(-1, keepdims=True)
        return (x - mu) / jnp.sqrt(var + EPS) * g + b

    u = lrelu(emb[user_indices] @ params["fc_u_w"].T + params["fc_u_b"])
    i = lrelu(emb[item_indices] @ params["fc_i_w"].T + params["fc_i_b"])
    all_u, all_i = [u], [i]
    for k in range(n_layers):
        pu, pi_ = params["hgnn_u"][k], params["hgnn_i"][k]
        lat_u = ln((adj.T @ u) @ pu["w_fc"].T, pu["ln1_g"], pu["ln1_b"])
        h_u = lrelu(ln(adj @ lat_u, pu["ln2_g"], pu["ln2_b"]))
        lat_i = ln((adj @ i) @ pi_["w_fc"].T, pi_["ln1_g"], pi_["ln1_b"])
        h_i = lrelu(ln(adj.T @ lat_i, pi_["ln2_g"], pi_["ln2_b"]))
        u = u + h_u
        i = i + h_i
        all_u.append(h_u)
        all_i.append(h_i)
    return (jnp.mean(jnp.stack(all_u, 1), 1), jnp.mean(jnp.stack(all_i, 1), 1))


# -------------------------------------------------------------- param init --
def init_params(key, *, n_entities, input_dim, hyper_dim, n_layers):
    keys = iter(jax.random.split(key, 64))

    def xavier(shape):
        bound = (6.0 / (shape[0] + shape[1])) ** 0.5
        return jax.random.uniform(next(keys), shape, jnp.float32, -bound, bound)

    def lin_w(shape):  # _init_weights: normal(std=0.01)
        return 0.01 * jax.random.normal(next(keys), shape, jnp.float32)

    def conv_params():
        return {
            "w_fc": lin_w((hyper_dim, hyper_dim)),          # Linear(no bias)
            "ln1_g": jnp.ones((1, hyper_dim), jnp.float32),
            "ln1_b": jnp.zeros((1, hyper_dim), jnp.float32),
            "ln2_g": jnp.ones((1, hyper_dim), jnp.float32),
            "ln2_b": jnp.zeros((1, hyper_dim), jnp.float32),
        }

    return {
        "user_entity_emb": xavier((n_entities, input_dim)),
        "fc_u_w": lin_w((hyper_dim, input_dim)),
        "fc_u_b": jnp.zeros((1, hyper_dim), jnp.float32),
        "fc_i_w": lin_w((hyper_dim, input_dim)),
        "fc_i_b": jnp.zeros((1, hyper_dim), jnp.float32),
        "hgnn_u": [conv_params() for _ in range(n_layers)],
        "hgnn_i": [conv_params() for _ in range(n_layers)],
    }


# --------------------------------------------------------------------- main -
if __name__ == "__main__":
    n_users, n_items = 128, 256          # lane/sublane-aligned small sizes
    n_entities = n_users + n_items       # embedding table covers users + items
    input_dim, hyper_dim = 128, 128      # lane-dense feature axis
    n_layers = 2
    leaky_p = 0.2

    root = jax.random.PRNGKey(0)
    k_param, k_adj = jax.random.split(root)

    params = init_params(k_param, n_entities=n_entities, input_dim=input_dim,
                         hyper_dim=hyper_dim, n_layers=n_layers)

    # dense stand-in for the sparse user-item interaction matrix (0/1)
    adj = (jax.random.uniform(k_adj, (n_users, n_items)) < 0.3).astype(jnp.float32)

    user_indices = jnp.arange(n_users, dtype=jnp.int32)
    item_indices = jnp.arange(n_users, n_users + n_items, dtype=jnp.int32)

    fwd = jax.jit(partial(hgnn_model_forward_cf, slope=leaky_p, n_layers=n_layers))
    user_emb, item_emb = fwd(params, adj, user_indices, item_indices)
    jax.block_until_ready((user_emb, item_emb))

    ref_u, ref_i = _reference_forward(params, adj, user_indices, item_indices,
                                      slope=leaky_p, n_layers=n_layers)

    assert user_emb.shape == (n_users, hyper_dim)
    assert item_emb.shape == (n_items, hyper_dim)
    assert bool(jnp.all(jnp.isfinite(user_emb))) and bool(jnp.all(jnp.isfinite(item_emb)))
    # bf16 adj-matmuls (f32 accumulation) vs f32 reference -> loose tolerance
    assert bool(jnp.allclose(user_emb, ref_u, atol=2e-1, rtol=2e-1))
    assert bool(jnp.allclose(item_emb, ref_i, atol=2e-1, rtol=2e-1))
    print("KERNEL_OK")
</pallas_src>

<mosaic_0001>
module attributes {stable_mosaic.version = 11 : i64} {
  func.func @linear_act_kernel(%arg0: i32, %arg1: memref<128x128xf32, #tpu.memory_space<vmem>>, %arg2: memref<128x128xf32, #tpu.memory_space<vmem>>, %arg3: memref<1x128xf32, #tpu.memory_space<vmem>>, %arg4: memref<128x128xf32, #tpu.memory_space<vmem>>) attributes {dimension_semantics = [#tpu.dimension_semantics<parallel>], iteration_bounds = array<i64: 1>, scalar_prefetch = 0 : i64, scratch_operands = 0 : i64, tpu.core_type = #tpu.core_type<tc>, window_params = [{transform_indices = @transform_0, window_bounds = array<i64: 128, 128>}, {pipeline_mode = #tpu.pipeline_mode<synchronous>, transform_indices = @transform_1, window_bounds = array<i64: 128, 128>}, {pipeline_mode = #tpu.pipeline_mode<synchronous>, transform_indices = @transform_2, window_bounds = array<i64: 1, 128>}, {transform_indices = @transform_3, window_bounds = array<i64: 128, 128>}]} {
    %c0 = arith.constant 0 : index
    %c0_0 = arith.constant 0 : index
    %0 = vector.load %arg1[%c0, %c0_0] : memref<128x128xf32, #tpu.memory_space<vmem>>, vector<128x128xf32>
    %c0_1 = arith.constant 0 : index
    %c0_2 = arith.constant 0 : index
    %1 = vector.load %arg2[%c0_1, %c0_2] : memref<128x128xf32, #tpu.memory_space<vmem>>, vector<128x128xf32>
    %cst = arith.constant dense<0.000000e+00> : vector<128x128xf32>
    %2 = tpu.matmul %0, %1, %cst {dimension_numbers = #tpu.dot_dimension_numbers<[1], [0], [0], [1], [0, 0, 1, 1], [], []>} : vector<128x128xf32>, vector<128x128xf32>, vector<128x128xf32> -> vector<128x128xf32>
    %c0_3 = arith.constant 0 : index
    %c0_4 = arith.constant 0 : index
    %3 = vector.load %arg3[%c0_3, %c0_4] : memref<1x128xf32, #tpu.memory_space<vmem>>, vector<1x128xf32>
    %4 = vector.broadcast %3 : vector<1x128xf32> to vector<128x128xf32>
    %5 = arith.addf %2, %4 : vector<128x128xf32>
    %cst_5 = arith.constant 0.000000e+00 : f32
    %6 = vector.broadcast %cst_5 : f32 to vector<128x128xf32>
    %7 = arith.cmpf oge, %5, %6 : vector<128x128xf32>
    %cst_6 = arith.constant 2.000000e-01 : f32
    %8 = vector.broadcast %cst_6 : f32 to vector<128x128xf32>
    %9 = arith.mulf %8, %5 : vector<128x128xf32>
    %10 = arith.select %7, %5, %9 : vector<128x128xi1>, vector<128x128xf32>
    %c0_7 = arith.constant 0 : index
    %c0_8 = arith.constant 0 : index
    %11 = vector.load %arg4[%c0_7, %c0_8] : memref<128x128xf32, #tpu.memory_space<vmem>>, vector<128x128xf32>
    tpu.vector_store %arg4[%c0_7, %c0_8], %10 {strides = array<i32>} : memref<128x128xf32, #tpu.memory_space<vmem>>, vector<128x128xf32>,
    return
  }
  func.func @transform_0(%arg0: i32) -> (i32, i32) {
    %c0_i32 = arith.constant 0 : i32
    %c0_i32_0 = arith.constant 0 : i32
    return %arg0, %c0_i32 : i32, i32
  }
  func.func @transform_1(%arg0: i32) -> (i32, i32) {
    %c0_i32 = arith.constant 0 : i32
    %c0_i32_0 = arith.constant 0 : i32
    %c0_i32_1 = arith.constant 0 : i32
    return %c0_i32, %c0_i32_0 : i32, i32
  }
  func.func @transform_2(%arg0: i32) -> (i32, i32) {
    %c0_i32 = arith.constant 0 : i32
    %c0_i32_0 = arith.constant 0 : i32
    %c0_i32_1 = arith.constant 0 : i32
    return %c0_i32, %c0_i32_0 : i32, i32
  }
  func.func @transform_3(%arg0: i32) -> (i32, i32) {
    %c0_i32 = arith.constant 0 : i32
    %c0_i32_0 = arith.constant 0 : i32
    return %arg0, %c0_i32 : i32, i32
  }
}

module attributes {stable_mosaic.version = 11 : i64} {
  func.func @linear_act_kernel(%arg0: i32, %arg1: memref<128x128xf32, #tpu.memory_space<vmem>>, %arg2: memref<128x128xf32, #tpu.memory_space<vmem>>, %arg3: memref<1x128xf32, #tpu.memory_space<vmem>>, %arg4: memref<128x128xf32, #tpu.memory_space<vmem>>) attributes {dimension_semantics = [#tpu.dimension_semantics<parallel>], iteration_bounds = array<i64: 2>, scalar_prefetch = 0 : i64, scratch_operands = 0 : i64, tpu.core_type = #tpu.core_type<tc>, window_params = [{transform_indices = @transform_0, window_bounds = array<i64: 128, 128>}, {pipeline_mode = #tpu.pipeline_mode<synchronous>, transform_indices = @transform_1, window_bounds = array<i64: 128, 128>}, {pipeline_mode = #tpu.pipeline_mode<synchronous>, transform_indices = @transform_2, window_bounds = array<i64: 1, 128>}, {transform_indices = @transform_3, window_bounds = array<i64: 128, 128>}]} {
    %c0 = arith.constant 0 : index
    %c0_0 = arith.constant 0 : index
    %0 = vector.load %arg1[%c0, %c0_0] : memref<128x128xf32, #tpu.memory_space<vmem>>, vector<128x128xf32>
    %c0_1 = arith.constant 0 : index
    %c0_2 = arith.constant 0 : index
    %1 = vector.load %arg2[%c0_1, %c0_2] : memref<128x128xf32, #tpu.memory_space<vmem>>, vector<128x128xf32>
    %cst = arith.constant dense<0.000000e+00> : vector<128x128xf32>
    %2 = tpu.matmul %0, %1, %cst {dimension_numbers = #tpu.dot_dimension_numbers<[1], [0], [0], [1], [0, 0, 1, 1], [], []>} : vector<128x128xf32>, vector<128x128xf32>, vector<128x128xf32> -> vector<128x128xf32>
    %c0_3 = arith.constant 0 : index
    %c0_4 = arith.constant 0 : index
    %3 = vector.load %arg3[%c0_3, %c0_4] : memref<1x128xf32, #tpu.memory_space<vmem>>, vector<1x128xf32>
    %4 = vector.broadcast %3 : vector<1x128xf32> to vector<128x128xf32>
    %5 = arith.addf %2, %4 : vector<128x128xf32>
    %cst_5 = arith.constant 0.000000e+00 : f32
    %6 = vector.broadcast %cst_5 : f32 to vector<128x128xf32>
    %7 = arith.cmpf oge, %5, %6 : vector<128x128xf32>
    %cst_6 = arith.constant 2.000000e-01 : f32
    %8 = vector.broadcast %cst_6 : f32 to vector<128x128xf32>
    %9 = arith.mulf %8, %5 : vector<128x128xf32>
    %10 = arith.select %7, %5, %9 : vector<128x128xi1>, vector<128x128xf32>
    %c0_7 = arith.constant 0 : index
    %c0_8 = arith.constant 0 : index
    %11 = vector.load %arg4[%c0_7, %c0_8] : memref<128x128xf32, #tpu.memory_space<vmem>>, vector<128x128xf32>
    tpu.vector_store %arg4[%c0_7, %c0_8], %10 {strides = array<i32>} : memref<128x128xf32, #tpu.memory_space<vmem>>, vector<128x128xf32>,
    return
  }
  func.func @transform_0(%arg0: i32) -> (i32, i32) {
    %c0_i32 = arith.constant 0 : i32
    %c0_i32_0 = arith.constant 0 : i32
    return %arg0, %c0_i32 : i32, i32
  }
  func.func @transform_1(%arg0: i32) -> (i32, i32) {
    %c0_i32 = arith.constant 0 : i32
    %c0_i32_0 = arith.constant 0 : i32
    %c0_i32_1 = arith.constant 0 : i32
    return %c0_i32, %c0_i32_0 : i32, i32
  }
  func.func @transform_2(%arg0: i32) -> (i32, i32) {
    %c0_i32 = arith.constant 0 : i32
    %c0_i32_0 = arith.constant 0 : i32
    %c0_i32_1 = arith.constant 0 : i32
    return %c0_i32, %c0_i32_0 : i32, i32
  }
  func.func @transform_3(%arg0: i32) -> (i32, i32) {
    %c0_i32 = arith.constant 0 : i32
    %c0_i32_0 = arith.constant 0 : i32
    return %arg0, %c0_i32 : i32, i32
  }
}

module attributes {stable_mosaic.version = 11 : i64} {
  func.func @hgnn_layers_kernel(%arg0: i32, %arg1: memref<128x256xbf16, #tpu.memory_space<vmem>>, %arg2: memref<128x128xf32, #tpu.memory_space<vmem>>, %arg3: memref<256x128xf32, #tpu.memory_space<vmem>>, %arg4: memref<1x128x128xf32, #tpu.memory_space<vmem>>, %arg5: memref<1x128x128xf32, #tpu.memory_space<vmem>>, %arg6: memref<1x1x128xf32, #tpu.memory_space<vmem>>, %arg7: memref<1x1x128xf32, #tpu.memory_space<vmem>>, %arg8: memref<1x1x128xf32, #tpu.memory_space<vmem>>, %arg9: memref<1x1x128xf32, #tpu.memory_space<vmem>>, %arg10: memref<1x1x128xf32, #tpu.memory_space<vmem>>, %arg11: memref<1x1x128xf32, #tpu.memory_space<vmem>>, %arg12: memref<1x1x128xf32, #tpu.memory_space<vmem>>, %arg13: memref<1x1x128xf32, #tpu.memory_space<vmem>>, %arg14: memref<128x128xf32, #tpu.memory_space<vmem>>, %arg15: memref<256x128xf32, #tpu.memory_space<vmem>>, %arg16: memref<256x128xbf16, #tpu.memory_space<vmem>>) attributes {dimension_semantics = [#tpu.dimension_semantics<arbitrary>], iteration_bounds = array<i64: 2>, scalar_prefetch = 0 : i64, scratch_operands = 1 : i64, tpu.core_type = #tpu.core_type<tc>, window_params = [{pipeline_mode = #tpu.pipeline_mode<synchronous>, transform_indices = @transform_0, window_bounds = array<i64: 128, 256>}, {pipeline_mode = #tpu.pipeline_mode<synchronous>, transform_indices = @transform_1, window_bounds = array<i64: 128, 128>}, {pipeline_mode = #tpu.pipeline_mode<synchronous>, transform_indices = @transform_2, window_bounds = array<i64: 256, 128>}, {transform_indices = @transform_3, window_bounds = array<i64: 1, 128, 128>}, {transform_indices = @transform_4, window_bounds = array<i64: 1, 128, 128>}, {transform_indices = @transform_5, window_bounds = array<i64: 1, 1, 128>}, {transform_indices = @transform_6, window_bounds = array<i64: 1, 1, 128>}, {transform_indices = @transform_7, window_bounds = array<i64: 1, 1, 128>}, {transform_indices = @transform_8, window_bounds = array<i64: 1, 1, 128>}, {transform_indices = @transform_9, window_bounds = array<i64: 1, 1, 128>}, {transform_indices = @transform_10, window_bounds = array<i64: 1, 1, 128>}, {transform_indices = @transform_11, window_bounds = array<i64: 1, 1, 128>}, {transform_indices = @transform_12, window_bounds = array<i64: 1, 1, 128>}, {pipeline_mode = #tpu.pipeline_mode<synchronous>, transform_indices = @transform_13, window_bounds = array<i64: 128, 128>}, {pipeline_mode = #tpu.pipeline_mode<synchronous>, transform_indices = @transform_14, window_bounds = array<i64: 256, 128>}]} {
    %c0_i32 = arith.constant 0 : i32
    %0 = arith.cmpi eq, %arg0, %c0_i32 : i32
    %1 = arith.extui %0 : i1 to i32
    %c0_i32_0 = arith.constant 0 : i32
    %2 = arith.cmpi ne, %1, %c0_i32_0 : i32
    scf.if %2 {
      %c0_73 = arith.constant 0 : index
      %c0_74 = arith.constant 0 : index
      %145 = vector.load %arg1[%c0_73, %c0_74] : memref<128x256xbf16, #tpu.memory_space<vmem>>, vector<128x256xbf16>
      %146 = tpu.transpose %145, [1, 0] : vector<128x256xbf16> -> vector<256x128xbf16>
      %c0_75 = arith.constant 0 : index
      %c0_76 = arith.constant 0 : index
      %147 = vector.load %arg16[%c0_75, %c0_76] : memref<256x128xbf16, #tpu.memory_space<vmem>>, vector<256x128xbf16>
      tpu.vector_store %arg16[%c0_75, %c0_76], %146 {strides = array<i32>} : memref<256x128xbf16, #tpu.memory_space<vmem>>, vector<256x128xbf16>,
      %c0_77 = arith.constant 0 : index
      %c0_78 = arith.constant 0 : index
      %148 = vector.load %arg2[%c0_77, %c0_78] : memref<128x128xf32, #tpu.memory_space<vmem>>, vector<128x128xf32>
      %c0_79 = arith.constant 0 : index
      %c0_80 = arith.constant 0 : index
      %149 = vector.load %arg14[%c0_79, %c0_80] : memref<128x128xf32, #tpu.memory_space<vmem>>, vector<128x128xf32>
      tpu.vector_store %arg14[%c0_79, %c0_80], %148 {strides = array<i32>} : memref<128x128xf32, #tpu.memory_space<vmem>>, vector<128x128xf32>,
      %c0_81 = arith.constant 0 : index
      %c0_82 = arith.constant 0 : index
      %150 = vector.load %arg3[%c0_81, %c0_82] : memref<256x128xf32, #tpu.memory_space<vmem>>, vector<256x128xf32>
      %c0_83 = arith.constant 0 : index
      %c0_84 = arith.constant 0 : index
      %151 = vector.load %arg15[%c0_83, %c0_84] : memref<256x128xf32, #tpu.memory_space<vmem>>, vector<256x128xf32>
      tpu.vector_store %arg15[%c0_83, %c0_84], %150 {strides = array<i32>} : memref<256x128xf32, #tpu.memory_space<vmem>>, vector<256x128xf32>,
    } else {
    }
    %c0 = arith.constant 0 : index
    %c0_1 = arith.constant 0 : index
    %3 = vector.load %arg1[%c0, %c0_1] : memref<128x256xbf16, #tpu.memory_space<vmem>>, vector<128x256xbf16>
    %c0_2 = arith.constant 0 : index
    %c0_3 = arith.constant 0 : index
    %4 = vector.load %arg16[%c0_2, %c0_3] : memref<256x128xbf16, #tpu.memory_space<vmem>>, vector<256x128xbf16>
    %c0_4 = arith.constant 0 : index
    %c0_5 = arith.constant 0 : index
    %5 = vector.load %arg14[%c0_4, %c0_5] : memref<128x128xf32, #tpu.memory_space<vmem>>, vector<128x128xf32>
    %c0_6 = arith.constant 0 : index
    %c0_7 = arith.constant 0 : index
    %6 = vector.load %arg15[%c0_6, %c0_7] : memref<256x128xf32, #tpu.memory_space<vmem>>, vector<256x128xf32>
    %c0_8 = arith.constant 0 : index
    %c0_9 = arith.constant 0 : index
    %c0_10 = arith.constant 0 : index
    %7 = vector.load %arg4[%c0_8, %c0_9, %c0_10] : memref<1x128x128xf32, #tpu.memory_space<vmem>>, vector<1x128x128xf32>
    %8 = vector.shape_cast %7 : vector<1x128x128xf32> to vector<128x128xf32>
    %c0_11 = arith.constant 0 : index
    %c0_12 = arith.constant 0 : index
    %c0_13 = arith.constant 0 : index
    %9 = vector.load %arg5[%c0_11, %c0_12, %c0_13] : memref<1x128x128xf32, #tpu.memory_space<vmem>>, vector<1x128x128xf32>
    %10 = vector.shape_cast %9 : vector<1x128x128xf32> to vector<128x128xf32>
    %11 = arith.truncf %5 : vector<128x128xf32> to vector<128x128xbf16>
    %cst = arith.constant dense<0.000000e+00> : vector<256x128xf32>
    %12 = tpu.matmul %4, %11, %cst {dimension_numbers = #tpu.dot_dimension_numbers<[1], [0], [0], [1], [0, 0, 1, 1], [], []>} : vector<256x128xbf16>, vector<128x128xbf16>, vector<256x128xf32> -> vector<256x128xf32>
    %cst_14 = arith.constant dense<0.000000e+00> : vector<256x128xf32>
    %13 = tpu.matmul %12, %8, %cst_14 {dimension_numbers = #tpu.dot_dimension_numbers<[1], [0], [0], [1], [0, 0, 1, 1], [], []>} : vector<256x128xf32>, vector<128x128xf32>, vector<256x128xf32> -> vector<256x128xf32>
    %c0_15 = arith.constant 0 : index
    %c0_16 = arith.constant 0 : index
    %c0_17 = arith.constant 0 : index
    %14 = vector.load %arg6[%c0_15, %c0_16, %c0_17] : memref<1x1x128xf32, #tpu.memory_space<vmem>>, vector<1x1x128xf32>
    %15 = vector.shape_cast %14 : vector<1x1x128xf32> to vector<1x128xf32>
    %c0_18 = arith.constant 0 : index
    %c0_19 = arith.constant 0 : index
    %c0_20 = arith.constant 0 : index
    %16 = vector.load %arg7[%c0_18, %c0_19, %c0_20] : memref<1x1x128xf32, #tpu.memory_space<vmem>>, vector<1x1x128xf32>
    %17 = vector.shape_cast %16 : vector<1x1x128xf32> to vector<1x128xf32>
    %cst_21 = arith.constant dense<0.000000e+00> : vector<256xf32>
    %18 = vector.multi_reduction <add>, %13, %cst_21 [1] : vector<256x128xf32> to vector<256xf32>
    %19 = vector.shape_cast %18 : vector<256xf32> to vector<256x1xf32>
    %cst_22 = arith.constant 1.280000e+02 : f32
    %20 = vector.broadcast %cst_22 : f32 to vector<256x1xf32>
    %21 = arith.divf %19, %20 : vector<256x1xf32>
    %22 = vector.broadcast %21 : vector<256x1xf32> to vector<256x128xf32>
    %23 = arith.subf %13, %22 : vector<256x128xf32>
    %24 = arith.mulf %23, %23 : vector<256x128xf32>
    %cst_23 = arith.constant dense<0.000000e+00> : vector<256xf32>
    %25 = vector.multi_reduction <add>, %24, %cst_23 [1] : vector<256x128xf32> to vector<256xf32>
    %26 = vector.shape_cast %25 : vector<256xf32> to vector<256x1xf32>
    %cst_24 = arith.constant 1.280000e+02 : f32
    %27 = vector.broadcast %cst_24 : f32 to vector<256x1xf32>
    %28 = arith.divf %26, %27 : vector<256x1xf32>
    %29 = vector.broadcast %21 : vector<256x1xf32> to vector<256x128xf32>
    %30 = arith.subf %13, %29 : vector<256x128xf32>
    %cst_25 = arith.constant 9.99999974E-6 : f32
    %31 = vector.broadcast %cst_25 : f32 to vector<256x1xf32>
    %32 = arith.addf %28, %31 : vector<256x1xf32>
    %33 = math.rsqrt %32 : vector<256x1xf32>
    %34 = vector.broadcast %33 : vector<256x1xf32> to vector<256x128xf32>
    %35 = arith.mulf %30, %34 : vector<256x128xf32>
    %36 = vector.broadcast %15 : vector<1x128xf32> to vector<256x128xf32>
    %37 = arith.mulf %35, %36 : vector<256x128xf32>
    %38 = vector.broadcast %17 : vector<1x128xf32> to vector<256x128xf32>
    %39 = arith.addf %37, %38 : vector<256x128xf32>
    %40 = arith.truncf %39 : vector<256x128xf32> to vector<256x128xbf16>
    %cst_26 = arith.constant dense<0.000000e+00> : vector<128x128xf32>
    %41 = tpu.matmul %3, %40, %cst_26 {dimension_numbers = #tpu.dot_dimension_numbers<[1], [0], [0], [1], [0, 0, 1, 1], [], []>} : vector<128x256xbf16>, vector<256x128xbf16>, vector<128x128xf32> -> vector<128x128xf32>
    %c0_27 = arith.constant 0 : index
    %c0_28 = arith.constant 0 : index
    %c0_29 = arith.constant 0 : index
    %42 = vector.load %arg8[%c0_27, %c0_28, %c0_29] : memref<1x1x128xf32, #tpu.memory_space<vmem>>, vector<1x1x128xf32>
    %43 = vector.shape_cast %42 : vector<1x1x128xf32> to vector<1x128xf32>
    %c0_30 = arith.constant 0 : index
    %c0_31 = arith.constant 0 : index
    %c0_32 = arith.constant 0 : index
    %44 = vector.load %arg9[%c0_30, %c0_31, %c0_32] : memref<1x1x128xf32, #tpu.memory_space<vmem>>, vector<1x1x128xf32>
    %45 = vector.shape_cast %44 : vector<1x1x128xf32> to vector<1x128xf32>
    %cst_33 = arith.constant dense<0.000000e+00> : vector<128xf32>
    %46 = vector.multi_reduction <add>, %41, %cst_33 [1] : vector<128x128xf32> to vector<128xf32>
    %47 = vector.shape_cast %46 : vector<128xf32> to vector<128x1xf32>
    %cst_34 = arith.constant 1.280000e+02 : f32
    %48 = vector.broadcast %cst_34 : f32 to vector<128x1xf32>
    %49 = arith.divf %47, %48 : vector<128x1xf32>
    %50 = vector.broadcast %49 : vector<128x1xf32> to vector<128x128xf32>
    %51 = arith.subf %41, %50 : vector<128x128xf32>
    %52 = arith.mulf %51, %51 : vector<128x128xf32>
    %cst_35 = arith.constant dense<0.000000e+00> : vector<128xf32>
    %53 = vector.multi_reduction <add>, %52, %cst_35 [1] : vector<128x128xf32> to vector<128xf32>
    %54 = vector.shape_cast %53 : vector<128xf32> to vector<128x1xf32>
    %cst_36 = arith.constant 1.280000e+02 : f32
    %55 = vector.broadcast %cst_36 : f32 to vector<128x1xf32>
    %56 = arith.divf %54, %55 : vector<128x1xf32>
    %57 = vector.broadcast %49 : vector<128x1xf32> to vector<128x128xf32>
    %58 = arith.subf %41, %57 : vector<128x128xf32>
    %cst_37 = arith.constant 9.99999974E-6 : f32
    %59 = vector.broadcast %cst_37 : f32 to vector<128x1xf32>
    %60 = arith.addf %56, %59 : vector<128x1xf32>
    %61 = math.rsqrt %60 : vector<128x1xf32>
    %62 = vector.broadcast %61 : vector<128x1xf32> to vector<128x128xf32>
    %63 = arith.mulf %58, %62 : vector<128x128xf32>
    %64 = vector.broadcast %43 : vector<1x128xf32> to vector<128x128xf32>
    %65 = arith.mulf %63, %64 : vector<128x128xf32>
    %66 = vector.broadcast %45 : vector<1x128xf32> to vector<128x128xf32>
    %67 = arith.addf %65, %66 : vector<128x128xf32>
    %cst_38 = arith.constant 0.000000e+00 : f32
    %68 = vector.broadcast %cst_38 : f32 to vector<128x128xf32>
    %69 = arith.cmpf oge, %67, %68 : vector<128x128xf32>
    %cst_39 = arith.constant 2.000000e-01 : f32
    %70 = vector.broadcast %cst_39 : f32 to vector<128x128xf32>
    %71 = arith.mulf %70, %67 : vector<128x128xf32>
    %72 = arith.select %69, %67, %71 : vector<128x128xi1>, vector<128x128xf32>
    %73 = arith.truncf %6 : vector<256x128xf32> to vector<256x128xbf16>
    %cst_40 = arith.constant dense<0.000000e+00> : vector<128x128xf32>
    %74 = tpu.matmul %3, %73, %cst_40 {dimension_numbers = #tpu.dot_dimension_numbers<[1], [0], [0], [1], [0, 0, 1, 1], [], []>} : vector<128x256xbf16>, vector<256x128xbf16>, vector<128x128xf32> -> vector<128x128xf32>
    %cst_41 = arith.constant dense<0.000000e+00> : vector<128x128xf32>
    %75 = tpu.matmul %74, %10, %cst_41 {dimension_numbers = #tpu.dot_dimension_numbers<[1], [0], [0], [1], [0, 0, 1, 1], [], []>} : vector<128x128xf32>, vector<128x128xf32>, vector<128x128xf32> -> vector<128x128xf32>
    %c0_42 = arith.constant 0 : index
    %c0_43 = arith.constant 0 : index
    %c0_44 = arith.constant 0 : index
    %76 = vector.load %arg10[%c0_42, %c0_43, %c0_44] : memref<1x1x128xf32, #tpu.memory_space<vmem>>, vector<1x1x128xf32>
    %77 = vector.shape_cast %76 : vector<1x1x128xf32> to vector<1x128xf32>
    %c0_45 = arith.constant 0 : index
    %c0_46 = arith.constant 0 : index
    %c0_47 = arith.constant 0 : index
    %78 = vector.load %arg11[%c0_45, %c0_46, %c0_47] : memref<1x1x128xf32, #tpu.memory_space<vmem>>, vector<1x1x128xf32>
    %79 = vector.shape_cast %78 : vector<1x1x128xf32> to vector<1x128xf32>
    %cst_48 = arith.constant dense<0.000000e+00> : vector<128xf32>
    %80 = vector.multi_reduction <add>, %75, %cst_48 [1] : vector<128x128xf32> to vector<128xf32>
    %81 = vector.shape_cast %80 : vector<128xf32> to vector<128x1xf32>
    %cst_49 = arith.constant 1.280000e+02 : f32
    %82 = vector.broadcast %cst_49 : f32 to vector<128x1xf32>
    %83 = arith.divf %81, %82 : vector<128x1xf32>
    %84 = vector.broadcast %83 : vector<128x1xf32> to vector<128x128xf32>
    %85 = arith.subf %75, %84 : vector<128x128xf32>
    %86 = arith.mulf %85, %85 : vector<128x128xf32>
    %cst_50 = arith.constant dense<0.000000e+00> : vector<128xf32>
    %87 = vector.multi_reduction <add>, %86, %cst_50 [1] : vector<128x128xf32> to vector<128xf32>
    %88 = vector.shape_cast %87 : vector<128xf32> to vector<128x1xf32>
    %cst_51 = arith.constant 1.280000e+02 : f32
    %89 = vector.broadcast %cst_51 : f32 to vector<128x1xf32>
    %90 = arith.divf %88, %89 : vector<128x1xf32>
    %91 = vector.broadcast %83 : vector<128x1xf32> to vector<128x128xf32>
    %92 = arith.subf %75, %91 : vector<128x128xf32>
    %cst_52 = arith.constant 9.99999974E-6 : f32
    %93 = vector.broadcast %cst_52 : f32 to vector<128x1xf32>
    %94 = arith.addf %90, %93 : vector<128x1xf32>
    %95 = math.rsqrt %94 : vector<128x1xf32>
    %96 = vector.broadcast %95 : vector<128x1xf32> to vector<128x128xf32>
    %97 = arith.mulf %92, %96 : vector<128x128xf32>
    %98 = vector.broadcast %77 : vector<1x128xf32> to vector<128x128xf32>
    %99 = arith.mulf %97, %98 : vector<128x128xf32>
    %100 = vector.broadcast %79 : vector<1x128xf32> to vector<128x128xf32>
    %101 = arith.addf %99, %100 : vector<128x128xf32>
    %102 = arith.truncf %101 : vector<128x128xf32> to vector<128x128xbf16>
    %cst_53 = arith.constant dense<0.000000e+00> : vector<256x128xf32>
    %103 = tpu.matmul %4, %102, %cst_53 {dimension_numbers = #tpu.dot_dimension_numbers<[1], [0], [0], [1], [0, 0, 1, 1], [], []>} : vector<256x128xbf16>, vector<128x128xbf16>, vector<256x128xf32> -> vector<256x128xf32>
    %c0_54 = arith.constant 0 : index
    %c0_55 = arith.constant 0 : index
    %c0_56 = arith.constant 0 : index
    %104 = vector.load %arg12[%c0_54, %c0_55, %c0_56] : memref<1x1x128xf32, #tpu.memory_space<vmem>>, vector<1x1x128xf32>
    %105 = vector.shape_cast %104 : vector<1x1x128xf32> to vector<1x128xf32>
    %c0_57 = arith.constant 0 : index
    %c0_58 = arith.constant 0 : index
    %c0_59 = arith.constant 0 : index
    %106 = vector.load %arg13[%c0_57, %c0_58, %c0_59] : memref<1x1x128xf32, #tpu.memory_space<vmem>>, vector<1x1x128xf32>
    %107 = vector.shape_cast %106 : vector<1x1x128xf32> to vector<1x128xf32>
    %cst_60 = arith.constant dense<0.000000e+00> : vector<256xf32>
    %108 = vector.multi_reduction <add>, %103, %cst_60 [1] : vector<256x128xf32> to vector<256xf32>
    %109 = vector.shape_cast %108 : vector<256xf32> to vector<256x1xf32>
    %cst_61 = arith.constant 1.280000e+02 : f32
    %110 = vector.broadcast %cst_61 : f32 to vector<256x1xf32>
    %111 = arith.divf %109, %110 : vector<256x1xf32>
    %112 = vector.broadcast %111 : vector<256x1xf32> to vector<256x128xf32>
    %113 = arith.subf %103, %112 : vector<256x128xf32>
    %114 = arith.mulf %113, %113 : vector<256x128xf32>
    %cst_62 = arith.constant dense<0.000000e+00> : vector<256xf32>
    %115 = vector.multi_reduction <add>, %114, %cst_62 [1] : vector<256x128xf32> to vector<256xf32>
    %116 = vector.shape_cast %115 : vector<256xf32> to vector<256x1xf32>
    %cst_63 = arith.constant 1.280000e+02 : f32
    %117 = vector.broadcast %cst_63 : f32 to vector<256x1xf32>
    %118 = arith.divf %116, %117 : vector<256x1xf32>
    %119 = vector.broadcast %111 : vector<256x1xf32> to vector<256x128xf32>
    %120 = arith.subf %103, %119 : vector<256x128xf32>
    %cst_64 = arith.constant 9.99999974E-6 : f32
    %121 = vector.broadcast %cst_64 : f32 to vector<256x1xf32>
    %122 = arith.addf %118, %121 : vector<256x1xf32>
    %123 = math.rsqrt %122 : vector<256x1xf32>
    %124 = vector.broadcast %123 : vector<256x1xf32> to vector<256x128xf32>
    %125 = arith.mulf %120, %124 : vector<256x128xf32>
    %126 = vector.broadcast %105 : vector<1x128xf32> to vector<256x128xf32>
    %127 = arith.mulf %125, %126 : vector<256x128xf32>
    %128 = vector.broadcast %107 : vector<1x128xf32> to vector<256x128xf32>
    %129 = arith.addf %127, %128 : vector<256x128xf32>
    %cst_65 = arith.constant 0.000000e+00 : f32
    %130 = vector.broadcast %cst_65 : f32 to vector<256x128xf32>
    %131 = arith.cmpf oge, %129, %130 : vector<256x128xf32>
    %cst_66 = arith.constant 2.000000e-01 : f32
    %132 = vector.broadcast %cst_66 : f32 to vector<256x128xf32>
    %133 = arith.mulf %132, %129 : vector<256x128xf32>
    %134 = arith.select %131, %129, %133 : vector<256x128xi1>, vector<256x128xf32>
    %c1_i32 = arith.constant 1 : i32
    %135 = arith.cmpi eq, %arg0, %c1_i32 : i32
    %cst_67 = arith.constant 0.333333343 : f32
    %cst_68 = arith.constant 1.000000e+00 : f32
    %136 = arith.select %135, %cst_67, %cst_68 : f32
    %137 = arith.addf %5, %72 : vector<128x128xf32>
    %138 = vector.broadcast %136 : f32 to vector<128x128xf32>
    %139 = arith.mulf %137, %138 : vector<128x128xf32>
    %c0_69 = arith.constant 0 : index
    %c0_70 = arith.constant 0 : index
    %140 = vector.load %arg14[%c0_69, %c0_70] : memref<128x128xf32, #tpu.memory_space<vmem>>, vector<128x128xf32>
    tpu.vector_store %arg14[%c0_69, %c0_70], %139 {strides = array<i32>} : memref<128x128xf32, #tpu.memory_space<vmem>>, vector<128x128xf32>,
    %141 = arith.addf %6, %134 : vector<256x128xf32>
    %142 = vector.broadcast %136 : f32 to vector<256x128xf32>
    %143 = arith.mulf %141, %142 : vector<256x128xf32>
    %c0_71 = arith.constant 0 : index
    %c0_72 = arith.constant 0 : index
    %144 = vector.load %arg15[%c0_71, %c0_72] : memref<256x128xf32, #tpu.memory_space<vmem>>, vector<256x128xf32>
    tpu.vector_store %arg15[%c0_71, %c0_72], %143 {strides = array<i32>} : memref<256x128xf32, #tpu.memory_space<vmem>>, vector<256x128xf32>,
    return
  }
  func.func @transform_0(%arg0: i32) -> (i32, i32) {
    %c0_i32 = arith.constant 0 : i32
    %c0_i32_0 = arith.constant 0 : i32
    %c0_i32_1 = arith.constant 0 : i32
    return %c0_i32, %c0_i32_0 : i32, i32
  }
  func.func @transform_1(%arg0: i32) -> (i32, i32) {
    %c0_i32 = arith.constant 0 : i32
    %c0_i32_0 = arith.constant 0 : i32
    %c0_i32_1 = arith.constant 0 : i32
    return %c0_i32, %c0_i32_0 : i32, i32
  }
  func.func @transform_2(%arg0: i32) -> (i32, i32) {
    %c0_i32 = arith.constant 0 : i32
    %c0_i32_0 = arith.constant 0 : i32
    %c0_i32_1 = arith.constant 0 : i32
    return %c0_i32, %c0_i32_0 : i32, i32
  }
  func.func @transform_3(%arg0: i32) -> (i32, i32, i32) {
    %c0_i32 = arith.constant 0 : i32
    %c0_i32_0 = arith.constant 0 : i32
    %c0_i32_1 = arith.constant 0 : i32
    return %arg0, %c0_i32, %c0_i32_0 : i32, i32, i32
  }
  func.func @transform_4(%arg0: i32) -> (i32, i32, i32) {
    %c0_i32 = arith.constant 0 : i32
    %c0_i32_0 = arith.constant 0 : i32
    %c0_i32_1 = arith.constant 0 : i32
    return %arg0, %c0_i32, %c0_i32_0 : i32, i32, i32
  }
  func.func @transform_5(%arg0: i32) -> (i32, i32, i32) {
    %c0_i32 = arith.constant 0 : i32
    %c0_i32_0 = arith.constant 0 : i32
    %c0_i32_1 = arith.constant 0 : i32
    return %arg0, %c0_i32, %c0_i32_0 : i32, i32, i32
  }
  func.func @transform_6(%arg0: i32) -> (i32, i32, i32) {
    %c0_i32 = arith.constant 0 : i32
    %c0_i32_0 = arith.constant 0 : i32
    %c0_i32_1 = arith.constant 0 : i32
    return %arg0, %c0_i32, %c0_i32_0 : i32, i32, i32
  }
  func.func @transform_7(%arg0: i32) -> (i32, i32, i32) {
    %c0_i32 = arith.constant 0 : i32
    %c0_i32_0 = arith.constant 0 : i32
    %c0_i32_1 = arith.constant 0 : i32
    return %arg0, %c0_i32, %c0_i32_0 : i32, i32, i32
  }
  func.func @transform_8(%arg0: i32) -> (i32, i32, i32) {
    %c0_i32 = arith.constant 0 : i32
    %c0_i32_0 = arith.constant 0 : i32
    %c0_i32_1 = arith.constant 0 : i32
    return %arg0, %c0_i32, %c0_i32_0 : i32, i32, i32
  }
  func.func @transform_9(%arg0: i32) -> (i32, i32, i32) {
    %c0_i32 = arith.constant 0 : i32
    %c0_i32_0 = arith.constant 0 : i32
    %c0_i32_1 = arith.constant 0 : i32
    return %arg0, %c0_i32, %c0_i32_0 : i32, i32, i32
  }
  func.func @transform_10(%arg0: i32) -> (i32, i32, i32) {
    %c0_i32 = arith.constant 0 : i32
    %c0_i32_0 = arith.constant 0 : i32
    %c0_i32_1 = arith.constant 0 : i32
    return %arg0, %c0_i32, %c0_i32_0 : i32, i32, i32
  }
  func.func @transform_11(%arg0: i32) -> (i32, i32, i32) {
    %c0_i32 = arith.constant 0 : i32
    %c0_i32_0 = arith.constant 0 : i32
    %c0_i32_1 = arith.constant 0 : i32
    return %arg0, %c0_i32, %c0_i32_0 : i32, i32, i32
  }
  func.func @transform_12(%arg0: i32) -> (i32, i32, i32) {
    %c0_i32 = arith.constant 0 : i32
    %c0_i32_0 = arith.constant 0 : i32
    %c0_i32_1 = arith.constant 0 : i32
    return %arg0, %c0_i32, %c0_i32_0 : i32, i32, i32
  }
  func.func @transform_13(%arg0: i32) -> (i32, i32) {
    %c0_i32 = arith.constant 0 : i32
    %c0_i32_0 = arith.constant 0 : i32
    %c0_i32_1 = arith.constant 0 : i32
    return %c0_i32, %c0_i32_0 : i32, i32
  }
  func.func @transform_14(%arg0: i32) -> (i32, i32) {
    %c0_i32 = arith.constant 0 : i32
    %c0_i32_0 = arith.constant 0 : i32
    %c0_i32_1 = arith.constant 0 : i32
    return %c0_i32, %c0_i32_0 : i32, i32
  }
}

</mosaic_0001>

<llo_original>
// kernel: hgnn_model_forward_cf.3
$region0: #{hgnn_model_forward_cf.3}
  #allocation0 [shape = 'u32[]', space=smem, size = 0x4, offset = 0x4, fixed_abs, tag = 'smem constant byte address 0x4 - core index']
  #allocation1 [shape = 'u32[144,128]{1,0:T(1,128)}', space=vmem, size = 0x12000, scoped, tag = 'internal scratch']
  %s0 = inlined_call_operand.vmem [shape: f32[128,128], index: 0, kind: input, shape index: {}]
  %s1 = inlined_call_operand.vmem [shape: f32[128,128], index: 1, kind: input, shape index: {}]
  %s2 = inlined_call_operand.vmem [shape: f32[1,128], index: 2, kind: input, shape index: {}]
  %s3 = inlined_call_operand.vmem [shape: f32[128,128], index: 3, kind: output, shape index: {}]
  %s4 = sld [smem:[#allocation0]]
  $region22: #{hgnn_model_forward_cf.3} parent=0
    _
  %s6 = ssub.s32 1, %s4
  %s7 = scalar_select 0, %s6, %s4
  // Predicated region
  $region2: #{hgnn_model_forward_cf.3} parent=0 // pred_check
    _
  $region3: #{hgnn_model_forward_cf.3} parent=0 // pred_check_branch
    %9 = sbr.rel (0) target = $region5
  $region4: #{hgnn_model_forward_cf.3} parent=0 // pred_region
    _
  $region5: #{hgnn_model_forward_cf.3} parent=0 // pred_fallthru
    _
  // Predicated region
  $region6: #{hgnn_model_forward_cf.3} parent=0 // pred_check
    _
  $region7: #{hgnn_model_forward_cf.3} parent=0 // pred_check_branch
    %11 = sbr.rel (0) target = $region9
  $region8: #{hgnn_model_forward_cf.3} parent=0 // pred_region
    _
  $region9: #{hgnn_model_forward_cf.3} parent=0 // pred_fallthru
    _
  // Predicated region
  $region10: #{hgnn_model_forward_cf.3} parent=0 // pred_check
    _
  $region11: #{hgnn_model_forward_cf.3} parent=0 // pred_check_branch
    %13 = sbr.rel (0) target = $region13
  $region12: #{hgnn_model_forward_cf.3} parent=0 // pred_region
    _
  $region13: #{hgnn_model_forward_cf.3} parent=0 // pred_fallthru
    _
  %v14 = vld [vmem:[%s0] sm:$0xff]
  %v15 = vld [vmem:[%s0 + $0x8] sm:$0xff]
  %v16 = vld [vmem:[%s0 + $0x10] sm:$0xff]
  %v17 = vld [vmem:[%s0 + $0x18] sm:$0xff]
  %v18 = vld [vmem:[%s0 + $0x20] sm:$0xff]
  %v19 = vld [vmem:[%s0 + $0x28] sm:$0xff]
  %v20 = vld [vmem:[%s0 + $0x30] sm:$0xff]
  %v21 = vld [vmem:[%s0 + $0x38] sm:$0xff]
  %v22 = vld [vmem:[%s0 + $0x40] sm:$0xff]
  %v23 = vld [vmem:[%s0 + $0x48] sm:$0xff]
  %v24 = vld [vmem:[%s0 + $0x50] sm:$0xff]
  %v25 = vld [vmem:[%s0 + $0x58] sm:$0xff]
  %v26 = vld [vmem:[%s0 + $0x60] sm:$0xff]
  %v27 = vld [vmem:[%s0 + $0x68] sm:$0xff]
  %v28 = vld [vmem:[%s0 + $0x70] sm:$0xff]
  %v29 = vld [vmem:[%s0 + $0x78] sm:$0xff]
  %v30 = vld [vmem:[%s1] sm:$0xff]
  %v31 = vld [vmem:[%s1 + $0x8] sm:$0xff]
  %v32 = vld [vmem:[%s1 + $0x10] sm:$0xff]
  %v33 = vld [vmem:[%s1 + $0x18] sm:$0xff]
  %v34 = vld [vmem:[%s1 + $0x20] sm:$0xff]
  %v35 = vld [vmem:[%s1 + $0x28] sm:$0xff]
  %v36 = vld [vmem:[%s1 + $0x30] sm:$0xff]
  %v37 = vld [vmem:[%s1 + $0x38] sm:$0xff]
  %v38 = vld [vmem:[%s1 + $0x40] sm:$0xff]
  %v39 = vld [vmem:[%s1 + $0x48] sm:$0xff]
  %v40 = vld [vmem:[%s1 + $0x50] sm:$0xff]
  %v41 = vld [vmem:[%s1 + $0x58] sm:$0xff]
  %v42 = vld [vmem:[%s1 + $0x60] sm:$0xff]
  %v43 = vld [vmem:[%s1 + $0x68] sm:$0xff]
  %v44 = vld [vmem:[%s1 + $0x70] sm:$0xff]
  %v45 = vld [vmem:[%s1 + $0x78] sm:$0xff]
  %v46 = vld [vmem:[%s2] sm:$0x1]
  %v48 = vlaneseq
  %v49 = vshrl.u32 %v48, 7
  %v50 = vsub.s32 0, %v49
  %v51 = vrot.slane %v46, %v50
  %53 = vmatprep.subr.mxu0 0.0
  %54 = vmatpush1.msra.mxu0 %v30
  %55 = vmatprep.subr.mxu0 0.0
  %56 = vmatpush1.msra.mxu0 %v31
  %57 = vmatprep.subr.mxu0 0.0
  %58 = vmatpush1.msra.mxu0 %v32
  %59 = vmatprep.subr.mxu0 0.0
  %60 = vmatpush1.msra.mxu0 %v33
  %61 = vmatprep.subr.mxu0 0.0
  %62 = vmatpush1.msra.mxu0 %v34
  %63 = vmatprep.subr.mxu0 0.0
  %64 = vmatpush1.msra.mxu0 %v35
  %65 = vmatprep.subr.mxu0 0.0
  %66 = vmatpush1.msra.mxu0 %v36
  %67 = vmatprep.subr.mxu0 0.0
  %68 = vmatpush1.msra.mxu0 %v37
  %69 = vmatprep.subr.mxu0 0.0
  %70 = vmatpush1.msra.mxu0 %v38
  %71 = vmatprep.subr.mxu0 0.0
  %72 = vmatpush1.msra.mxu0 %v39
  %73 = vmatprep.subr.mxu0 0.0
  %74 = vmatpush1.msra.mxu0 %v40
  %75 = vmatprep.subr.mxu0 0.0
  %76 = vmatpush1.msra.mxu0 %v41
  %77 = vmatprep.subr.mxu0 0.0
  %78 = vmatpush1.msra.mxu0 %v42
  %79 = vmatprep.subr.mxu0 0.0
  %80 = vmatpush1.msra.mxu0 %v43
  %81 = vmatprep.subr.mxu0 0.0
  %82 = vmatpush1.msra.mxu0 %v44
  %83 = vmatprep.subr.mxu0 0.0
  %84 = vmatpush1.msra.mxu0 %v45
  %85 = vmatprep.subr.mxu0 0.0
  %86 = vmatpush1.msra.mxu0 0.0
  %87 = vmatprep.subr.mxu0 0.0
  %88 = vmatpush1.msra.mxu0 0.0
  %89 = vmatprep.subr.mxu0 0.0
  %90 = vmatpush1.msra.mxu0 0.0
  %91 = vmatprep.subr.mxu0 0.0
  %92 = vmatpush1.msra.mxu0 0.0
  %93 = vmatprep.subr.mxu0 0.0
  %94 = vmatpush1.msra.mxu0 0.0
  %95 = vmatprep.subr.mxu0 0.0
  %96 = vmatpush1.msra.mxu0 0.0
  %97 = vmatprep.subr.mxu0 0.0
  %98 = vmatpush1.msra.mxu0 0.0
  %99 = vmatprep.subr.mxu0 0.0
  %100 = vmatpush1.msra.mxu0 0.0
  %101 = vmatprep.subr.mxu0 0.0
  %102 = vmatpush1.msra.mxu0 0.0
  %103 = vmatprep.subr.mxu0 0.0
  %104 = vmatpush1.msra.mxu0 0.0
  %105 = vmatprep.subr.mxu0 0.0
  %106 = vmatpush1.msra.mxu0 0.0
  %107 = vmatprep.subr.mxu0 0.0
  %108 = vmatpush1.msra.mxu0 0.0
  %109 = vmatprep.subr.mxu0 0.0
  %110 = vmatpush1.msra.mxu0 0.0
  %111 = vmatprep.subr.mxu0 0.0
  %112 = vmatpush1.msra.mxu0 0.0
  %113 = vmatprep.subr.mxu0 0.0
  %114 = vmatpush1.msra.mxu0 0.0
  %115 = vmatprep.subr.mxu0 0.0
  %116 = vmatpush1.msra.mxu0 0.0
  %117 = vmatprep.mubr.f32.mxu0 0.0
  %118 = vmatmul.mubr.f32.gmra.mrb[0].mxu0 %v14
  %v119 = vpop.f32.mrb[0].mxu0
  %v120 = vadd.f32 %v51, %v119
  %v121 = vpop.f32.mrb[0].mxu0
  %122 = vmatprep.mubr.f32.mxu0 0.0
  %123 = vmatmul.mubr.f32.gmra.mrb[0].mxu0 %v15
  %v124 = vpop.f32.mrb[0].mxu0
  %v125 = vadd.f32 %v51, %v124
  %v126 = vpop.f32.mrb[0].mxu0
  %127 = vmatprep.mubr.f32.mxu0 0.0
  %128 = vmatmul.mubr.f32.gmra.mrb[0].mxu0 %v16
  %v129 = vpop.f32.mrb[0].mxu0
  %v130 = vadd.f32 %v51, %v129
  %v131 = vpop.f32.mrb[0].mxu0
  %132 = vmatprep.mubr.f32.mxu0 0.0
  %133 = vmatmul.mubr.f32.gmra.mrb[0].mxu0 %v17
  %v134 = vpop.f32.mrb[0].mxu0
  %v135 = vadd.f32 %v51, %v134
  %v136 = vpop.f32.mrb[0].mxu0
  %137 = vmatprep.mubr.f32.mxu0 0.0
  %138 = vmatmul.mubr.f32.gmra.mrb[0].mxu0 %v18
  %v139 = vpop.f32.mrb[0].mxu0
  %v140 = vadd.f32 %v51, %v139
  %v141 = vpop.f32.mrb[0].mxu0
  %142 = vmatprep.mubr.f32.mxu0 0.0
  %143 = vmatmul.mubr.f32.gmra.mrb[0].mxu0 %v19
  %v144 = vpop.f32.mrb[0].mxu0
  %v145 = vadd.f32 %v51, %v144
  %v146 = vpop.f32.mrb[0].mxu0
  %147 = vmatprep.mubr.f32.mxu0 0.0
  %148 = vmatmul.mubr.f32.gmra.mrb[0].mxu0 %v20
  %v149 = vpop.f32.mrb[0].mxu0
  %v150 = vadd.f32 %v51, %v149
  %v151 = vpop.f32.mrb[0].mxu0
  %152 = vmatprep.mubr.f32.mxu0 0.0
  %153 = vmatmul.mubr.f32.gmra.mrb[0].mxu0 %v21
  %v154 = vpop.f32.mrb[0].mxu0
  %v155 = vadd.f32 %v51, %v154
  %v156 = vpop.f32.mrb[0].mxu0
  %157 = vmatprep.mubr.f32.mxu0 0.0
  %158 = vmatmul.mubr.f32.gmra.mrb[0].mxu0 %v22
  %v159 = vpop.f32.mrb[0].mxu0
  %v160 = vadd.f32 %v51, %v159
  %v161 = vpop.f32.mrb[0].mxu0
  %162 = vmatprep.mubr.f32.mxu0 0.0
  %163 = vmatmul.mubr.f32.gmra.mrb[0].mxu0 %v23
  %v164 = vpop.f32.mrb[0].mxu0
  %v165 = vadd.f32 %v51, %v164
  %v166 = vpop.f32.mrb[0].mxu0
  %167 = vmatprep.mubr.f32.mxu0 0.0
  %168 = vmatmul.mubr.f32.gmra.mrb[0].mxu0 %v24
  %v169 = vpop.f32.mrb[0].mxu0
  %v170 = vadd.f32 %v51, %v169
  %v171 = vpop.f32.mrb[0].mxu0
  %172 = vmatprep.mubr.f32.mxu0 0.0
  %173 = vmatmul.mubr.f32.gmra.mrb[0].mxu0 %v25
  %v174 = vpop.f32.mrb[0].mxu0
  %v175 = vadd.f32 %v51, %v174
  %v176 = vpop.f32.mrb[0].mxu0
  %177 = vmatprep.mubr.f32.mxu0 0.0
  %178 = vmatmul.mubr.f32.gmra.mrb[0].mxu0 %v26
  %v179 = vpop.f32.mrb[0].mxu0
  %v180 = vadd.f32 %v51, %v179
  %v181 = vpop.f32.mrb[0].mxu0
  %182 = vmatprep.mubr.f32.mxu0 0.0
  %183 = vmatmul.mubr.f32.gmra.mrb[0].mxu0 %v27
  %v184 = vpop.f32.mrb[0].mxu0
  %v185 = vadd.f32 %v51, %v184
  %v186 = vpop.f32.mrb[0].mxu0
  %187 = vmatprep.mubr.f32.mxu0 0.0
  %188 = vmatmul.mubr.f32.gmra.mrb[0].mxu0 %v28
  %v189 = vpop.f32.mrb[0].mxu0
  %v190 = vadd.f32 %v51, %v189
  %v191 = vpop.f32.mrb[0].mxu0
  %192 = vmatprep.mubr.f32.mxu0 0.0
  %193 = vmatmul.mubr.f32.gmra.mrb[0].mxu0 %v29
  %v194 = vpop.f32.mrb[0].mxu0
  %v195 = vadd.f32 %v51, %v194
  %v196 = vpop.f32.mrb[0].mxu0
  %197 = vdwg.mxu0
  %vm198 = vcmp.ge.f32.partialorder %v120, 0.0
  %vm199 = vcmp.ge.f32.partialorder %v125, 0.0
  %vm200 = vcmp.ge.f32.partialorder %v130, 0.0
  %vm201 = vcmp.ge.f32.partialorder %v135, 0.0
  %vm202 = vcmp.ge.f32.partialorder %v140, 0.0
  %vm203 = vcmp.ge.f32.partialorder %v145, 0.0
  %vm204 = vcmp.ge.f32.partialorder %v150, 0.0
  %vm205 = vcmp.ge.f32.partialorder %v155, 0.0
  %vm206 = vcmp.ge.f32.partialorder %v160, 0.0
  %vm207 = vcmp.ge.f32.partialorder %v165, 0.0
  %vm208 = vcmp.ge.f32.partialorder %v170, 0.0
  %vm209 = vcmp.ge.f32.partialorder %v175, 0.0
  %vm210 = vcmp.ge.f32.partialorder %v180, 0.0
  %vm211 = vcmp.ge.f32.partialorder %v185, 0.0
  %vm212 = vcmp.ge.f32.partialorder %v190, 0.0
  %vm213 = vcmp.ge.f32.partialorder %v195, 0.0
  %v214 = vmul.f32 %v120, 0.2
  %v215 = vmul.f32 %v125, 0.2
  %v216 = vmul.f32 %v130, 0.2
  %v217 = vmul.f32 %v135, 0.2
  %v218 = vmul.f32 %v140, 0.2
  %v219 = vmul.f32 %v145, 0.2
  %v220 = vmul.f32 %v150, 0.2
  %v221 = vmul.f32 %v155, 0.2
  %v222 = vmul.f32 %v160, 0.2
  %v223 = vmul.f32 %v165, 0.2
  %v224 = vmul.f32 %v170, 0.2
  %v225 = vmul.f32 %v175, 0.2
  %v226 = vmul.f32 %v180, 0.2
  %v227 = vmul.f32 %v185, 0.2
  %v228 = vmul.f32 %v190, 0.2
  %v229 = vmul.f32 %v195, 0.2
  %v230 = vsel %vm198, %v120, %v214
  %v231 = vsel %vm199, %v125, %v215
  %v232 = vsel %vm200, %v130, %v216
  %v233 = vsel %vm201, %v135, %v217
  %v234 = vsel %vm202, %v140, %v218
  %v235 = vsel %vm203, %v145, %v219
  %v236 = vsel %vm204, %v150, %v220
  %v237 = vsel %vm205, %v155, %v221
  %v238 = vsel %vm206, %v160, %v222
  %v239 = vsel %vm207, %v165, %v223
  %v240 = vsel %vm208, %v170, %v224
  %v241 = vsel %vm209, %v175, %v225
  %v242 = vsel %vm210, %v180, %v226
  %v243 = vsel %vm211, %v185, %v227
  %v244 = vsel %vm212, %v190, %v228
  %v245 = vsel %vm213, %v195, %v229
  %246 = vst [vmem:[%s3] sm:$0xff] %v230
  %247 = vst [vmem:[%s3 + $0x8] sm:$0xff] %v231
  %248 = vst [vmem:[%s3 + $0x10] sm:$0xff] %v232
  %249 = vst [vmem:[%s3 + $0x18] sm:$0xff] %v233
  %250 = vst [vmem:[%s3 + $0x20] sm:$0xff] %v234
  %251 = vst [vmem:[%s3 + $0x28] sm:$0xff] %v235
  %252 = vst [vmem:[%s3 + $0x30] sm:$0xff] %v236
  %253 = vst [vmem:[%s3 + $0x38] sm:$0xff] %v237
  %254 = vst [vmem:[%s3 + $0x40] sm:$0xff] %v238
  %255 = vst [vmem:[%s3 + $0x48] sm:$0xff] %v239
  %256 = vst [vmem:[%s3 + $0x50] sm:$0xff] %v240
  %257 = vst [vmem:[%s3 + $0x58] sm:$0xff] %v241
  %258 = vst [vmem:[%s3 + $0x60] sm:$0xff] %v242
  %259 = vst [vmem:[%s3 + $0x68] sm:$0xff] %v243
  %260 = vst [vmem:[%s3 + $0x70] sm:$0xff] %v244
  %261 = vst [vmem:[%s3 + $0x78] sm:$0xff] %v245
  // Predicated region
  $region14: #{hgnn_model_forward_cf.3} parent=0 // pred_check
    _
  $region15: #{hgnn_model_forward_cf.3} parent=0 // pred_check_branch
    %263 = sbr.rel (0) target = $region17
  $region16: #{hgnn_model_forward_cf.3} parent=0 // pred_region
    _
  $region17: #{hgnn_model_forward_cf.3} parent=0 // pred_fallthru
    _
  // Predicated region
  $region18: #{hgnn_model_forward_cf.3} parent=0 // pred_check
    _
  $region19: #{hgnn_model_forward_cf.3} parent=0 // pred_check_branch
    %265 = sbr.rel (0) target = $region21
  $region20: #{hgnn_model_forward_cf.3} parent=0 // pred_region
    _
  $region21: #{hgnn_model_forward_cf.3} parent=0 // pred_fallthru
    _

// kernel: hgnn_model_forward_cf.4
$region0: #{hgnn_model_forward_cf.4}
  #allocation0 [shape = 'u32[]', space=smem, size = 0x4, offset = 0x4, fixed_abs, tag = 'smem constant byte address 0x4 - core index']
  #allocation1 [shape = 'u32[144,128]{1,0:T(1,128)}', space=vmem, size = 0x12000, scoped, tag = 'internal scratch']
  %s0 = inlined_call_operand.vmem [shape: f32[256,128], index: 0, kind: input, shape index: {}]
  %s1 = inlined_call_operand.vmem [shape: f32[128,128], index: 1, kind: input, shape index: {}]
  %s2 = inlined_call_operand.vmem [shape: f32[1,128], index: 2, kind: input, shape index: {}]
  %s3 = inlined_call_operand.vmem [shape: f32[256,128], index: 3, kind: output, shape index: {}]
  %s4 = sld [smem:[#allocation0]]
  $region45: #{hgnn_model_forward_cf.4} parent=0
    _
  %s6 = ssub.s32 1, %s4
  %s7 = scalar_select 0, %s6, %s4
  loop: start=0, step=1, limit=4
  $region2: #{hgnn_model_forward_cf.4} parent=0 // loop_pre_header
    _
  $region3: #{hgnn_model_forward_cf.4} parent=0 // loop_header
    %s9 = sphi 0, %s13
    %p10 = scmp.ge.s32.totalorder %s9, 4
    %s19 = sphi 0, %s21
    %s22 = sphi 0, %s19
    %s23 = sphi 0, %s22
    %s39 = sphi 0, %s23
    %s43 = sphi 0, %s43
    %s45 = sphi 0, %s43
    %s46 = sphi 0, %s45
    %s60 = sphi 0, %s46
    %s64 = sphi 0, %s64
    %s66 = sphi 0, %s64
    %s67 = sphi 0, %s66
    %s81 = sphi 0, %s67
    %s87 = sphi 0, %s89
    %s90 = sphi 0, %s87
    %s91 = sphi 0, %s90
    %s107 = sphi 0, %s91
  $region4: #{hgnn_model_forward_cf.4} parent=0 // loop_header_branch
    %12 = sbr.rel (%p10) target = $region8
  $region5: #{hgnn_model_forward_cf.4} parent=0 // loop_body
    %s14 = ssub.s32 %s9, 1
    %s15 = ssub.s32 %s9, 2
    %s16 = sadd.s32 %s9, 1
    %s17 = ssub.s32 %s9, %s16
    %p18 = scmp.eq.s32.totalorder %s17, 0
    %s20 = sadd.s32 %s19, 1
    %s21 = scalar_select %p18, %s19, %s20
    %p24 = pneg %p18
    %p25 = scmp.eq.s32.totalorder %s9, 1
    %p26 = por %p24, %p25
    %p27 = scmp.ne.s32.totalorder %s19, %s22
    %p28 = scmp.eq.s32.totalorder %s9, 0
    %p29 = por %p27, %p28
    %p30 = scmp.ne.s32.totalorder %s19, %s22
    %p31 = scmp.eq.s32.totalorder %s14, 1
    %p32 = por %p30, %p31
    %p33 = scmp.ne.s32.totalorder %s22, %s23
    %p34 = scmp.eq.s32.totalorder %s14, 0
    %p35 = por %p33, %p34
    %p36 = scmp.ne.s32.totalorder %s22, %s23
    %p37 = scmp.eq.s32.totalorder %s15, 1
    %p38 = por %p36, %p37
    %p40 = scmp.ne.s32.totalorder %s23, %s39
    %p41 = scmp.eq.s32.totalorder %s15, 0
    %p42 = por %p40, %p41
    %s44 = sadd.s32 %s43, 1
    %p47 = scmp.eq.s32.totalorder %s9, 1
    %p48 = scmp.ne.s32.totalorder %s43, %s45
    %p49 = scmp.eq.s32.totalorder %s9, 0
    %p50 = por %p48, %p49
    %p51 = scmp.ne.s32.totalorder %s43, %s45
    %p52 = scmp.eq.s32.totalorder %s14, 1
    %p53 = por %p51, %p52
    %p54 = scmp.ne.s32.totalorder %s45, %s46
    %p55 = scmp.eq.s32.totalorder %s14, 0
    %p56 = por %p54, %p55
    %p57 = scmp.ne.s32.totalorder %s45, %s46
    %p58 = scmp.eq.s32.totalorder %s15, 1
    %p59 = por %p57, %p58
    %p61 = scmp.ne.s32.totalorder %s46, %s60
    %p62 = scmp.eq.s32.totalorder %s15, 0
    %p63 = por %p61, %p62
    %s65 = sadd.s32 %s64, 1
    %p68 = scmp.eq.s32.totalorder %s9, 1
    %p69 = scmp.ne.s32.totalorder %s64, %s66
    %p70 = scmp.eq.s32.totalorder %s9, 0
    %p71 = por %p69, %p70
    %p72 = scmp.ne.s32.totalorder %s64, %s66
    %p73 = scmp.eq.s32.totalorder %s14, 1
    %p74 = por %p72, %p73
    %p75 = scmp.ne.s32.totalorder %s66, %s67
    %p76 = scmp.eq.s32.totalorder %s14, 0
    %p77 = por %p75, %p76
    %p78 = scmp.ne.s32.totalorder %s66, %s67
    %p79 = scmp.eq.s32.totalorder %s15, 1
    %p80 = por %p78, %p79
    %p82 = scmp.ne.s32.totalorder %s67, %s81
    %p83 = scmp.eq.s32.totalorder %s15, 0
    %p84 = por %p82, %p83
    %s85 = ssub.s32 %s9, %s16
    %p86 = scmp.eq.s32.totalorder %s85, 0
    %s88 = sadd.s32 %s87, 1
    %s89 = scalar_select %p86, %s87, %s88
    %p92 = pneg %p86
    %p93 = scmp.eq.s32.totalorder %s9, 1
    %p94 = por %p92, %p93
    %p95 = scmp.ne.s32.totalorder %s87, %s90
    %p96 = scmp.eq.s32.totalorder %s9, 0
    %p97 = por %p95, %p96
    %p98 = scmp.ne.s32.totalorder %s87, %s90
    %p99 = scmp.eq.s32.totalorder %s14, 1
    %p100 = por %p98, %p99
    %p101 = scmp.ne.s32.totalorder %s90, %s91
    %p102 = scmp.eq.s32.totalorder %s14, 0
    %p103 = por %p101, %p102
    %p104 = scmp.ne.s32.totalorder %s90, %s91
    %p105 = scmp.eq.s32.totalorder %s15, 1
    %p106 = por %p104, %p105
    %p108 = scmp.ne.s32.totalorder %s91, %s107
    %p109 = scmp.eq.s32.totalorder %s15, 0
    %p110 = por %p108, %p109
    %p111 = scmp.le.s32.totalorder 1, %s9
    %p112 = scmp.lt.s32.totalorder %s9, 3
    %p113 = pnand %p111, %p112
    %p114 = pneg %p113
    // Predicated region
    $region9: #{hgnn_model_forward_cf.4} parent=5 // pred_check
      _
    $region10: #{hgnn_model_forward_cf.4} parent=5 // pred_check_branch
      %116 = sbr.rel (%p113) target = $region12
    $region11: #{hgnn_model_forward_cf.4} parent=5 // pred_region
      %s117 = ssub.s32 %s9, 1
      // Predicated region
      $region13: #{hgnn_model_forward_cf.4} parent=11 // pred_check
        %p118 = pneg %p56
      $region14: #{hgnn_model_forward_cf.4} parent=11 // pred_check_branch
        %120 = sbr.rel (%p118) target = $region16
      $region15: #{hgnn_model_forward_cf.4} parent=11 // pred_region
        _
      $region16: #{hgnn_model_forward_cf.4} parent=11 // pred_fallthru
        _
      // Predicated region
      $region17: #{hgnn_model_forward_cf.4} parent=11 // pred_check
        %p121 = pneg %p77
      $region18: #{hgnn_model_forward_cf.4} parent=11 // pred_check_branch
        %123 = sbr.rel (%p121) target = $region20
      $region19: #{hgnn_model_forward_cf.4} parent=11 // pred_region
        _
      $region20: #{hgnn_model_forward_cf.4} parent=11 // pred_fallthru
        _
    $region12: #{hgnn_model_forward_cf.4} parent=5 // pred_fallthru
      _
    %p124 = scmp.lt.s32.totalorder %s9, 2
    // Predicated region
    $region21: #{hgnn_model_forward_cf.4} parent=5 // pred_check
      %p125 = pneg %p124
    $region22: #{hgnn_model_forward_cf.4} parent=5 // pred_check_branch
      %127 = sbr.rel (%p125) target = $region24
    $region23: #{hgnn_model_forward_cf.4} parent=5 // pred_region
      // Predicated region
      $region25: #{hgnn_model_forward_cf.4} parent=23 // pred_check
        %p128 = pneg %p29
      $region26: #{hgnn_model_forward_cf.4} parent=23 // pred_check_branch
        %130 = sbr.rel (%p128) target = $region28
      $region27: #{hgnn_model_forward_cf.4} parent=23 // pred_region
        %s131 = smul.u32 16, %s9
        %p132 = scmp.lt.s32.totalorder %s131, 31
        %s133 = scalar_select %p132, %s131, 31
        %s134 = smul.addr %s133, 8
        %s135 = scalar_lea.vmem %s0, %s134
        %s136 = smul.u32 16, %s9
      $region28: #{hgnn_model_forward_cf.4} parent=23 // pred_fallthru
        _
    $region24: #{hgnn_model_forward_cf.4} parent=5 // pred_fallthru
      _
    %p137 = scmp.le.s32.totalorder 1, %s9
    %p138 = scmp.lt.s32.totalorder %s9, 3
    %p139 = pnand %p137, %p138
    %p140 = pneg %p139
    // Predicated region
    $region29: #{hgnn_model_forward_cf.4} parent=5 // pred_check
      _
    $region30: #{hgnn_model_forward_cf.4} parent=5 // pred_check_branch
      %142 = sbr.rel (%p139) target = $region32
    $region31: #{hgnn_model_forward_cf.4} parent=5 // pred_region
      %s143 = ssub.s32 %s9, 1
      %s144 = smul.u32 16, %s14
      %p145 = scmp.lt.s32.totalorder %s144, 31
      %s146 = scalar_select %p145, %s144, 31
      %s147 = smul.addr %s146, 8
      %s148 = scalar_lea.vmem %s0, %s147
      %p149 = pneg %p35
      %p150 = pneg %p32
      %p151 = pneg %p56
      %p152 = pneg %p53
      %p153 = pneg %p77
      %p154 = pneg %p74
      %p155 = pneg %p103
      %p156 = pneg %p100
      %s157 = smul.u32 16, %s14
      %p158 = scmp.lt.s32.totalorder %s157, 31
      %s159 = scalar_select %p158, %s157, 31
      %s160 = smul.addr %s159, 8
      %s161 = scalar_lea.vmem %s3, %s160
      %s162 = smul.u32 16, %s14
      %p163 = scmp.lt.s32.totalorder %s162, 31
      %s164 = scalar_select %p163, %s162, 31
      %s165 = smul.addr %s164, 8
      %s166 = scalar_lea.vmem %s0, %s165
      %s167 = smul.u32 16, %s14
      %s168 = smul.u32 16, %s14
      %p169 = scmp.lt.s32.totalorder %s168, 31
      %s170 = scalar_select %p169, %s168, 31
      %s171 = smul.addr %s170, 8
      %s172 = scalar_lea.vmem %s3, %s171
      %s173 = smul.u32 16, %s14
      %v174 = vld [vmem:[%s166] sm:$0xff]
      %v175 = vld [vmem:[%s166 + $0x8] sm:$0xff]
      %v176 = vld [vmem:[%s166 + $0x10] sm:$0xff]
      %v177 = vld [vmem:[%s166 + $0x18] sm:$0xff]
      %v178 = vld [vmem:[%s166 + $0x20] sm:$0xff]
      %v179 = vld [vmem:[%s166 + $0x28] sm:$0xff]
      %v180 = vld [vmem:[%s166 + $0x30] sm:$0xff]
      %v181 = vld [vmem:[%s166 + $0x38] sm:$0xff]
      %v182 = vld [vmem:[%s166 + $0x40] sm:$0xff]
      %v183 = vld [vmem:[%s166 + $0x48] sm:$0xff]
      %v184 = vld [vmem:[%s166 + $0x50] sm:$0xff]
      %v185 = vld [vmem:[%s166 + $0x58] sm:$0xff]
      %v186 = vld [vmem:[%s166 + $0x60] sm:$0xff]
      %v187 = vld [vmem:[%s166 + $0x68] sm:$0xff]
      %v188 = vld [vmem:[%s166 + $0x70] sm:$0xff]
      %v189 = vld [vmem:[%s166 + $0x78] sm:$0xff]
      %v190 = vld [vmem:[%s1] sm:$0xff]
      %v191 = vld [vmem:[%s1 + $0x8] sm:$0xff]
      %v192 = vld [vmem:[%s1 + $0x10] sm:$0xff]
      %v193 = vld [vmem:[%s1 + $0x18] sm:$0xff]
      %v194 = vld [vmem:[%s1 + $0x20] sm:$0xff]
      %v195 = vld [vmem:[%s1 + $0x28] sm:$0xff]
      %v196 = vld [vmem:[%s1 + $0x30] sm:$0xff]
      %v197 = vld [vmem:[%s1 + $0x38] sm:$0xff]
      %v198 = vld [vmem:[%s1 + $0x40] sm:$0xff]
      %v199 = vld [vmem:[%s1 + $0x48] sm:$0xff]
      %v200 = vld [vmem:[%s1 + $0x50] sm:$0xff]
      %v201 = vld [vmem:[%s1 + $0x58] sm:$0xff]
      %v202 = vld [vmem:[%s1 + $0x60] sm:$0xff]
      %v203 = vld [vmem:[%s1 + $0x68] sm:$0xff]
      %v204 = vld [vmem:[%s1 + $0x70] sm:$0xff]
      %v205 = vld [vmem:[%s1 + $0x78] sm:$0xff]
      %v206 = vld [vmem:[%s2] sm:$0x1]
      %v208 = vlaneseq
      %v209 = vshrl.u32 %v208, 7
      %v210 = vsub.s32 0, %v209
      %v211 = vrot.slane %v206, %v210
      %213 = vmatprep.subr.mxu0 0.0
      %214 = vmatpush1.msra.mxu0 %v190
      %215 = vmatprep.subr.mxu0 0.0
      %216 = vmatpush1.msra.mxu0 %v191
      %217 = vmatprep.subr.mxu0 0.0
      %218 = vmatpush1.msra.mxu0 %v192
      %219 = vmatprep.subr.mxu0 0.0
      %220 = vmatpush1.msra.mxu0 %v193
      %221 = vmatprep.subr.mxu0 0.0
      %222 = vmatpush1.msra.mxu0 %v194
      %223 = vmatprep.subr.mxu0 0.0
      %224 = vmatpush1.msra.mxu0 %v195
      %225 = vmatprep.subr.mxu0 0.0
      %226 = vmatpush1.msra.mxu0 %v196
      %227 = vmatprep.subr.mxu0 0.0
      %228 = vmatpush1.msra.mxu0 %v197
      %229 = vmatprep.subr.mxu0 0.0
      %230 = vmatpush1.msra.mxu0 %v198
      %231 = vmatprep.subr.mxu0 0.0
      %232 = vmatpush1.msra.mxu0 %v199
      %233 = vmatprep.subr.mxu0 0.0
      %234 = vmatpush1.msra.mxu0 %v200
      %235 = vmatprep.subr.mxu0 0.0
      %236 = vmatpush1.msra.mxu0 %v201
      %237 = vmatprep.subr.mxu0 0.0
      %238 = vmatpush1.msra.mxu0 %v202
      %239 = vmatprep.subr.mxu0 0.0
      %240 = vmatpush1.msra.mxu0 %v203
      %241 = vmatprep.subr.mxu0 0.0
      %242 = vmatpush1.msra.mxu0 %v204
      %243 = vmatprep.subr.mxu0 0.0
      %244 = vmatpush1.msra.mxu0 %v205
      %245 = vmatprep.subr.mxu0 0.0
      %246 = vmatpush1.msra.mxu0 0.0
      %247 = vmatprep.subr.mxu0 0.0
      %248 = vmatpush1.msra.mxu0 0.0
      %249 = vmatprep.subr.mxu0 0.0
      %250 = vmatpush1.msra.mxu0 0.0
      %251 = vmatprep.subr.mxu0 0.0
      %252 = vmatpush1.msra.mxu0 0.0
      %253 = vmatprep.subr.mxu0 0.0
      %254 = vmatpush1.msra.mxu0 0.0
      %255 = vmatprep.subr.mxu0 0.0
      %256 = vmatpush1.msra.mxu0 0.0
      %257 = vmatprep.subr.mxu0 0.0
      %258 = vmatpush1.msra.mxu0 0.0
      %259 = vmatprep.subr.mxu0 0.0
      %260 = vmatpush1.msra.mxu0 0.0
      %261 = vmatprep.subr.mxu0 0.0
      %262 = vmatpush1.msra.mxu0 0.0
      %263 = vmatprep.subr.mxu0 0.0
      %264 = vmatpush1.msra.mxu0 0.0
      %265 = vmatprep.subr.mxu0 0.0
      %266 = vmatpush1.msra.mxu0 0.0
      %267 = vmatprep.subr.mxu0 0.0
      %268 = vmatpush1.msra.mxu0 0.0
      %269 = vmatprep.subr.mxu0 0.0
      %270 = vmatpush1.msra.mxu0 0.0
      %271 = vmatprep.subr.mxu0 0.0
      %272 = vmatpush1.msra.mxu0 0.0
      %273 = vmatprep.subr.mxu0 0.0
      %274 = vmatpush1.msra.mxu0 0.0
      %275 = vmatprep.subr.mxu0 0.0
      %276 = vmatpush1.msra.mxu0 0.0
      %277 = vmatprep.mubr.f32.mxu0 0.0
      %278 = vmatmul.mubr.f32.gmra.mrb[0].mxu0 %v174
      %v279 = vpop.f32.mrb[0].mxu0
      %v280 = vadd.f32 %v211, %v279
      %v281 = vpop.f32.mrb[0].mxu0
      %282 = vmatprep.mubr.f32.mxu0 0.0
      %283 = vmatmul.mubr.f32.gmra.mrb[0].mxu0 %v175
      %v284 = vpop.f32.mrb[0].mxu0
      %v285 = vadd.f32 %v211, %v284
      %v286 = vpop.f32.mrb[0].mxu0
      %287 = vmatprep.mubr.f32.mxu0 0.0
      %288 = vmatmul.mubr.f32.gmra.mrb[0].mxu0 %v176
      %v289 = vpop.f32.mrb[0].mxu0
      %v290 = vadd.f32 %v211, %v289
      %v291 = vpop.f32.mrb[0].mxu0
      %292 = vmatprep.mubr.f32.mxu0 0.0
      %293 = vmatmul.mubr.f32.gmra.mrb[0].mxu0 %v177
      %v294 = vpop.f32.mrb[0].mxu0
      %v295 = vadd.f32 %v211, %v294
      %v296 = vpop.f32.mrb[0].mxu0
      %297 = vmatprep.mubr.f32.mxu0 0.0
      %298 = vmatmul.mubr.f32.gmra.mrb[0].mxu0 %v178
      %v299 = vpop.f32.mrb[0].mxu0
      %v300 = vadd.f32 %v211, %v299
      %v301 = vpop.f32.mrb[0].mxu0
      %302 = vmatprep.mubr.f32.mxu0 0.0
      %303 = vmatmul.mubr.f32.gmra.mrb[0].mxu0 %v179
      %v304 = vpop.f32.mrb[0].mxu0
      %v305 = vadd.f32 %v211, %v304
      %v306 = vpop.f32.mrb[0].mxu0
      %307 = vmatprep.mubr.f32.mxu0 0.0
      %308 = vmatmul.mubr.f32.gmra.mrb[0].mxu0 %v180
      %v309 = vpop.f32.mrb[0].mxu0
      %v310 = vadd.f32 %v211, %v309
      %v311 = vpop.f32.mrb[0].mxu0
      %312 = vmatprep.mubr.f32.mxu0 0.0
      %313 = vmatmul.mubr.f32.gmra.mrb[0].mxu0 %v181
      %v314 = vpop.f32.mrb[0].mxu0
      %v315 = vadd.f32 %v211, %v314
      %v316 = vpop.f32.mrb[0].mxu0
      %317 = vmatprep.mubr.f32.mxu0 0.0
      %318 = vmatmul.mubr.f32.gmra.mrb[0].mxu0 %v182
      %v319 = vpop.f32.mrb[0].mxu0
      %v320 = vadd.f32 %v211, %v319
      %v321 = vpop.f32.mrb[0].mxu0
      %322 = vmatprep.mubr.f32.mxu0 0.0
      %323 = vmatmul.mubr.f32.gmra.mrb[0].mxu0 %v183
      %v324 = vpop.f32.mrb[0].mxu0
      %v325 = vadd.f32 %v211, %v324
      %v326 = vpop.f32.mrb[0].mxu0
      %327 = vmatprep.mubr.f32.mxu0 0.0
      %328 = vmatmul.mubr.f32.gmra.mrb[0].mxu0 %v184
      %v329 = vpop.f32.mrb[0].mxu0
      %v330 = vadd.f32 %v211, %v329
      %v331 = vpop.f32.mrb[0].mxu0
      %332 = vmatprep.mubr.f32.mxu0 0.0
      %333 = vmatmul.mubr.f32.gmra.mrb[0].mxu0 %v185
      %v334 = vpop.f32.mrb[0].mxu0
      %v335 = vadd.f32 %v211, %v334
      %v336 = vpop.f32.mrb[0].mxu0
      %337 = vmatprep.mubr.f32.mxu0 0.0
      %338 = vmatmul.mubr.f32.gmra.mrb[0].mxu0 %v186
      %v339 = vpop.f32.mrb[0].mxu0
      %v340 = vadd.f32 %v211, %v339
      %v341 = vpop.f32.mrb[0].mxu0
      %342 = vmatprep.mubr.f32.mxu0 0.0
      %343 = vmatmul.mubr.f32.gmra.mrb[0].mxu0 %v187
      %v344 = vpop.f32.mrb[0].mxu0
      %v345 = vadd.f32 %v211, %v344
      %v346 = vpop.f32.mrb[0].mxu0
      %347 = vmatprep.mubr.f32.mxu0 0.0
      %348 = vmatmul.mubr.f32.gmra.mrb[0].mxu0 %v188
      %v349 = vpop.f32.mrb[0].mxu0
      %v350 = vadd.f32 %v211, %v349
      %v351 = vpop.f32.mrb[0].mxu0
      %352 = vmatprep.mubr.f32.mxu0 0.0
      %353 = vmatmul.mubr.f32.gmra.mrb[0].mxu0 %v189
      %v354 = vpop.f32.mrb[0].mxu0
      %v355 = vadd.f32 %v211, %v354
      %v356 = vpop.f32.mrb[0].mxu0
      %357 = vdwg.mxu0
      %vm358 = vcmp.ge.f32.partialorder %v280, 0.0
      %vm359 = vcmp.ge.f32.partialorder %v285, 0.0
      %vm360 = vcmp.ge.f32.partialorder %v290, 0.0
      %vm361 = vcmp.ge.f32.partialorder %v295, 0.0
      %vm362 = vcmp.ge.f32.partialorder %v300, 0.0
      %vm363 = vcmp.ge.f32.partialorder %v305, 0.0
      %vm364 = vcmp.ge.f32.partialorder %v310, 0.0
      %vm365 = vcmp.ge.f32.partialorder %v315, 0.0
      %vm366 = vcmp.ge.f32.partialorder %v320, 0.0
      %vm367 = vcmp.ge.f32.partialorder %v325, 0.0
      %vm368 = vcmp.ge.f32.partialorder %v330, 0.0
      %vm369 = vcmp.ge.f32.partialorder %v335, 0.0
      %vm370 = vcmp.ge.f32.partialorder %v340, 0.0
      %vm371 = vcmp.ge.f32.partialorder %v345, 0.0
      %vm372 = vcmp.ge.f32.partialorder %v350, 0.0
      %vm373 = vcmp.ge.f32.partialorder %v355, 0.0
      %v374 = vmul.f32 %v280, 0.2
      %v375 = vmul.f32 %v285, 0.2
      %v376 = vmul.f32 %v290, 0.2
      %v377 = vmul.f32 %v295, 0.2
      %v378 = vmul.f32 %v300, 0.2
      %v379 = vmul.f32 %v305, 0.2
      %v380 = vmul.f32 %v310, 0.2
      %v381 = vmul.f32 %v315, 0.2
      %v382 = vmul.f32 %v320, 0.2
      %v383 = vmul.f32 %v325, 0.2
      %v384 = vmul.f32 %v330, 0.2
      %v385 = vmul.f32 %v335, 0.2
      %v386 = vmul.f32 %v340, 0.2
      %v387 = vmul.f32 %v345, 0.2
      %v388 = vmul.f32 %v350, 0.2
      %v389 = vmul.f32 %v355, 0.2
      %v390 = vsel %vm358, %v280, %v374
      %v391 = vsel %vm359, %v285, %v375
      %v392 = vsel %vm360, %v290, %v376
      %v393 = vsel %vm361, %v295, %v377
      %v394 = vsel %vm362, %v300, %v378
      %v395 = vsel %vm363, %v305, %v379
      %v396 = vsel %vm364, %v310, %v380
      %v397 = vsel %vm365, %v315, %v381
      %v398 = vsel %vm366, %v320, %v382
      %v399 = vsel %vm367, %v325, %v383
      %v400 = vsel %vm368, %v330, %v384
      %v401 = vsel %vm369, %v335, %v385
      %v402 = vsel %vm370, %v340, %v386
      %v403 = vsel %vm371, %v345, %v387
      %v404 = vsel %vm372, %v350, %v388
      %v405 = vsel %vm373, %v355, %v389
      %406 = vst [vmem:[%s172] sm:$0xff] %v390
      %407 = vst [vmem:[%s172 + $0x8] sm:$0xff] %v391
      %408 = vst [vmem:[%s172 + $0x10] sm:$0xff] %v392
      %409 = vst [vmem:[%s172 + $0x18] sm:$0xff] %v393
      %410 = vst [vmem:[%s172 + $0x20] sm:$0xff] %v394
      %411 = vst [vmem:[%s172 + $0x28] sm:$0xff] %v395
      %412 = vst [vmem:[%s172 + $0x30] sm:$0xff] %v396
      %413 = vst [vmem:[%s172 + $0x38] sm:$0xff] %v397
      %414 = vst [vmem:[%s172 + $0x40] sm:$0xff] %v398
      %415 = vst [vmem:[%s172 + $0x48] sm:$0xff] %v399
      %416 = vst [vmem:[%s172 + $0x50] sm:$0xff] %v400
      %417 = vst [vmem:[%s172 + $0x58] sm:$0xff] %v401
      %418 = vst [vmem:[%s172 + $0x60] sm:$0xff] %v402
      %419 = vst [vmem:[%s172 + $0x68] sm:$0xff] %v403
      %420 = vst [vmem:[%s172 + $0x70] sm:$0xff] %v404
      %421 = vst [vmem:[%s172 + $0x78] sm:$0xff] %v405
      %s422 = smul.u32 16, %s14
      %p423 = scmp.lt.s32.totalorder %s422, 31
      %s424 = scalar_select %p423, %s422, 31
      %s425 = smul.addr %s424, 8
      %s426 = scalar_lea.vmem %s3, %s425
      // Predicated region
      $region33: #{hgnn_model_forward_cf.4} parent=31 // pred_check
        %p427 = pneg %p100
      $region34: #{hgnn_model_forward_cf.4} parent=31 // pred_check_branch
        %429 = sbr.rel (%p427) target = $region36
      $region35: #{hgnn_model_forward_cf.4} parent=31 // pred_region
        %s430 = smul.u32 16, %s14
      $region36: #{hgnn_model_forward_cf.4} parent=31 // pred_fallthru
        _
    $region32: #{hgnn_model_forward_cf.4} parent=5 // pred_fallthru
      _
    %p431 = scmp.le.s32.totalorder 2, %s9
    // Predicated region
    $region37: #{hgnn_model_forward_cf.4} parent=5 // pred_check
      %p432 = pneg %p431
    $region38: #{hgnn_model_forward_cf.4} parent=5 // pred_check_branch
      %434 = sbr.rel (%p432) target = $region40
    $region39: #{hgnn_model_forward_cf.4} parent=5 // pred_region
      %s435 = ssub.s32 %s9, 2
      // Predicated region
      $region41: #{hgnn_model_forward_cf.4} parent=39 // pred_check
        %p436 = pneg %p106
      $region42: #{hgnn_model_forward_cf.4} parent=39 // pred_check_branch
        %438 = sbr.rel (%p436) target = $region44
      $region43: #{hgnn_model_forward_cf.4} parent=39 // pred_region
        %s439 = smul.u32 16, %s15
        %p440 = scmp.lt.s32.totalorder %s439, 31
        %s441 = scalar_select %p440, %s439, 31
        %s442 = smul.addr %s441, 8
        %s443 = scalar_lea.vmem %s3, %s442
      $region44: #{hgnn_model_forward_cf.4} parent=39 // pred_fallthru
        _
    $region40: #{hgnn_model_forward_cf.4} parent=5 // pred_fallthru
      _
  $region6: #{hgnn_model_forward_cf.4} parent=0 // loop_footer
    %s13 = sadd.s32 1, %s9
  $region7: #{hgnn_model_forward_cf.4} parent=0 // loop_footer_branch
    %8 = sbr.rel target = $region3
  $region8: #{hgnn_model_forward_cf.4} parent=0 // loop_exit
    _

// kernel: hgnn_model_forward_cf.5
$region0: #{hgnn_model_forward_cf.5}
  #allocation0 [shape = 'u32[]', space=smem, size = 0x4, offset = 0x4, fixed_abs, tag = 'smem constant byte address 0x4 - core index']
  #allocation1 [shape = 'u32[144,128]{1,0:T(1,128)}', space=vmem, size = 0x12000, scoped, tag = 'internal scratch']
  #allocation2 [shape = 'bf16[256,128]{1,0:T(16,128)(2,1)}', space=vmem, size = 0x10000, scoped, tag = 'scratch operand']
  %s0 = inlined_call_operand.vmem [shape: bf16[128,256], index: 0, kind: input, shape index: {}]
  %s1 = inlined_call_operand.vmem [shape: f32[128,128], index: 1, kind: input, shape index: {}]
  %s2 = inlined_call_operand.vmem [shape: f32[256,128], index: 2, kind: input, shape index: {}]
  %s3 = inlined_call_operand.vmem [shape: f32[2,128,128], index: 3, kind: input, shape index: {}]
  %s4 = inlined_call_operand.vmem [shape: f32[2,128,128], index: 4, kind: input, shape index: {}]
  %s5 = inlined_call_operand.vmem [shape: f32[2,1,128], index: 5, kind: input, shape index: {}]
  %s6 = inlined_call_operand.vmem [shape: f32[2,1,128], index: 6, kind: input, shape index: {}]
  %s7 = inlined_call_operand.vmem [shape: f32[2,1,128], index: 7, kind: input, shape index: {}]
  %s8 = inlined_call_operand.vmem [shape: f32[2,1,128], index: 8, kind: input, shape index: {}]
  %s9 = inlined_call_operand.vmem [shape: f32[2,1,128], index: 9, kind: input, shape index: {}]
  %s10 = inlined_call_operand.vmem [shape: f32[2,1,128], index: 10, kind: input, shape index: {}]
  %s11 = inlined_call_operand.vmem [shape: f32[2,1,128], index: 11, kind: input, shape index: {}]
  %s12 = inlined_call_operand.vmem [shape: f32[2,1,128], index: 12, kind: input, shape index: {}]
  %s13 = inlined_call_operand.hbm [shape: f32[128,128], index: 13, kind: output, shape index: {0}]
  %s14 = inlined_call_operand.hbm [shape: f32[256,128], index: 14, kind: output, shape index: {1}]
  %15 = xla_tuple %s13, %s14
  %s16 = sld [smem:[#allocation0]]
  $region97: #{hgnn_model_forward_cf.5} parent=0
    _
  %s18 = ssub.s32 1, %s16
  %s19 = scalar_select 0, %s18, %s16
  $region1: #{hgnn_model_forward_cf.5} parent=0
    #allocation3 [shape = 'u8[65536]{0}', space=vmem, size = 0x10000, scoped, tag = 'output window, operand 0, single buffered']
    #allocation4 [shape = 's32[2]{0}', space=sflag, size = 0x8, scoped, tag = 'scoped memory for hgnn_model_forward_cf.5']
    #allocation5 [shape = 'u8[131072]{0}', space=vmem, size = 0x20000, scoped, tag = 'output window, operand 1, single buffered']
    #allocation6 [shape = 's32[1]{0}', space=sflag, size = 0x4, scoped, tag = 'scoped memory for hgnn_model_forward_cf.5']
    %20 = vsyncpa [#allocation4], 0
    %21 = vsyncpa [#allocation6], 0
    loop: start=0, step=1, limit=4
    $region2: #{hgnn_model_forward_cf.5} parent=1 // loop_pre_header
      _
    $region3: #{hgnn_model_forward_cf.5} parent=1 // loop_header
      %s23 = sphi 0, %s27
      %p24 = scmp.ge.s32.totalorder %s23, 4
      %s31 = sphi 0, %s31
      %s33 = sphi 0, %s31
      %s34 = sphi 0, %s33
      %s48 = sphi 0, %s34
      %s52 = sphi 0, %s52
      %s54 = sphi 0, %s52
      %s55 = sphi 0, %s54
      %s69 = sphi 0, %s55
      %s73 = sphi 0, %s73
      %s75 = sphi 0, %s73
      %s76 = sphi 0, %s75
      %s90 = sphi 0, %s76
      %s96 = sphi 0, %s98
      %s99 = sphi 0, %s96
      %s100 = sphi 0, %s99
      %s116 = sphi 0, %s100
      %s122 = sphi 0, %s124
      %s125 = sphi 0, %s122
      %s126 = sphi 0, %s125
      %s142 = sphi 0, %s126
      %s148 = sphi 0, %s150
      %s151 = sphi 0, %s148
      %s152 = sphi 0, %s151
      %s168 = sphi 0, %s152
      %s174 = sphi 0, %s176
      %s177 = sphi 0, %s174
      %s178 = sphi 0, %s177
      %s194 = sphi 0, %s178
      %s200 = sphi 0, %s202
      %s203 = sphi 0, %s200
      %s204 = sphi 0, %s203
      %s220 = sphi 0, %s204
      %s226 = sphi 0, %s228
      %s229 = sphi 0, %s226
      %s230 = sphi 0, %s229
      %s246 = sphi 0, %s230
      %s252 = sphi 0, %s254
      %s255 = sphi 0, %s252
      %s256 = sphi 0, %s255
      %s272 = sphi 0, %s256
      %s278 = sphi 0, %s280
      %s281 = sphi 0, %s278
      %s282 = sphi 0, %s281
      %s298 = sphi 0, %s282
      %s304 = sphi 0, %s306
      %s307 = sphi 0, %s304
      %s308 = sphi 0, %s307
      %s324 = sphi 0, %s308
      %s330 = sphi 0, %s332
      %s333 = sphi 0, %s330
      %s334 = sphi 0, %s333
      %s350 = sphi 0, %s334
      %s354 = sphi 0, %s354
      %s356 = sphi 0, %s354
      %s357 = sphi 0, %s356
      %s371 = sphi 0, %s357
      %s375 = sphi 0, %s375
      %s377 = sphi 0, %s375
      %s378 = sphi 0, %s377
      %s392 = sphi 0, %s378
    $region4: #{hgnn_model_forward_cf.5} parent=1 // loop_header_branch
      %26 = sbr.rel (%p24) target = $region8
    $region5: #{hgnn_model_forward_cf.5} parent=1 // loop_body
      %s28 = ssub.s32 %s23, 1
      %s29 = ssub.s32 %s23, 2
      %s30 = sadd.s32 %s23, 1
      %s32 = sadd.s32 %s31, 1
      %p35 = scmp.eq.s32.totalorder %s23, 1
      %p36 = scmp.ne.s32.totalorder %s31, %s33
      %p37 = scmp.eq.s32.totalorder %s23, 0
      %p38 = por %p36, %p37
      %p39 = scmp.ne.s32.totalorder %s31, %s33
      %p40 = scmp.eq.s32.totalorder %s28, 1
      %p41 = por %p39, %p40
      %p42 = scmp.ne.s32.totalorder %s33, %s34
      %p43 = scmp.eq.s32.totalorder %s28, 0
      %p44 = por %p42, %p43
      %p45 = scmp.ne.s32.totalorder %s33, %s34
      %p46 = scmp.eq.s32.totalorder %s29, 1
      %p47 = por %p45, %p46
      %p49 = scmp.ne.s32.totalorder %s34, %s48
      %p50 = scmp.eq.s32.totalorder %s29, 0
      %p51 = por %p49, %p50
      %s53 = sadd.s32 %s52, 1
      %p56 = scmp.eq.s32.totalorder %s23, 1
      %p57 = scmp.ne.s32.totalorder %s52, %s54
      %p58 = scmp.eq.s32.totalorder %s23, 0
      %p59 = por %p57, %p58
      %p60 = scmp.ne.s32.totalorder %s52, %s54
      %p61 = scmp.eq.s32.totalorder %s28, 1
      %p62 = por %p60, %p61
      %p63 = scmp.ne.s32.totalorder %s54, %s55
      %p64 = scmp.eq.s32.totalorder %s28, 0
      %p65 = por %p63, %p64
      %p66 = scmp.ne.s32.totalorder %s54, %s55
      %p67 = scmp.eq.s32.totalorder %s29, 1
      %p68 = por %p66, %p67
      %p70 = scmp.ne.s32.totalorder %s55, %s69
      %p71 = scmp.eq.s32.totalorder %s29, 0
      %p72 = por %p70, %p71
      %s74 = sadd.s32 %s73, 1
      %p77 = scmp.eq.s32.totalorder %s23, 1
      %p78 = scmp.ne.s32.totalorder %s73, %s75
      %p79 = scmp.eq.s32.totalorder %s23, 0
      %p80 = por %p78, %p79
      %p81 = scmp.ne.s32.totalorder %s73, %s75
      %p82 = scmp.eq.s32.totalorder %s28, 1
      %p83 = por %p81, %p82
      %p84 = scmp.ne.s32.totalorder %s75, %s76
      %p85 = scmp.eq.s32.totalorder %s28, 0
      %p86 = por %p84, %p85
      %p87 = scmp.ne.s32.totalorder %s75, %s76
      %p88 = scmp.eq.s32.totalorder %s29, 1
      %p89 = por %p87, %p88
      %p91 = scmp.ne.s32.totalorder %s76, %s90
      %p92 = scmp.eq.s32.totalorder %s29, 0
      %p93 = por %p91, %p92
      %s94 = ssub.s32 %s23, %s30
      %p95 = scmp.eq.s32.totalorder %s94, 0
      %s97 = sadd.s32 %s96, 1
      %s98 = scalar_select %p95, %s96, %s97
      %p101 = pneg %p95
      %p102 = scmp.eq.s32.totalorder %s23, 1
      %p103 = por %p101, %p102
      %p104 = scmp.ne.s32.totalorder %s96, %s99
      %p105 = scmp.eq.s32.totalorder %s23, 0
      %p106 = por %p104, %p105
      %p107 = scmp.ne.s32.totalorder %s96, %s99
      %p108 = scmp.eq.s32.totalorder %s28, 1
      %p109 = por %p107, %p108
      %p110 = scmp.ne.s32.totalorder %s99, %s100
      %p111 = scmp.eq.s32.totalorder %s28, 0
      %p112 = por %p110, %p111
      %p113 = scmp.ne.s32.totalorder %s99, %s100
      %p114 = scmp.eq.s32.totalorder %s29, 1
      %p115 = por %p113, %p114
      %p117 = scmp.ne.s32.totalorder %s100, %s116
      %p118 = scmp.eq.s32.totalorder %s29, 0
      %p119 = por %p117, %p118
      %s120 = ssub.s32 %s23, %s30
      %p121 = scmp.eq.s32.totalorder %s120, 0
      %s123 = sadd.s32 %s122, 1
      %s124 = scalar_select %p121, %s122, %s123
      %p127 = pneg %p121
      %p128 = scmp.eq.s32.totalorder %s23, 1
      %p129 = por %p127, %p128
      %p130 = scmp.ne.s32.totalorder %s122, %s125
      %p131 = scmp.eq.s32.totalorder %s23, 0
      %p132 = por %p130, %p131
      %p133 = scmp.ne.s32.totalorder %s122, %s125
      %p134 = scmp.eq.s32.totalorder %s28, 1
      %p135 = por %p133, %p134
      %p136 = scmp.ne.s32.totalorder %s125, %s126
      %p137 = scmp.eq.s32.totalorder %s28, 0
      %p138 = por %p136, %p137
      %p139 = scmp.ne.s32.totalorder %s125, %s126
      %p140 = scmp.eq.s32.totalorder %s29, 1
      %p141 = por %p139, %p140
      %p143 = scmp.ne.s32.totalorder %s126, %s142
      %p144 = scmp.eq.s32.totalorder %s29, 0
      %p145 = por %p143, %p144
      %s146 = ssub.s32 %s23, %s30
      %p147 = scmp.eq.s32.totalorder %s146, 0
      %s149 = sadd.s32 %s148, 1
      %s150 = scalar_select %p147, %s148, %s149
      %p153 = pneg %p147
      %p154 = scmp.eq.s32.totalorder %s23, 1
      %p155 = por %p153, %p154
      %p156 = scmp.ne.s32.totalorder %s148, %s151
      %p157 = scmp.eq.s32.totalorder %s23, 0
      %p158 = por %p156, %p157
      %p159 = scmp.ne.s32.totalorder %s148, %s151
      %p160 = scmp.eq.s32.totalorder %s28, 1
      %p161 = por %p159, %p160
      %p162 = scmp.ne.s32.totalorder %s151, %s152
      %p163 = scmp.eq.s32.totalorder %s28, 0
      %p164 = por %p162, %p163
      %p165 = scmp.ne.s32.totalorder %s151, %s152
      %p166 = scmp.eq.s32.totalorder %s29, 1
      %p167 = por %p165, %p166
      %p169 = scmp.ne.s32.totalorder %s152, %s168
      %p170 = scmp.eq.s32.totalorder %s29, 0
      %p171 = por %p169, %p170
      %s172 = ssub.s32 %s23, %s30
      %p173 = scmp.eq.s32.totalorder %s172, 0
      %s175 = sadd.s32 %s174, 1
      %s176 = scalar_select %p173, %s174, %s175
      %p179 = pneg %p173
      %p180 = scmp.eq.s32.totalorder %s23, 1
      %p181 = por %p179, %p180
      %p182 = scmp.ne.s32.totalorder %s174, %s177
      %p183 = scmp.eq.s32.totalorder %s23, 0
      %p184 = por %p182, %p183
      %p185 = scmp.ne.s32.totalorder %s174, %s177
      %p186 = scmp.eq.s32.totalorder %s28, 1
      %p187 = por %p185, %p186
      %p188 = scmp.ne.s32.totalorder %s177, %s178
      %p189 = scmp.eq.s32.totalorder %s28, 0
      %p190 = por %p188, %p189
      %p191 = scmp.ne.s32.totalorder %s177, %s178
      %p192 = scmp.eq.s32.totalorder %s29, 1
      %p193 = por %p191, %p192
      %p195 = scmp.ne.s32.totalorder %s178, %s194
      %p196 = scmp.eq.s32.totalorder %s29, 0
      %p197 = por %p195, %p196
      %s198 = ssub.s32 %s23, %s30
      %p199 = scmp.eq.s32.totalorder %s198, 0
      %s201 = sadd.s32 %s200, 1
      %s202 = scalar_select %p199, %s200, %s201
      %p205 = pneg %p199
      %p206 = scmp.eq.s32.totalorder %s23, 1
      %p207 = por %p205, %p206
      %p208 = scmp.ne.s32.totalorder %s200, %s203
      %p209 = scmp.eq.s32.totalorder %s23, 0
      %p210 = por %p208, %p209
      %p211 = scmp.ne.s32.totalorder %s200, %s203
      %p212 = scmp.eq.s32.totalorder %s28, 1
      %p213 = por %p211, %p212
      %p214 = scmp.ne.s32.totalorder %s203, %s204
      %p215 = scmp.eq.s32.totalorder %s28, 0
      %p216 = por %p214, %p215
      %p217 = scmp.ne.s32.totalorder %s203, %s204
      %p218 = scmp.eq.s32.totalorder %s29, 1
      %p219 = por %p217, %p218
      %p221 = scmp.ne.s32.totalorder %s204, %s220
      %p222 = scmp.eq.s32.totalorder %s29, 0
      %p223 = por %p221, %p222
      %s224 = ssub.s32 %s23, %s30
      %p225 = scmp.eq.s32.totalorder %s224, 0
      %s227 = sadd.s32 %s226, 1
      %s228 = scalar_select %p225, %s226, %s227
      %p231 = pneg %p225
      %p232 = scmp.eq.s32.totalorder %s23, 1
      %p233 = por %p231, %p232
      %p234 = scmp.ne.s32.totalorder %s226, %s229
      %p235 = scmp.eq.s32.totalorder %s23, 0
      %p236 = por %p234, %p235
      %p237 = scmp.ne.s32.totalorder %s226, %s229
      %p238 = scmp.eq.s32.totalorder %s28, 1
      %p239 = por %p237, %p238
      %p240 = scmp.ne.s32.totalorder %s229, %s230
      %p241 = scmp.eq.s32.totalorder %s28, 0
      %p242 = por %p240, %p241
      %p243 = scmp.ne.s32.totalorder %s229, %s230
      %p244 = scmp.eq.s32.totalorder %s29, 1
      %p245 = por %p243, %p244
      %p247 = scmp.ne.s32.totalorder %s230, %s246
      %p248 = scmp.eq.s32.totalorder %s29, 0
      %p249 = por %p247, %p248
      %s250 = ssub.s32 %s23, %s30
      %p251 = scmp.eq.s32.totalorder %s250, 0
      %s253 = sadd.s32 %s252, 1
      %s254 = scalar_select %p251, %s252, %s253
      %p257 = pneg %p251
      %p258 = scmp.eq.s32.totalorder %s23, 1
      %p259 = por %p257, %p258
      %p260 = scmp.ne.s32.totalorder %s252, %s255
      %p261 = scmp.eq.s32.totalorder %s23, 0
      %p262 = por %p260, %p261
      %p263 = scmp.ne.s32.totalorder %s252, %s255
      %p264 = scmp.eq.s32.totalorder %s28, 1
      %p265 = por %p263, %p264
      %p266 = scmp.ne.s32.totalorder %s255, %s256
      %p267 = scmp.eq.s32.totalorder %s28, 0
      %p268 = por %p266, %p267
      %p269 = scmp.ne.s32.totalorder %s255, %s256
      %p270 = scmp.eq.s32.totalorder %s29, 1
      %p271 = por %p269, %p270
      %p273 = scmp.ne.s32.totalorder %s256, %s272
      %p274 = scmp.eq.s32.totalorder %s29, 0
      %p275 = por %p273, %p274
      %s276 = ssub.s32 %s23, %s30
      %p277 = scmp.eq.s32.totalorder %s276, 0
      %s279 = sadd.s32 %s278, 1
      %s280 = scalar_select %p277, %s278, %s279
      %p283 = pneg %p277
      %p284 = scmp.eq.s32.totalorder %s23, 1
      %p285 = por %p283, %p284
      %p286 = scmp.ne.s32.totalorder %s278, %s281
      %p287 = scmp.eq.s32.totalorder %s23, 0
      %p288 = por %p286, %p287
      %p289 = scmp.ne.s32.totalorder %s278, %s281
      %p290 = scmp.eq.s32.totalorder %s28, 1
      %p291 = por %p289, %p290
      %p292 = scmp.ne.s32.totalorder %s281, %s282
      %p293 = scmp.eq.s32.totalorder %s28, 0
      %p294 = por %p292, %p293
      %p295 = scmp.ne.s32.totalorder %s281, %s282
      %p296 = scmp.eq.s32.totalorder %s29, 1
      %p297 = por %p295, %p296
      %p299 = scmp.ne.s32.totalorder %s282, %s298
      %p300 = scmp.eq.s32.totalorder %s29, 0
      %p301 = por %p299, %p300
      %s302 = ssub.s32 %s23, %s30
      %p303 = scmp.eq.s32.totalorder %s302, 0
      %s305 = sadd.s32 %s304, 1
      %s306 = scalar_select %p303, %s304, %s305
      %p309 = pneg %p303
      %p310 = scmp.eq.s32.totalorder %s23, 1
      %p311 = por %p309, %p310
      %p312 = scmp.ne.s32.totalorder %s304, %s307
      %p313 = scmp.eq.s32.totalorder %s23, 0
      %p314 = por %p312, %p313
      %p315 = scmp.ne.s32.totalorder %s304, %s307
      %p316 = scmp.eq.s32.totalorder %s28, 1
      %p317 = por %p315, %p316
      %p318 = scmp.ne.s32.totalorder %s307, %s308
      %p319 = scmp.eq.s32.totalorder %s28, 0
      %p320 = por %p318, %p319
      %p321 = scmp.ne.s32.totalorder %s307, %s308
      %p322 = scmp.eq.s32.totalorder %s29, 1
      %p323 = por %p321, %p322
      %p325 = scmp.ne.s32.totalorder %s308, %s324
      %p326 = scmp.eq.s32.totalorder %s29, 0
      %p327 = por %p325, %p326
      %s328 = ssub.s32 %s23, %s30
      %p329 = scmp.eq.s32.totalorder %s328, 0
      %s331 = sadd.s32 %s330, 1
      %s332 = scalar_select %p329, %s330, %s331
      %p335 = pneg %p329
      %p336 = scmp.eq.s32.totalorder %s23, 1
      %p337 = por %p335, %p336
      %p338 = scmp.ne.s32.totalorder %s330, %s333
      %p339 = scmp.eq.s32.totalorder %s23, 0
      %p340 = por %p338, %p339
      %p341 = scmp.ne.s32.totalorder %s330, %s333
      %p342 = scmp.eq.s32.totalorder %s28, 1
      %p343 = por %p341, %p342
      %p344 = scmp.ne.s32.totalorder %s333, %s334
      %p345 = scmp.eq.s32.totalorder %s28, 0
      %p346 = por %p344, %p345
      %p347 = scmp.ne.s32.totalorder %s333, %s334
      %p348 = scmp.eq.s32.totalorder %s29, 1
      %p349 = por %p347, %p348
      %p351 = scmp.ne.s32.totalorder %s334, %s350
      %p352 = scmp.eq.s32.totalorder %s29, 0
      %p353 = por %p351, %p352
      %s355 = sadd.s32 %s354, 1
      %p358 = scmp.eq.s32.totalorder %s23, 1
      %p359 = scmp.ne.s32.totalorder %s354, %s356
      %p360 = scmp.eq.s32.totalorder %s23, 0
      %p361 = por %p359, %p360
      %p362 = scmp.ne.s32.totalorder %s354, %s356
      %p363 = scmp.eq.s32.totalorder %s28, 1
      %p364 = por %p362, %p363
      %p365 = scmp.ne.s32.totalorder %s356, %s357
      %p366 = scmp.eq.s32.totalorder %s28, 0
      %p367 = por %p365, %p366
      %p368 = scmp.ne.s32.totalorder %s356, %s357
      %p369 = scmp.eq.s32.totalorder %s29, 1
      %p370 = por %p368, %p369
      %p372 = scmp.ne.s32.totalorder %s357, %s371
      %p373 = scmp.eq.s32.totalorder %s29, 0
      %p374 = por %p372, %p373
      %s376 = sadd.s32 %s375, 1
      %p379 = scmp.eq.s32.totalorder %s23, 1
      %p380 = scmp.ne.s32.totalorder %s375, %s377
      %p381 = scmp.eq.s32.totalorder %s23, 0
      %p382 = por %p380, %p381
      %p383 = scmp.ne.s32.totalorder %s375, %s377
      %p384 = scmp.eq.s32.totalorder %s28, 1
      %p385 = por %p383, %p384
      %p386 = scmp.ne.s32.totalorder %s377, %s378
      %p387 = scmp.eq.s32.totalorder %s28, 0
      %p388 = por %p386, %p387
      %p389 = scmp.ne.s32.totalorder %s377, %s378
      %p390 = scmp.eq.s32.totalorder %s29, 1
      %p391 = por %p389, %p390
      %p393 = scmp.ne.s32.totalorder %s378, %s392
      %p394 = scmp.eq.s32.totalorder %s29, 0
      %p395 = por %p393, %p394
      %p396 = scmp.le.s32.totalorder 1, %s23
      %p397 = scmp.lt.s32.totalorder %s23, 3
      %p398 = pnand %p396, %p397
      %p399 = pneg %p398
      // Predicated region
      $region9: #{hgnn_model_forward_cf.5} parent=5 // pred_check
        _
      $region10: #{hgnn_model_forward_cf.5} parent=5 // pred_check_branch
        %401 = sbr.rel (%p398) target = $region12
      $region11: #{hgnn_model_forward_cf.5} parent=5 // pred_region
        %s402 = ssub.s32 %s23, 1
        // Predicated region
        $region13: #{hgnn_model_forward_cf.5} parent=11 // pred_check
          %p403 = pneg %p44
        $region14: #{hgnn_model_forward_cf.5} parent=11 // pred_check_branch
          %405 = sbr.rel (%p403) target = $region16
        $region15: #{hgnn_model_forward_cf.5} parent=11 // pred_region
          _
        $region16: #{hgnn_model_forward_cf.5} parent=11 // pred_fallthru
          _
        // Predicated region
        $region17: #{hgnn_model_forward_cf.5} parent=11 // pred_check
          %p406 = pneg %p65
        $region18: #{hgnn_model_forward_cf.5} parent=11 // pred_check_branch
          %408 = sbr.rel (%p406) target = $region20
        $region19: #{hgnn_model_forward_cf.5} parent=11 // pred_region
          _
        $region20: #{hgnn_model_forward_cf.5} parent=11 // pred_fallthru
          _
        // Predicated region
        $region21: #{hgnn_model_forward_cf.5} parent=11 // pred_check
          %p409 = pneg %p86
        $region22: #{hgnn_model_forward_cf.5} parent=11 // pred_check_branch
          %411 = sbr.rel (%p409) target = $region24
        $region23: #{hgnn_model_forward_cf.5} parent=11 // pred_region
          _
        $region24: #{hgnn_model_forward_cf.5} parent=11 // pred_fallthru
          _
      $region12: #{hgnn_model_forward_cf.5} parent=5 // pred_fallthru
        _
      %p412 = scmp.lt.s32.totalorder %s23, 2
      // Predicated region
      $region25: #{hgnn_model_forward_cf.5} parent=5 // pred_check
        %p413 = pneg %p412
      $region26: #{hgnn_model_forward_cf.5} parent=5 // pred_check_branch
        %415 = sbr.rel (%p413) target = $region28
      $region27: #{hgnn_model_forward_cf.5} parent=5 // pred_region
        // Predicated region
        $region29: #{hgnn_model_forward_cf.5} parent=27 // pred_check
          %p416 = pneg %p106
        $region30: #{hgnn_model_forward_cf.5} parent=27 // pred_check_branch
          %418 = sbr.rel (%p416) target = $region32
        $region31: #{hgnn_model_forward_cf.5} parent=27 // pred_region
          %p419 = scmp.lt.s32.totalorder %s23, 1
          %s420 = scalar_select %p419, %s23, 1
          %s421 = smul.addr %s420, 16
          %s422 = smul.addr %s421, 8
          %s423 = scalar_lea.vmem %s3, %s422
        $region32: #{hgnn_model_forward_cf.5} parent=27 // pred_fallthru
          _
        // Predicated region
        $region33: #{hgnn_model_forward_cf.5} parent=27 // pred_check
          %p424 = pneg %p132
        $region34: #{hgnn_model_forward_cf.5} parent=27 // pred_check_branch
          %426 = sbr.rel (%p424) target = $region36
        $region35: #{hgnn_model_forward_cf.5} parent=27 // pred_region
          %p427 = scmp.lt.s32.totalorder %s23, 1
          %s428 = scalar_select %p427, %s23, 1
          %s429 = smul.addr %s428, 16
          %s430 = smul.addr %s429, 8
          %s431 = scalar_lea.vmem %s4, %s430
        $region36: #{hgnn_model_forward_cf.5} parent=27 // pred_fallthru
          _
        // Predicated region
        $region37: #{hgnn_model_forward_cf.5} parent=27 // pred_check
          %p432 = pneg %p158
        $region38: #{hgnn_model_forward_cf.5} parent=27 // pred_check_branch
          %434 = sbr.rel (%p432) target = $region40
        $region39: #{hgnn_model_forward_cf.5} parent=27 // pred_region
          %p435 = scmp.lt.s32.totalorder %s23, 1
          %s436 = scalar_select %p435, %s23, 1
          %s437 = scalar_lea.vmem %s5, %s436
        $region40: #{hgnn_model_forward_cf.5} parent=27 // pred_fallthru
          _
        // Predicated region
        $region41: #{hgnn_model_forward_cf.5} parent=27 // pred_check
          %p438 = pneg %p184
        $region42: #{hgnn_model_forward_cf.5} parent=27 // pred_check_branch
          %440 = sbr.rel (%p438) target = $region44
        $region43: #{hgnn_model_forward_cf.5} parent=27 // pred_region
          %p441 = scmp.lt.s32.totalorder %s23, 1
          %s442 = scalar_select %p441, %s23, 1
          %s443 = scalar_lea.vmem %s6, %s442
        $region44: #{hgnn_model_forward_cf.5} parent=27 // pred_fallthru
          _
        // Predicated region
        $region45: #{hgnn_model_forward_cf.5} parent=27 // pred_check
          %p444 = pneg %p210
        $region46: #{hgnn_model_forward_cf.5} parent=27 // pred_check_branch
          %446 = sbr.rel (%p444) target = $region48
        $region47: #{hgnn_model_forward_cf.5} parent=27 // pred_region
          %p447 = scmp.lt.s32.totalorder %s23, 1
          %s448 = scalar_select %p447, %s23, 1
          %s449 = scalar_lea.vmem %s7, %s448
        $region48: #{hgnn_model_forward_cf.5} parent=27 // pred_fallthru
          _
        // Predicated region
        $region49: #{hgnn_model_forward_cf.5} parent=27 // pred_check
          %p450 = pneg %p236
        $region50: #{hgnn_model_forward_cf.5} parent=27 // pred_check_branch
          %452 = sbr.rel (%p450) target = $region52
        $region51: #{hgnn_model_forward_cf.5} parent=27 // pred_region
          %p453 = scmp.lt.s32.totalorder %s23, 1
          %s454 = scalar_select %p453, %s23, 1
          %s455 = scalar_lea.vmem %s8, %s454
        $region52: #{hgnn_model_forward_cf.5} parent=27 // pred_fallthru
          _
        // Predicated region
        $region53: #{hgnn_model_forward_cf.5} parent=27 // pred_check
          %p456 = pneg %p262
        $region54: #{hgnn_model_forward_cf.5} parent=27 // pred_check_branch
          %458 = sbr.rel (%p456) target = $region56
        $region55: #{hgnn_model_forward_cf.5} parent=27 // pred_region
          %p459 = scmp.lt.s32.totalorder %s23, 1
          %s460 = scalar_select %p459, %s23, 1
          %s461 = scalar_lea.vmem %s9, %s460
        $region56: #{hgnn_model_forward_cf.5} parent=27 // pred_fallthru
          _
        // Predicated region
        $region57: #{hgnn_model_forward_cf.5} parent=27 // pred_check
          %p462 = pneg %p288
        $region58: #{hgnn_model_forward_cf.5} parent=27 // pred_check_branch
          %464 = sbr.rel (%p462) target = $region60
        $region59: #{hgnn_model_forward_cf.5} parent=27 // pred_region
          %p465 = scmp.lt.s32.totalorder %s23, 1
          %s466 = scalar_select %p465, %s23, 1
          %s467 = scalar_lea.vmem %s10, %s466
        $region60: #{hgnn_model_forward_cf.5} parent=27 // pred_fallthru
          _
        // Predicated region
        $region61: #{hgnn_model_forward_cf.5} parent=27 // pred_check
          %p468 = pneg %p314
        $region62: #{hgnn_model_forward_cf.5} parent=27 // pred_check_branch
          %470 = sbr.rel (%p468) target = $region64
        $region63: #{hgnn_model_forward_cf.5} parent=27 // pred_region
          %p471 = scmp.lt.s32.totalorder %s23, 1
          %s472 = scalar_select %p471, %s23, 1
          %s473 = scalar_lea.vmem %s11, %s472
        $region64: #{hgnn_model_forward_cf.5} parent=27 // pred_fallthru
          _
        // Predicated region
        $region65: #{hgnn_model_forward_cf.5} parent=27 // pred_check
          %p474 = pneg %p340
        $region66: #{hgnn_model_forward_cf.5} parent=27 // pred_check_branch
          %476 = sbr.rel (%p474) target = $region68
        $region67: #{hgnn_model_forward_cf.5} parent=27 // pred_region
          %p477 = scmp.lt.s32.totalorder %s23, 1
          %s478 = scalar_select %p477, %s23, 1
          %s479 = scalar_lea.vmem %s12, %s478
        $region68: #{hgnn_model_forward_cf.5} parent=27 // pred_fallthru
          _
      $region28: #{hgnn_model_forward_cf.5} parent=5 // pred_fallthru
        _
      %p480 = scmp.le.s32.totalorder 1, %s23
      %p481 = scmp.lt.s32.totalorder %s23, 3
      %p482 = pnand %p480, %p481
      %p483 = pneg %p482
      // Predicated region
      $region69: #{hgnn_model_forward_cf.5} parent=5 // pred_check
        _
      $region70: #{hgnn_model_forward_cf.5} parent=5 // pred_check_branch
        %485 = sbr.rel (%p482) target = $region72
      $region71: #{hgnn_model_forward_cf.5} parent=5 // pred_region
        %s486 = ssub.s32 %s23, 1
        %p487 = pneg %p44
        %p488 = pneg %p41
        %p489 = pneg %p65
        %p490 = pneg %p62
        %p491 = pneg %p86
        %p492 = pneg %p83
        %p493 = scmp.lt.s32.totalorder %s28, 1
        %s494 = scalar_select %p493, %s28, 1
        %s495 = smul.addr %s494, 16
        %s496 = smul.addr %s495, 8
        %s497 = scalar_lea.vmem %s3, %s496
        %p498 = pneg %p112
        %p499 = pneg %p109
        %p500 = scmp.lt.s32.totalorder %s28, 1
        %s501 = scalar_select %p500, %s28, 1
        %s502 = smul.addr %s501, 16
        %s503 = smul.addr %s502, 8
        %s504 = scalar_lea.vmem %s4, %s503
        %p505 = pneg %p138
        %p506 = pneg %p135
        %p507 = scmp.lt.s32.totalorder %s28, 1
        %s508 = scalar_select %p507, %s28, 1
        %s509 = scalar_lea.vmem %s5, %s508
        %p510 = pneg %p164
        %p511 = pneg %p161
        %p512 = scmp.lt.s32.totalorder %s28, 1
        %s513 = scalar_select %p512, %s28, 1
        %s514 = scalar_lea.vmem %s6, %s513
        %p515 = pneg %p190
        %p516 = pneg %p187
        %p517 = scmp.lt.s32.totalorder %s28, 1
        %s518 = scalar_select %p517, %s28, 1
        %s519 = scalar_lea.vmem %s7, %s518
        %p520 = pneg %p216
        %p521 = pneg %p213
        %p522 = scmp.lt.s32.totalorder %s28, 1
        %s523 = scalar_select %p522, %s28, 1
        %s524 = scalar_lea.vmem %s8, %s523
        %p525 = pneg %p242
        %p526 = pneg %p239
        %p527 = scmp.lt.s32.totalorder %s28, 1
        %s528 = scalar_select %p527, %s28, 1
        %s529 = scalar_lea.vmem %s9, %s528
        %p530 = pneg %p268
        %p531 = pneg %p265
        %p532 = scmp.lt.s32.totalorder %s28, 1
        %s533 = scalar_select %p532, %s28, 1
        %s534 = scalar_lea.vmem %s10, %s533
        %p535 = pneg %p294
        %p536 = pneg %p291
        %p537 = scmp.lt.s32.totalorder %s28, 1
        %s538 = scalar_select %p537, %s28, 1
        %s539 = scalar_lea.vmem %s11, %s538
        %p540 = pneg %p320
        %p541 = pneg %p317
        %p542 = scmp.lt.s32.totalorder %s28, 1
        %s543 = scalar_select %p542, %s28, 1
        %s544 = scalar_lea.vmem %s12, %s543
        %p545 = pneg %p346
        %p546 = pneg %p343
        %p547 = pneg %p367
        %p548 = pneg %p364
        %p549 = pneg %p388
        %p550 = pneg %p385
        %p551 = scmp.lt.s32.totalorder %s28, 1
        %s552 = scalar_select %p551, %s28, 1
        %s553 = smul.addr %s552, 16
        %s554 = smul.addr %s553, 8
        %s555 = scalar_lea.vmem %s3, %s554
        %p556 = scmp.lt.s32.totalorder %s28, 1
        %s557 = scalar_select %p556, %s28, 1
        %s558 = smul.addr %s557, 16
        %s559 = smul.addr %s558, 8
        %s560 = scalar_lea.vmem %s4, %s559
        %p561 = scmp.lt.s32.totalorder %s28, 1
        %s562 = scalar_select %p561, %s28, 1
        %s563 = scalar_lea.vmem %s5, %s562
        %p564 = scmp.lt.s32.totalorder %s28, 1
        %s565 = scalar_select %p564, %s28, 1
        %s566 = scalar_lea.vmem %s6, %s565
        %p567 = scmp.lt.s32.totalorder %s28, 1
        %s568 = scalar_select %p567, %s28, 1
        %s569 = scalar_lea.vmem %s7, %s568
        %p570 = scmp.lt.s32.totalorder %s28, 1
        %s571 = scalar_select %p570, %s28, 1
        %s572 = scalar_lea.vmem %s8, %s571
        %p573 = scmp.lt.s32.totalorder %s28, 1
        %s574 = scalar_select %p573, %s28, 1
        %s575 = scalar_lea.vmem %s9, %s574
        %p576 = scmp.lt.s32.totalorder %s28, 1
        %s577 = scalar_select %p576, %s28, 1
        %s578 = scalar_lea.vmem %s10, %s577
        %p579 = scmp.lt.s32.totalorder %s28, 1
        %s580 = scalar_select %p579, %s28, 1
        %s581 = scalar_lea.vmem %s11, %s580
        %p582 = scmp.lt.s32.totalorder %s28, 1
        %s583 = scalar_select %p582, %s28, 1
        %s584 = scalar_lea.vmem %s12, %s583
        %p586 = scmp.eq.s32.totalorder %s28, 0
        // Predicated region
        $region73: #{hgnn_model_forward_cf.5} parent=71 // pred_check
          %p587 = pneg %p586
        $region74: #{hgnn_model_forward_cf.5} parent=71 // pred_check_branch
          %589 = sbr.rel (%p587) target = $region76
        $region75: #{hgnn_model_forward_cf.5} parent=71 // pred_region
          %v590 = vld [vmem:[%s0] sm:$0xff]
          %v591 = vld [vmem:[%s0 + $0x8] sm:$0xff]
          %v592 = vld [vmem:[%s0 + $0x10] sm:$0xff]
          %v593 = vld [vmem:[%s0 + $0x18] sm:$0xff]
          %v594 = vld [vmem:[%s0 + $0x20] sm:$0xff]
          %v595 = vld [vmem:[%s0 + $0x28] sm:$0xff]
          %v596 = vld [vmem:[%s0 + $0x30] sm:$0xff]
          %v597 = vld [vmem:[%s0 + $0x38] sm:$0xff]
          %v598 = vld [vmem:[%s0 + $0x40] sm:$0xff]
          %v599 = vld [vmem:[%s0 + $0x48] sm:$0xff]
          %v600 = vld [vmem:[%s0 + $0x50] sm:$0xff]
          %v601 = vld [vmem:[%s0 + $0x58] sm:$0xff]
          %v602 = vld [vmem:[%s0 + $0x60] sm:$0xff]
          %v603 = vld [vmem:[%s0 + $0x68] sm:$0xff]
          %v604 = vld [vmem:[%s0 + $0x70] sm:$0xff]
          %v605 = vld [vmem:[%s0 + $0x78] sm:$0xff]
          %v622 = vunpack.c.l.b16 %v590
          %v623 = vunpack.c.h.b16 %v590
          %v624 = vunpack.c.l.b16 %v591
          %v625 = vunpack.c.h.b16 %v591
          %v626 = vunpack.c.l.b16 %v592
          %v627 = vunpack.c.h.b16 %v592
          %v628 = vunpack.c.l.b16 %v593
          %v629 = vunpack.c.h.b16 %v593
          %v630 = vunpack.c.l.b16 %v594
          %v631 = vunpack.c.h.b16 %v594
          %v632 = vunpack.c.l.b16 %v595
          %v633 = vunpack.c.h.b16 %v595
          %v634 = vunpack.c.l.b16 %v596
          %v635 = vunpack.c.h.b16 %v596
          %v636 = vunpack.c.l.b16 %v597
          %v637 = vunpack.c.h.b16 %v597
          %v638 = vunpack.c.l.b16 %v598
          %v639 = vunpack.c.h.b16 %v598
          %v640 = vunpack.c.l.b16 %v599
          %v641 = vunpack.c.h.b16 %v599
          %v642 = vunpack.c.l.b16 %v600
          %v643 = vunpack.c.h.b16 %v600
          %v644 = vunpack.c.l.b16 %v601
          %v645 = vunpack.c.h.b16 %v601
          %v646 = vunpack.c.l.b16 %v602
          %v647 = vunpack.c.h.b16 %v602
          %v648 = vunpack.c.l.b16 %v603
          %v649 = vunpack.c.h.b16 %v603
          %v650 = vunpack.c.l.b16 %v604
          %v651 = vunpack.c.h.b16 %v604
          %v652 = vunpack.c.l.b16 %v605
          %v653 = vunpack.c.h.b16 %v605
          %v654 = vpack.c.b16 %v624, %v622
          %v655 = vpack.c.b16 %v625, %v623
          %v656 = vpack.c.b16 %v628, %v626
          %v657 = vpack.c.b16 %v629, %v627
          %v658 = vpack.c.b16 %v632, %v630
          %v659 = vpack.c.b16 %v633, %v631
          %v660 = vpack.c.b16 %v636, %v634
          %v661 = vpack.c.b16 %v637, %v635
          %v662 = vpack.c.b16 %v640, %v638
          %v663 = vpack.c.b16 %v641, %v639
          %v664 = vpack.c.b16 %v644, %v642
          %v665 = vpack.c.b16 %v645, %v643
          %v666 = vpack.c.b16 %v648, %v646
          %v667 = vpack.c.b16 %v649, %v647
          %v668 = vpack.c.b16 %v652, %v650
          %v669 = vpack.c.b16 %v653, %v651
          %686 = vxpose.xlu0.c.b16.start [1/8] %v654, 128
          %687 = vxpose.xlu0.c.b16.cont [2/8] %v656, 128
          %688 = vxpose.xlu0.c.b16.cont [3/8] %v658, 128
          %689 = vxpose.xlu0.c.b16.cont [4/8] %v660, 128
          %690 = vxpose.xlu0.c.b16.cont [5/8] %v662, 128
          %691 = vxpose.xlu0.c.b16.cont [6/8] %v664, 128
          %692 = vxpose.xlu0.c.b16.cont [7/8] %v666, 128
          %693 = vxpose.xlu0.c.b16.end [8/8] %v668, 128
          %v694 = vpop.trf.xlu0
          %v695 = vpop.trf.xlu0
          %v696 = vpop.trf.xlu0
          %v697 = vpop.trf.xlu0
          %v698 = vpop.trf.xlu0
          %v699 = vpop.trf.xlu0
          %v700 = vpop.trf.xlu0
          %v701 = vpop.trf.xlu0
          %702 = vxpose.xlu0.c.b16.start [1/8] %v655, 128
          %703 = vxpose.xlu0.c.b16.cont [2/8] %v657, 128
          %704 = vxpose.xlu0.c.b16.cont [3/8] %v659, 128
          %705 = vxpose.xlu0.c.b16.cont [4/8] %v661, 128
          %706 = vxpose.xlu0.c.b16.cont [5/8] %v663, 128
          %707 = vxpose.xlu0.c.b16.cont [6/8] %v665, 128
          %708 = vxpose.xlu0.c.b16.cont [7/8] %v667, 128
          %709 = vxpose.xlu0.c.b16.end [8/8] %v669, 128
          %v710 = vpop.trf.xlu0
          %v711 = vpop.trf.xlu0
          %v712 = vpop.trf.xlu0
          %v713 = vpop.trf.xlu0
          %v714 = vpop.trf.xlu0
          %v715 = vpop.trf.xlu0
          %v716 = vpop.trf.xlu0
          %v717 = vpop.trf.xlu0
          %718 = vst [vmem:[#allocation2] sm:$0xff] %v694
          %719 = vst [vmem:[#allocation2 + $0x8] sm:$0xff] %v695
          %720 = vst [vmem:[#allocation2 + $0x10] sm:$0xff] %v696
          %721 = vst [vmem:[#allocation2 + $0x18] sm:$0xff] %v697
          %722 = vst [vmem:[#allocation2 + $0x20] sm:$0xff] %v698
          %723 = vst [vmem:[#allocation2 + $0x28] sm:$0xff] %v699
          %724 = vst [vmem:[#allocation2 + $0x30] sm:$0xff] %v700
          %725 = vst [vmem:[#allocation2 + $0x38] sm:$0xff] %v701
          %726 = vst [vmem:[#allocation2 + $0x40] sm:$0xff] %v710
          %727 = vst [vmem:[#allocation2 + $0x48] sm:$0xff] %v711
          %728 = vst [vmem:[#allocation2 + $0x50] sm:$0xff] %v712
          %729 = vst [vmem:[#allocation2 + $0x58] sm:$0xff] %v713
          %730 = vst [vmem:[#allocation2 + $0x60] sm:$0xff] %v714
          %731 = vst [vmem:[#allocation2 + $0x68] sm:$0xff] %v715
          %732 = vst [vmem:[#allocation2 + $0x70] sm:$0xff] %v716
          %733 = vst [vmem:[#allocation2 + $0x78] sm:$0xff] %v717
          %v734 = vld [vmem:[%s1] sm:$0xff]
          %v735 = vld [vmem:[%s1 + $0x8] sm:$0xff]
          %v736 = vld [vmem:[%s1 + $0x10] sm:$0xff]
          %v737 = vld [vmem:[%s1 + $0x18] sm:$0xff]
          %v738 = vld [vmem:[%s1 + $0x20] sm:$0xff]
          %v739 = vld [vmem:[%s1 + $0x28] sm:$0xff]
          %v740 = vld [vmem:[%s1 + $0x30] sm:$0xff]
          %v741 = vld [vmem:[%s1 + $0x38] sm:$0xff]
          %v742 = vld [vmem:[%s1 + $0x40] sm:$0xff]
          %v743 = vld [vmem:[%s1 + $0x48] sm:$0xff]
          %v744 = vld [vmem:[%s1 + $0x50] sm:$0xff]
          %v745 = vld [vmem:[%s1 + $0x58] sm:$0xff]
          %v746 = vld [vmem:[%s1 + $0x60] sm:$0xff]
          %v747 = vld [vmem:[%s1 + $0x68] sm:$0xff]
          %v748 = vld [vmem:[%s1 + $0x70] sm:$0xff]
          %v749 = vld [vmem:[%s1 + $0x78] sm:$0xff]
          %750 = vst [vmem:[#allocation3] sm:$0xff] %v734
          %751 = vst [vmem:[#allocation3 + $0x8] sm:$0xff] %v735
          %752 = vst [vmem:[#allocation3 + $0x10] sm:$0xff] %v736
          %753 = vst [vmem:[#allocation3 + $0x18] sm:$0xff] %v737
          %754 = vst [vmem:[#allocation3 + $0x20] sm:$0xff] %v738
          %755 = vst [vmem:[#allocation3 + $0x28] sm:$0xff] %v739
          %756 = vst [vmem:[#allocation3 + $0x30] sm:$0xff] %v740
          %757 = vst [vmem:[#allocation3 + $0x38] sm:$0xff] %v741
          %758 = vst [vmem:[#allocation3 + $0x40] sm:$0xff] %v742
          %759 = vst [vmem:[#allocation3 + $0x48] sm:$0xff] %v743
          %760 = vst [vmem:[#allocation3 + $0x50] sm:$0xff] %v744
          %761 = vst [vmem:[#allocation3 + $0x58] sm:$0xff] %v745
          %762 = vst [vmem:[#allocation3 + $0x60] sm:$0xff] %v746
          %763 = vst [vmem:[#allocation3 + $0x68] sm:$0xff] %v747
          %764 = vst [vmem:[#allocation3 + $0x70] sm:$0xff] %v748
          %765 = vst [vmem:[#allocation3 + $0x78] sm:$0xff] %v749
          %v766 = vld [vmem:[%s2] sm:$0xff]
          %v767 = vld [vmem:[%s2 + $0x8] sm:$0xff]
          %v768 = vld [vmem:[%s2 + $0x10] sm:$0xff]
          %v769 = vld [vmem:[%s2 + $0x18] sm:$0xff]
          %v770 = vld [vmem:[%s2 + $0x20] sm:$0xff]
          %v771 = vld [vmem:[%s2 + $0x28] sm:$0xff]
          %v772 = vld [vmem:[%s2 + $0x30] sm:$0xff]
          %v773 = vld [vmem:[%s2 + $0x38] sm:$0xff]
          %v774 = vld [vmem:[%s2 + $0x40] sm:$0xff]
          %v775 = vld [vmem:[%s2 + $0x48] sm:$0xff]
          %v776 = vld [vmem:[%s2 + $0x50] sm:$0xff]
          %v777 = vld [vmem:[%s2 + $0x58] sm:$0xff]
          %v778 = vld [vmem:[%s2 + $0x60] sm:$0xff]
          %v779 = vld [vmem:[%s2 + $0x68] sm:$0xff]
          %v780 = vld [vmem:[%s2 + $0x70] sm:$0xff]
          %v781 = vld [vmem:[%s2 + $0x78] sm:$0xff]
          %v782 = vld [vmem:[%s2 + $0x80] sm:$0xff]
          %v783 = vld [vmem:[%s2 + $0x88] sm:$0xff]
          %v784 = vld [vmem:[%s2 + $0x90] sm:$0xff]
          %v785 = vld [vmem:[%s2 + $0x98] sm:$0xff]
          %v786 = vld [vmem:[%s2 + $0xa0] sm:$0xff]
          %v787 = vld [vmem:[%s2 + $0xa8] sm:$0xff]
          %v788 = vld [vmem:[%s2 + $0xb0] sm:$0xff]
          %v789 = vld [vmem:[%s2 + $0xb8] sm:$0xff]
          %v790 = vld [vmem:[%s2 + $0xc0] sm:$0xff]
          %v791 = vld [vmem:[%s2 + $0xc8] sm:$0xff]
          %v792 = vld [vmem:[%s2 + $0xd0] sm:$0xff]
          %v793 = vld [vmem:[%s2 + $0xd8] sm:$0xff]
          %v794 = vld [vmem:[%s2 + $0xe0] sm:$0xff]
          %v795 = vld [vmem:[%s2 + $0xe8] sm:$0xff]
          %v796 = vld [vmem:[%s2 + $0xf0] sm:$0xff]
          %v797 = vld [vmem:[%s2 + $0xf8] sm:$0xff]
          %798 = vst [vmem:[#allocation5] sm:$0xff] %v766
          %799 = vst [vmem:[#allocation5 + $0x8] sm:$0xff] %v767
          %800 = vst [vmem:[#allocation5 + $0x10] sm:$0xff] %v768
          %801 = vst [vmem:[#allocation5 + $0x18] sm:$0xff] %v769
          %802 = vst [vmem:[#allocation5 + $0x20] sm:$0xff] %v770
          %803 = vst [vmem:[#allocation5 + $0x28] sm:$0xff] %v771
          %804 = vst [vmem:[#allocation5 + $0x30] sm:$0xff] %v772
          %805 = vst [vmem:[#allocation5 + $0x38] sm:$0xff] %v773
          %806 = vst [vmem:[#allocation5 + $0x40] sm:$0xff] %v774
          %807 = vst [vmem:[#allocation5 + $0x48] sm:$0xff] %v775
          %808 = vst [vmem:[#allocation5 + $0x50] sm:$0xff] %v776
          %809 = vst [vmem:[#allocation5 + $0x58] sm:$0xff] %v777
          %810 = vst [vmem:[#allocation5 + $0x60] sm:$0xff] %v778
          %811 = vst [vmem:[#allocation5 + $0x68] sm:$0xff] %v779
          %812 = vst [vmem:[#allocation5 + $0x70] sm:$0xff] %v780
          %813 = vst [vmem:[#allocation5 + $0x78] sm:$0xff] %v781
          %814 = vst [vmem:[#allocation5 + $0x80] sm:$0xff] %v782
          %815 = vst [vmem:[#allocation5 + $0x88] sm:$0xff] %v783
          %816 = vst [vmem:[#allocation5 + $0x90] sm:$0xff] %v784
          %817 = vst [vmem:[#allocation5 + $0x98] sm:$0xff] %v785
          %818 = vst [vmem:[#allocation5 + $0xa0] sm:$0xff] %v786
          %819 = vst [vmem:[#allocation5 + $0xa8] sm:$0xff] %v787
          %820 = vst [vmem:[#allocation5 + $0xb0] sm:$0xff] %v788
          %821 = vst [vmem:[#allocation5 + $0xb8] sm:$0xff] %v789
          %822 = vst [vmem:[#allocation5 + $0xc0] sm:$0xff] %v790
          %823 = vst [vmem:[#allocation5 + $0xc8] sm:$0xff] %v791
          %824 = vst [vmem:[#allocation5 + $0xd0] sm:$0xff] %v792
          %825 = vst [vmem:[#allocation5 + $0xd8] sm:$0xff] %v793
          %826 = vst [vmem:[#allocation5 + $0xe0] sm:$0xff] %v794
          %827 = vst [vmem:[#allocation5 + $0xe8] sm:$0xff] %v795
          %828 = vst [vmem:[#allocation5 + $0xf0] sm:$0xff] %v796
          %829 = vst [vmem:[#allocation5 + $0xf8] sm:$0xff] %v797
        $region76: #{hgnn_model_forward_cf.5} parent=71 // pred_fallthru
          _
        %v830 = vld [vmem:[%s0] sm:$0xff]
        %v831 = vld [vmem:[%s0 + $0x8] sm:$0xff]
        %v832 = vld [vmem:[%s0 + $0x10] sm:$0xff]
        %v833 = vld [vmem:[%s0 + $0x18] sm:$0xff]
        %v834 = vld [vmem:[%s0 + $0x20] sm:$0xff]
        %v835 = vld [vmem:[%s0 + $0x28] sm:$0xff]
        %v836 = vld [vmem:[%s0 + $0x30] sm:$0xff]
        %v837 = vld [vmem:[%s0 + $0x38] sm:$0xff]
        %v838 = vld [vmem:[%s0 + $0x40] sm:$0xff]
        %v839 = vld [vmem:[%s0 + $0x48] sm:$0xff]
        %v840 = vld [vmem:[%s0 + $0x50] sm:$0xff]
        %v841 = vld [vmem:[%s0 + $0x58] sm:$0xff]
        %v842 = vld [vmem:[%s0 + $0x60] sm:$0xff]
        %v843 = vld [vmem:[%s0 + $0x68] sm:$0xff]
        %v844 = vld [vmem:[%s0 + $0x70] sm:$0xff]
        %v845 = vld [vmem:[%s0 + $0x78] sm:$0xff]
        %v846 = vld [vmem:[#allocation2] sm:$0xff]
        %v847 = vld [vmem:[#allocation2 + $0x8] sm:$0xff]
        %v848 = vld [vmem:[#allocation2 + $0x10] sm:$0xff]
        %v849 = vld [vmem:[#allocation2 + $0x18] sm:$0xff]
        %v850 = vld [vmem:[#allocation2 + $0x20] sm:$0xff]
        %v851 = vld [vmem:[#allocation2 + $0x28] sm:$0xff]
        %v852 = vld [vmem:[#allocation2 + $0x30] sm:$0xff]
        %v853 = vld [vmem:[#allocation2 + $0x38] sm:$0xff]
        %v854 = vld [vmem:[#allocation2 + $0x40] sm:$0xff]
        %v855 = vld [vmem:[#allocation2 + $0x48] sm:$0xff]
        %v856 = vld [vmem:[#allocation2 + $0x50] sm:$0xff]
        %v857 = vld [vmem:[#allocation2 + $0x58] sm:$0xff]
        %v858 = vld [vmem:[#allocation2 + $0x60] sm:$0xff]
        %v859 = vld [vmem:[#allocation2 + $0x68] sm:$0xff]
        %v860 = vld [vmem:[#allocation2 + $0x70] sm:$0xff]
        %v861 = vld [vmem:[#allocation2 + $0x78] sm:$0xff]
        %v862 = vld [vmem:[#allocation3] sm:$0xff]
        %v863 = vld [vmem:[#allocation3 + $0x8] sm:$0xff]
        %v864 = vld [vmem:[#allocation3 + $0x10] sm:$0xff]
        %v865 = vld [vmem:[#allocation3 + $0x18] sm:$0xff]
        %v866 = vld [vmem:[#allocation3 + $0x20] sm:$0xff]
        %v867 = vld [vmem:[#allocation3 + $0x28] sm:$0xff]
        %v868 = vld [vmem:[#allocation3 + $0x30] sm:$0xff]
        %v869 = vld [vmem:[#allocation3 + $0x38] sm:$0xff]
        %v870 = vld [vmem:[#allocation3 + $0x40] sm:$0xff]
        %v871 = vld [vmem:[#allocation3 + $0x48] sm:$0xff]
        %v872 = vld [vmem:[#allocation3 + $0x50] sm:$0xff]
        %v873 = vld [vmem:[#allocation3 + $0x58] sm:$0xff]
        %v874 = vld [vmem:[#allocation3 + $0x60] sm:$0xff]
        %v875 = vld [vmem:[#allocation3 + $0x68] sm:$0xff]
        %v876 = vld [vmem:[#allocation3 + $0x70] sm:$0xff]
        %v877 = vld [vmem:[#allocation3 + $0x78] sm:$0xff]
        %v878 = vld [vmem:[#allocation5] sm:$0xff]
        %v879 = vld [vmem:[#allocation5 + $0x8] sm:$0xff]
        %v880 = vld [vmem:[#allocation5 + $0x10] sm:$0xff]
        %v881 = vld [vmem:[#allocation5 + $0x18] sm:$0xff]
        %v882 = vld [vmem:[#allocation5 + $0x20] sm:$0xff]
        %v883 = vld [vmem:[#allocation5 + $0x28] sm:$0xff]
        %v884 = vld [vmem:[#allocation5 + $0x30] sm:$0xff]
        %v885 = vld [vmem:[#allocation5 + $0x38] sm:$0xff]
        %v886 = vld [vmem:[#allocation5 + $0x40] sm:$0xff]
        %v887 = vld [vmem:[#allocation5 + $0x48] sm:$0xff]
        %v888 = vld [vmem:[#allocation5 + $0x50] sm:$0xff]
        %v889 = vld [vmem:[#allocation5 + $0x58] sm:$0xff]
        %v890 = vld [vmem:[#allocation5 + $0x60] sm:$0xff]
        %v891 = vld [vmem:[#allocation5 + $0x68] sm:$0xff]
        %v892 = vld [vmem:[#allocation5 + $0x70] sm:$0xff]
        %v893 = vld [vmem:[#allocation5 + $0x78] sm:$0xff]
        %v894 = vld [vmem:[#allocation5 + $0x80] sm:$0xff]
        %v895 = vld [vmem:[#allocation5 + $0x88] sm:$0xff]
        %v896 = vld [vmem:[#allocation5 + $0x90] sm:$0xff]
        %v897 = vld [vmem:[#allocation5 + $0x98] sm:$0xff]
        %v898 = vld [vmem:[#allocation5 + $0xa0] sm:$0xff]
        %v899 = vld [vmem:[#allocation5 + $0xa8] sm:$0xff]
        %v900 = vld [vmem:[#allocation5 + $0xb0] sm:$0xff]
        %v901 = vld [vmem:[#allocation5 + $0xb8] sm:$0xff]
        %v902 = vld [vmem:[#allocation5 + $0xc0] sm:$0xff]
        %v903 = vld [vmem:[#allocation5 + $0xc8] sm:$0xff]
        %v904 = vld [vmem:[#allocation5 + $0xd0] sm:$0xff]
        %v905 = vld [vmem:[#allocation5 + $0xd8] sm:$0xff]
        %v906 = vld [vmem:[#allocation5 + $0xe0] sm:$0xff]
        %v907 = vld [vmem:[#allocation5 + $0xe8] sm:$0xff]
        %v908 = vld [vmem:[#allocation5 + $0xf0] sm:$0xff]
        %v909 = vld [vmem:[#allocation5 + $0xf8] sm:$0xff]
        %v910 = vld [vmem:[%s555] sm:$0xff]
        %v911 = vld [vmem:[%s555 + $0x8] sm:$0xff]
        %v912 = vld [vmem:[%s555 + $0x10] sm:$0xff]
        %v913 = vld [vmem:[%s555 + $0x18] sm:$0xff]
        %v914 = vld [vmem:[%s555 + $0x20] sm:$0xff]
        %v915 = vld [vmem:[%s555 + $0x28] sm:$0xff]
        %v916 = vld [vmem:[%s555 + $0x30] sm:$0xff]
        %v917 = vld [vmem:[%s555 + $0x38] sm:$0xff]
        %v918 = vld [vmem:[%s555 + $0x40] sm:$0xff]
        %v919 = vld [vmem:[%s555 + $0x48] sm:$0xff]
        %v920 = vld [vmem:[%s555 + $0x50] sm:$0xff]
        %v921 = vld [vmem:[%s555 + $0x58] sm:$0xff]
        %v922 = vld [vmem:[%s555 + $0x60] sm:$0xff]
        %v923 = vld [vmem:[%s555 + $0x68] sm:$0xff]
        %v924 = vld [vmem:[%s555 + $0x70] sm:$0xff]
        %v925 = vld [vmem:[%s555 + $0x78] sm:$0xff]
        %v926 = vld [vmem:[%s560] sm:$0xff]
        %v927 = vld [vmem:[%s560 + $0x8] sm:$0xff]
        %v928 = vld [vmem:[%s560 + $0x10] sm:$0xff]
        %v929 = vld [vmem:[%s560 + $0x18] sm:$0xff]
        %v930 = vld [vmem:[%s560 + $0x20] sm:$0xff]
        %v931 = vld [vmem:[%s560 + $0x28] sm:$0xff]
        %v932 = vld [vmem:[%s560 + $0x30] sm:$0xff]
        %v933 = vld [vmem:[%s560 + $0x38] sm:$0xff]
        %v934 = vld [vmem:[%s560 + $0x40] sm:$0xff]
        %v935 = vld [vmem:[%s560 + $0x48] sm:$0xff]
        %v936 = vld [vmem:[%s560 + $0x50] sm:$0xff]
        %v937 = vld [vmem:[%s560 + $0x58] sm:$0xff]
        %v938 = vld [vmem:[%s560 + $0x60] sm:$0xff]
        %v939 = vld [vmem:[%s560 + $0x68] sm:$0xff]
        %v940 = vld [vmem:[%s560 + $0x70] sm:$0xff]
        %v941 = vld [vmem:[%s560 + $0x78] sm:$0xff]
        %v942 = vpack.c.bf16 %v863, %v862
        %v943 = vpack.c.bf16 %v865, %v864
        %v944 = vpack.c.bf16 %v867, %v866
        %v945 = vpack.c.bf16 %v869, %v868
        %v946 = vpack.c.bf16 %v871, %v870
        %v947 = vpack.c.bf16 %v873, %v872
        %v948 = vpack.c.bf16 %v875, %v874
        %v949 = vpack.c.bf16 %v877, %v876
        %950 = vmatprep.subr.bf16.mxu0 0
        %951 = vmatpush1.bf16.msra.mxu0 %v942
        %952 = vmatprep.subr.bf16.mxu0 0
        %953 = vmatpush1.bf16.msra.mxu0 %v943
        %954 = vmatprep.subr.bf16.mxu0 0
        %955 = vmatpush1.bf16.msra.mxu0 %v944
        %956 = vmatprep.subr.bf16.mxu0 0
        %957 = vmatpush1.bf16.msra.mxu0 %v945
        %958 = vmatprep.subr.bf16.mxu0 0
        %959 = vmatpush1.bf16.msra.mxu0 %v946
        %960 = vmatprep.subr.bf16.mxu0 0
        %961 = vmatpush1.bf16.msra.mxu0 %v947
        %962 = vmatprep.subr.bf16.mxu0 0
        %963 = vmatpush1.bf16.msra.mxu0 %v948
        %964 = vmatprep.subr.bf16.mxu0 0
        %965 = vmatpush1.bf16.msra.mxu0 %v949
        %966 = vmatprep.subr.bf16.mxu0 0
        %967 = vmatpush1.bf16.msra.mxu0 0
        %968 = vmatprep.subr.bf16.mxu0 0
        %969 = vmatpush1.bf16.msra.mxu0 0
        %970 = vmatprep.subr.bf16.mxu0 0
        %971 = vmatpush1.bf16.msra.mxu0 0
        %972 = vmatprep.subr.bf16.mxu0 0
        %973 = vmatpush1.bf16.msra.mxu0 0
        %974 = vmatprep.subr.bf16.mxu0 0
        %975 = vmatpush1.bf16.msra.mxu0 0
        %976 = vmatprep.subr.bf16.mxu0 0
        %977 = vmatpush1.bf16.msra.mxu0 0
        %978 = vmatprep.subr.bf16.mxu0 0
        %979 = vmatpush1.bf16.msra.mxu0 0
        %980 = vmatprep.subr.bf16.mxu0 0
        %981 = vmatpush1.bf16.msra.mxu0 0
        %982 = vmatprep.mubr.bf16.mxu0 0
        %983 = vmatmul.mubr.bf16.gmra.mrb[0].mxu0 %v846
        %v984 = vpop.f32.mrb[0].mxu0
        %v985 = vadd.f32 0.0, %v984
        %v986 = vpop.f32.mrb[0].mxu0
        %v987 = vpop.f32.mrb[0].mxu0
        %v988 = vadd.f32 0.0, %v987
        %v989 = vpop.f32.mrb[0].mxu0
        %990 = vmatprep.mubr.bf16.mxu0 0
        %991 = vmatmul.mubr.bf16.gmra.mrb[0].mxu0 %v847
        %v992 = vpop.f32.mrb[0].mxu0
        %v993 = vadd.f32 0.0, %v992
        %v994 = vpop.f32.mrb[0].mxu0
        %v995 = vpop.f32.mrb[0].mxu0
        %v996 = vadd.f32 0.0, %v995
        %v997 = vpop.f32.mrb[0].mxu0
        %998 = vmatprep.mubr.bf16.mxu0 0
        %999 = vmatmul.mubr.bf16.gmra.mrb[0].mxu0 %v848
        %v1000 = vpop.f32.mrb[0].mxu0
        %v1001 = vadd.f32 0.0, %v1000
        %v1002 = vpop.f32.mrb[0].mxu0
        %v1003 = vpop.f32.mrb[0].mxu0
        %v1004 = vadd.f32 0.0, %v1003
        %v1005 = vpop.f32.mrb[0].mxu0
        %1006 = vmatprep.mubr.bf16.mxu0 0
        %1007 = vmatmul.mubr.bf16.gmra.mrb[0].mxu0 %v849
        %v1008 = vpop.f32.mrb[0].mxu0
        %v1009 = vadd.f32 0.0, %v1008
        %v1010 = vpop.f32.mrb[0].mxu0
        %v1011 = vpop.f32.mrb[0].mxu0
        %v1012 = vadd.f32 0.0, %v1011
        %v1013 = vpop.f32.mrb[0].mxu0
        %1014 = vmatprep.mubr.bf16.mxu0 0
        %1015 = vmatmul.mubr.bf16.gmra.mrb[0].mxu0 %v850
        %v1016 = vpop.f32.mrb[0].mxu0
        %v1017 = vadd.f32 0.0, %v1016
        %v1018 = vpop.f32.mrb[0].mxu0
        %v1019 = vpop.f32.mrb[0].mxu0
        %v1020 = vadd.f32 0.0, %v1019
        %v1021 = vpop.f32.mrb[0].mxu0
        %1022 = vmatprep.mubr.bf16.mxu0 0
        %1023 = vmatmul.mubr.bf16.gmra.mrb[0].mxu0 %v851
        %v1024 = vpop.f32.mrb[0].mxu0
        %v1025 = vadd.f32 0.0, %v1024
        %v1026 = vpop.f32.mrb[0].mxu0
        %v1027 = vpop.f32.mrb[0].mxu0
        %v1028 = vadd.f32 0.0, %v1027
        %v1029 = vpop.f32.mrb[0].mxu0
        %1030 = vmatprep.mubr.bf16.mxu0 0
        %1031 = vmatmul.mubr.bf16.gmra.mrb[0].mxu0 %v852
        %v1032 = vpop.f32.mrb[0].mxu0
        %v1033 = vadd.f32 0.0, %v1032
        %v1034 = vpop.f32.mrb[0].mxu0
        %v1035 = vpop.f32.mrb[0].mxu0
        %v1036 = vadd.f32 0.0, %v1035
        %v1037 = vpop.f32.mrb[0].mxu0
        %1038 = vmatprep.mubr.bf16.mxu0 0
        %1039 = vmatmul.mubr.bf16.gmra.mrb[0].mxu0 %v853
        %v1040 = vpop.f32.mrb[0].mxu0
        %v1041 = vadd.f32 0.0, %v1040
        %v1042 = vpop.f32.mrb[0].mxu0
        %v1043 = vpop.f32.mrb[0].mxu0
        %v1044 = vadd.f32 0.0, %v1043
        %v1045 = vpop.f32.mrb[0].mxu0
        %1046 = vmatprep.mubr.bf16.mxu0 0
        %1047 = vmatmul.mubr.bf16.gmra.mrb[0].mxu0 %v854
        %v1048 = vpop.f32.mrb[0].mxu0
        %v1049 = vadd.f32 0.0, %v1048
        %v1050 = vpop.f32.mrb[0].mxu0
        %v1051 = vpop.f32.mrb[0].mxu0
        %v1052 = vadd.f32 0.0, %v1051
        %v1053 = vpop.f32.mrb[0].mxu0
        %1054 = vmatprep.mubr.bf16.mxu0 0
        %1055 = vmatmul.mubr.bf16.gmra.mrb[0].mxu0 %v855
        %v1056 = vpop.f32.mrb[0].mxu0
        %v1057 = vadd.f32 0.0, %v1056
        %v1058 = vpop.f32.mrb[0].mxu0
        %v1059 = vpop.f32.mrb[0].mxu0
        %v1060 = vadd.f32 0.0, %v1059
        %v1061 = vpop.f32.mrb[0].mxu0
        %1062 = vmatprep.mubr.bf16.mxu0 0
        %1063 = vmatmul.mubr.bf16.gmra.mrb[0].mxu0 %v856
        %v1064 = vpop.f32.mrb[0].mxu0
        %v1065 = vadd.f32 0.0, %v1064
        %v1066 = vpop.f32.mrb[0].mxu0
        %v1067 = vpop.f32.mrb[0].mxu0
        %v1068 = vadd.f32 0.0, %v1067
        %v1069 = vpop.f32.mrb[0].mxu0
        %1070 = vmatprep.mubr.bf16.mxu0 0
        %1071 = vmatmul.mubr.bf16.gmra.mrb[0].mxu0 %v857
        %v1072 = vpop.f32.mrb[0].mxu0
        %v1073 = vadd.f32 0.0, %v1072
        %v1074 = vpop.f32.mrb[0].mxu0
        %v1075 = vpop.f32.mrb[0].mxu0
        %v1076 = vadd.f32 0.0, %v1075
        %v1077 = vpop.f32.mrb[0].mxu0
        %1078 = vmatprep.mubr.bf16.mxu0 0
        %1079 = vmatmul.mubr.bf16.gmra.mrb[0].mxu0 %v858
        %v1080 = vpop.f32.mrb[0].mxu0
        %v1081 = vadd.f32 0.0, %v1080
        %v1082 = vpop.f32.mrb[0].mxu0
        %v1083 = vpop.f32.mrb[0].mxu0
        %v1084 = vadd.f32 0.0, %v1083
        %v1085 = vpop.f32.mrb[0].mxu0
        %1086 = vmatprep.mubr.bf16.mxu0 0
        %1087 = vmatmul.mubr.bf16.gmra.mrb[0].mxu0 %v859
        %v1088 = vpop.f32.mrb[0].mxu0
        %v1089 = vadd.f32 0.0, %v1088
        %v1090 = vpop.f32.mrb[0].mxu0
        %v1091 = vpop.f32.mrb[0].mxu0
        %v1092 = vadd.f32 0.0, %v1091
        %v1093 = vpop.f32.mrb[0].mxu0
        %1094 = vmatprep.mubr.bf16.mxu0 0
        %1095 = vmatmul.mubr.bf16.gmra.mrb[0].mxu0 %v860
        %v1096 = vpop.f32.mrb[0].mxu0
        %v1097 = vadd.f32 0.0, %v1096
        %v1098 = vpop.f32.mrb[0].mxu0
        %v1099 = vpop.f32.mrb[0].mxu0
        %v1100 = vadd.f32 0.0, %v1099
        %v1101 = vpop.f32.mrb[0].mxu0
        %1102 = vmatprep.mubr.bf16.mxu0 0
        %1103 = vmatmul.mubr.bf16.gmra.mrb[0].mxu0 %v861
        %v1104 = vpop.f32.mrb[0].mxu0
        %v1105 = vadd.f32 0.0, %v1104
        %v1106 = vpop.f32.mrb[0].mxu0
        %v1107 = vpop.f32.mrb[0].mxu0
        %v1108 = vadd.f32 0.0, %v1107
        %v1109 = vpop.f32.mrb[0].mxu0
        %1110 = vdwg.mxu0
        %1111 = vmatprep.subr.mxu0 0.0
        %1112 = vmatpush1.msra.mxu0 %v910
        %1113 = vmatprep.subr.mxu0 0.0
        %1114 = vmatpush1.msra.mxu0 %v911
        %1115 = vmatprep.subr.mxu0 0.0
        %1116 = vmatpush1.msra.mxu0 %v912
        %1117 = vmatprep.subr.mxu0 0.0
        %1118 = vmatpush1.msra.mxu0 %v913
        %1119 = vmatprep.subr.mxu0 0.0
        %1120 = vmatpush1.msra.mxu0 %v914
        %1121 = vmatprep.subr.mxu0 0.0
        %1122 = vmatpush1.msra.mxu0 %v915
        %1123 = vmatprep.subr.mxu0 0.0
        %1124 = vmatpush1.msra.mxu0 %v916
        %1125 = vmatprep.subr.mxu0 0.0
        %1126 = vmatpush1.msra.mxu0 %v917
        %1127 = vmatprep.subr.mxu0 0.0
        %1128 = vmatpush1.msra.mxu0 %v918
        %1129 = vmatprep.subr.mxu0 0.0
        %1130 = vmatpush1.msra.mxu0 %v919
        %1131 = vmatprep.subr.mxu0 0.0
        %1132 = vmatpush1.msra.mxu0 %v920
        %1133 = vmatprep.subr.mxu0 0.0
        %1134 = vmatpush1.msra.mxu0 %v921
        %1135 = vmatprep.subr.mxu0 0.0
        %1136 = vmatpush1.msra.mxu0 %v922
        %1137 = vmatprep.subr.mxu0 0.0
        %1138 = vmatpush1.msra.mxu0 %v923
        %1139 = vmatprep.subr.mxu0 0.0
        %1140 = vmatpush1.msra.mxu0 %v924
        %1141 = vmatprep.subr.mxu0 0.0
        %1142 = vmatpush1.msra.mxu0 %v925
        %1143 = vmatprep.subr.mxu0 0.0
        %1144 = vmatpush1.msra.mxu0 0.0
        %1145 = vmatprep.subr.mxu0 0.0
        %1146 = vmatpush1.msra.mxu0 0.0
        %1147 = vmatprep.subr.mxu0 0.0
        %1148 = vmatpush1.msra.mxu0 0.0
        %1149 = vmatprep.subr.mxu0 0.0
        %1150 = vmatpush1.msra.mxu0 0.0
        %1151 = vmatprep.subr.mxu0 0.0
        %1152 = vmatpush1.msra.mxu0 0.0
        %1153 = vmatprep.subr.mxu0 0.0
        %1154 = vmatpush1.msra.mxu0 0.0
        %1155 = vmatprep.subr.mxu0 0.0
        %1156 = vmatpush1.msra.mxu0 0.0
        %1157 = vmatprep.subr.mxu0 0.0
        %1158 = vmatpush1.msra.mxu0 0.0
        %1159 = vmatprep.subr.mxu0 0.0
        %1160 = vmatpush1.msra.mxu0 0.0
        %1161 = vmatprep.subr.mxu0 0.0
        %1162 = vmatpush1.msra.mxu0 0.0
        %1163 = vmatprep.subr.mxu0 0.0
        %1164 = vmatpush1.msra.mxu0 0.0
        %1165 = vmatprep.subr.mxu0 0.0
        %1166 = vmatpush1.msra.mxu0 0.0
        %1167 = vmatprep.subr.mxu0 0.0
        %1168 = vmatpush1.msra.mxu0 0.0
        %1169 = vmatprep.subr.mxu0 0.0
        %1170 = vmatpush1.msra.mxu0 0.0
        %1171 = vmatprep.subr.mxu0 0.0
        %1172 = vmatpush1.msra.mxu0 0.0
        %1173 = vmatprep.subr.mxu0 0.0
        %1174 = vmatpush1.msra.mxu0 0.0
        %1175 = vmatprep.mubr.f32.mxu0 0.0
        %1176 = vmatmul.mubr.f32.gmra.mrb[0].mxu0 %v985
        %v1177 = vpop.f32.mrb[0].mxu0
        %v1178 = vadd.f32 0.0, %v1177
        %v1179 = vpop.f32.mrb[0].mxu0
        %1180 = vmatprep.mubr.f32.mxu0 0.0
        %1181 = vmatmul.mubr.f32.gmra.mrb[0].mxu0 %v988
        %v1182 = vpop.f32.mrb[0].mxu0
        %v1183 = vadd.f32 0.0, %v1182
        %v1184 = vpop.f32.mrb[0].mxu0
        %1185 = vmatprep.mubr.f32.mxu0 0.0
        %1186 = vmatmul.mubr.f32.gmra.mrb[0].mxu0 %v993
        %v1187 = vpop.f32.mrb[0].mxu0
        %v1188 = vadd.f32 0.0, %v1187
        %v1189 = vpop.f32.mrb[0].mxu0
        %1190 = vmatprep.mubr.f32.mxu0 0.0
        %1191 = vmatmul.mubr.f32.gmra.mrb[0].mxu0 %v996
        %v1192 = vpop.f32.mrb[0].mxu0
        %v1193 = vadd.f32 0.0, %v1192
        %v1194 = vpop.f32.mrb[0].mxu0
        %1195 = vmatprep.mubr.f32.mxu0 0.0
        %1196 = vmatmul.mubr.f32.gmra.mrb[0].mxu0 %v1001
        %v1197 = vpop.f32.mrb[0].mxu0
        %v1198 = vadd.f32 0.0, %v1197
        %v1199 = vpop.f32.mrb[0].mxu0
        %1200 = vmatprep.mubr.f32.mxu0 0.0
        %1201 = vmatmul.mubr.f32.gmra.mrb[0].mxu0 %v1004
        %v1202 = vpop.f32.mrb[0].mxu0
        %v1203 = vadd.f32 0.0, %v1202
        %v1204 = vpop.f32.mrb[0].mxu0
        %1205 = vmatprep.mubr.f32.mxu0 0.0
        %1206 = vmatmul.mubr.f32.gmra.mrb[0].mxu0 %v1009
        %v1207 = vpop.f32.mrb[0].mxu0
        %v1208 = vadd.f32 0.0, %v1207
        %v1209 = vpop.f32.mrb[0].mxu0
        %1210 = vmatprep.mubr.f32.mxu0 0.0
        %1211 = vmatmul.mubr.f32.gmra.mrb[0].mxu0 %v1012
        %v1212 = vpop.f32.mrb[0].mxu0
        %v1213 = vadd.f32 0.0, %v1212
        %v1214 = vpop.f32.mrb[0].mxu0
        %1215 = vmatprep.mubr.f32.mxu0 0.0
        %1216 = vmatmul.mubr.f32.gmra.mrb[0].mxu0 %v1017
        %v1217 = vpop.f32.mrb[0].mxu0
        %v1218 = vadd.f32 0.0, %v1217
        %v1219 = vpop.f32.mrb[0].mxu0
        %1220 = vmatprep.mubr.f32.mxu0 0.0
        %1221 = vmatmul.mubr.f32.gmra.mrb[0].mxu0 %v1020
        %v1222 = vpop.f32.mrb[0].mxu0
        %v1223 = vadd.f32 0.0, %v1222
        %v1224 = vpop.f32.mrb[0].mxu0
        %1225 = vmatprep.mubr.f32.mxu0 0.0
        %1226 = vmatmul.mubr.f32.gmra.mrb[0].mxu0 %v1025
        %v1227 = vpop.f32.mrb[0].mxu0
        %v1228 = vadd.f32 0.0, %v1227
        %v1229 = vpop.f32.mrb[0].mxu0
        %1230 = vmatprep.mubr.f32.mxu0 0.0
        %1231 = vmatmul.mubr.f32.gmra.mrb[0].mxu0 %v1028
        %v1232 = vpop.f32.mrb[0].mxu0
        %v1233 = vadd.f32 0.0, %v1232
        %v1234 = vpop.f32.mrb[0].mxu0
        %1235 = vmatprep.mubr.f32.mxu0 0.0
        %1236 = vmatmul.mubr.f32.gmra.mrb[0].mxu0 %v1033
        %v1237 = vpop.f32.mrb[0].mxu0
        %v1238 = vadd.f32 0.0, %v1237
        %v1239 = vpop.f32.mrb[0].mxu0
        %1240 = vmatprep.mubr.f32.mxu0 0.0
        %1241 = vmatmul.mubr.f32.gmra.mrb[0].mxu0 %v1036
        %v1242 = vpop.f32.mrb[0].mxu0
        %v1243 = vadd.f32 0.0, %v1242
        %v1244 = vpop.f32.mrb[0].mxu0
        %1245 = vmatprep.mubr.f32.mxu0 0.0
        %1246 = vmatmul.mubr.f32.gmra.mrb[0].mxu0 %v1041
        %v1247 = vpop.f32.mrb[0].mxu0
        %v1248 = vadd.f32 0.0, %v1247
        %v1249 = vpop.f32.mrb[0].mxu0
        %1250 = vmatprep.mubr.f32.mxu0 0.0
        %1251 = vmatmul.mubr.f32.gmra.mrb[0].mxu0 %v1044
        %v1252 = vpop.f32.mrb[0].mxu0
        %v1253 = vadd.f32 0.0, %v1252
        %v1254 = vpop.f32.mrb[0].mxu0
        %1255 = vmatprep.mubr.f32.mxu0 0.0
        %1256 = vmatmul.mubr.f32.gmra.mrb[0].mxu0 %v1049
        %v1257 = vpop.f32.mrb[0].mxu0
        %v1258 = vadd.f32 0.0, %v1257
        %v1259 = vpop.f32.mrb[0].mxu0
        %1260 = vmatprep.mubr.f32.mxu0 0.0
        %1261 = vmatmul.mubr.f32.gmra.mrb[0].mxu0 %v1052
        %v1262 = vpop.f32.mrb[0].mxu0
        %v1263 = vadd.f32 0.0, %v1262
        %v1264 = vpop.f32.mrb[0].mxu0
        %1265 = vmatprep.mubr.f32.mxu0 0.0
        %1266 = vmatmul.mubr.f32.gmra.mrb[0].mxu0 %v1057
        %v1267 = vpop.f32.mrb[0].mxu0
        %v1268 = vadd.f32 0.0, %v1267
        %v1269 = vpop.f32.mrb[0].mxu0
        %1270 = vmatprep.mubr.f32.mxu0 0.0
        %1271 = vmatmul.mubr.f32.gmra.mrb[0].mxu0 %v1060
        %v1272 = vpop.f32.mrb[0].mxu0
        %v1273 = vadd.f32 0.0, %v1272
        %v1274 = vpop.f32.mrb[0].mxu0
        %1275 = vmatprep.mubr.f32.mxu0 0.0
        %1276 = vmatmul.mubr.f32.gmra.mrb[0].mxu0 %v1065
        %v1277 = vpop.f32.mrb[0].mxu0
        %v1278 = vadd.f32 0.0, %v1277
        %v1279 = vpop.f32.mrb[0].mxu0
        %1280 = vmatprep.mubr.f32.mxu0 0.0
        %1281 = vmatmul.mubr.f32.gmra.mrb[0].mxu0 %v1068
        %v1282 = vpop.f32.mrb[0].mxu0
        %v1283 = vadd.f32 0.0, %v1282
        %v1284 = vpop.f32.mrb[0].mxu0
        %1285 = vmatprep.mubr.f32.mxu0 0.0
        %1286 = vmatmul.mubr.f32.gmra.mrb[0].mxu0 %v1073
        %v1287 = vpop.f32.mrb[0].mxu0
        %v1288 = vadd.f32 0.0, %v1287
        %v1289 = vpop.f32.mrb[0].mxu0
        %1290 = vmatprep.mubr.f32.mxu0 0.0
        %1291 = vmatmul.mubr.f32.gmra.mrb[0].mxu0 %v1076
        %v1292 = vpop.f32.mrb[0].mxu0
        %v1293 = vadd.f32 0.0, %v1292
        %v1294 = vpop.f32.mrb[0].mxu0
        %1295 = vmatprep.mubr.f32.mxu0 0.0
        %1296 = vmatmul.mubr.f32.gmra.mrb[0].mxu0 %v1081
        %v1297 = vpop.f32.mrb[0].mxu0
        %v1298 = vadd.f32 0.0, %v1297
        %v1299 = vpop.f32.mrb[0].mxu0
        %1300 = vmatprep.mubr.f32.mxu0 0.0
        %1301 = vmatmul.mubr.f32.gmra.mrb[0].mxu0 %v1084
        %v1302 = vpop.f32.mrb[0].mxu0
        %v1303 = vadd.f32 0.0, %v1302
        %v1304 = vpop.f32.mrb[0].mxu0
        %1305 = vmatprep.mubr.f32.mxu0 0.0
        %1306 = vmatmul.mubr.f32.gmra.mrb[0].mxu0 %v1089
        %v1307 = vpop.f32.mrb[0].mxu0
        %v1308 = vadd.f32 0.0, %v1307
        %v1309 = vpop.f32.mrb[0].mxu0
        %1310 = vmatprep.mubr.f32.mxu0 0.0
        %1311 = vmatmul.mubr.f32.gmra.mrb[0].mxu0 %v1092
        %v1312 = vpop.f32.mrb[0].mxu0
        %v1313 = vadd.f32 0.0, %v1312
        %v1314 = vpop.f32.mrb[0].mxu0
        %1315 = vmatprep.mubr.f32.mxu0 0.0
        %1316 = vmatmul.mubr.f32.gmra.mrb[0].mxu0 %v1097
        %v1317 = vpop.f32.mrb[0].mxu0
        %v1318 = vadd.f32 0.0, %v1317
        %v1319 = vpop.f32.mrb[0].mxu0
        %1320 = vmatprep.mubr.f32.mxu0 0.0
        %1321 = vmatmul.mubr.f32.gmra.mrb[0].mxu0 %v1100
        %v1322 = vpop.f32.mrb[0].mxu0
        %v1323 = vadd.f32 0.0, %v1322
        %v1324 = vpop.f32.mrb[0].mxu0
        %1325 = vmatprep.mubr.f32.mxu0 0.0
        %1326 = vmatmul.mubr.f32.gmra.mrb[0].mxu0 %v1105
        %v1327 = vpop.f32.mrb[0].mxu0
        %v1328 = vadd.f32 0.0, %v1327
        %v1329 = vpop.f32.mrb[0].mxu0
        %1330 = vmatprep.mubr.f32.mxu0 0.0
        %1331 = vmatmul.mubr.f32.gmra.mrb[0].mxu0 %v1108
        %v1332 = vpop.f32.mrb[0].mxu0
        %v1333 = vadd.f32 0.0, %v1332
        %v1334 = vpop.f32.mrb[0].mxu0
        %1335 = vdwg.mxu0
        %v1336 = vld [vmem:[%s563] sm:$0x1]
        %v1337 = vld [vmem:[%s566] sm:$0x1]
        %1338 = vadd.xlane.f32.xlu0 %v1178
        %v1339 = vpop.xlane.xlu0 %1338
        %1340 = vadd.xlane.f32.xlu0 %v1183
        %v1341 = vpop.xlane.xlu0 %1340
        %1342 = vadd.xlane.f32.xlu0 %v1188
        %v1343 = vpop.xlane.xlu0 %1342
        %1344 = vadd.xlane.f32.xlu0 %v1193
        %v1345 = vpop.xlane.xlu0 %1344
        %1346 = vadd.xlane.f32.xlu0 %v1198
        %v1347 = vpop.xlane.xlu0 %1346
        %1348 = vadd.xlane.f32.xlu0 %v1203
        %v1349 = vpop.xlane.xlu0 %1348
        %1350 = vadd.xlane.f32.xlu0 %v1208
        %v1351 = vpop.xlane.xlu0 %1350
        %1352 = vadd.xlane.f32.xlu0 %v1213
        %v1353 = vpop.xlane.xlu0 %1352
        %1354 = vadd.xlane.f32.xlu0 %v1218
        %v1355 = vpop.xlane.xlu0 %1354
        %1356 = vadd.xlane.f32.xlu0 %v1223
        %v1357 = vpop.xlane.xlu0 %1356
        %1358 = vadd.xlane.f32.xlu0 %v1228
        %v1359 = vpop.xlane.xlu0 %1358
        %1360 = vadd.xlane.f32.xlu0 %v1233
        %v1361 = vpop.xlane.xlu0 %1360
        %1362 = vadd.xlane.f32.xlu0 %v1238
        %v1363 = vpop.xlane.xlu0 %1362
        %1364 = vadd.xlane.f32.xlu0 %v1243
        %v1365 = vpop.xlane.xlu0 %1364
        %1366 = vadd.xlane.f32.xlu0 %v1248
        %v1367 = vpop.xlane.xlu0 %1366
        %1368 = vadd.xlane.f32.xlu0 %v1253
        %v1369 = vpop.xlane.xlu0 %1368
        %1370 = vadd.xlane.f32.xlu0 %v1258
        %v1371 = vpop.xlane.xlu0 %1370
        %1372 = vadd.xlane.f32.xlu0 %v1263
        %v1373 = vpop.xlane.xlu0 %1372
        %1374 = vadd.xlane.f32.xlu0 %v1268
        %v1375 = vpop.xlane.xlu0 %1374
        %1376 = vadd.xlane.f32.xlu0 %v1273
        %v1377 = vpop.xlane.xlu0 %1376
        %1378 = vadd.xlane.f32.xlu0 %v1278
        %v1379 = vpop.xlane.xlu0 %1378
        %1380 = vadd.xlane.f32.xlu0 %v1283
        %v1381 = vpop.xlane.xlu0 %1380
        %1382 = vadd.xlane.f32.xlu0 %v1288
        %v1383 = vpop.xlane.xlu0 %1382
        %1384 = vadd.xlane.f32.xlu0 %v1293
        %v1385 = vpop.xlane.xlu0 %1384
        %1386 = vadd.xlane.f32.xlu0 %v1298
        %v1387 = vpop.xlane.xlu0 %1386
        %1388 = vadd.xlane.f32.xlu0 %v1303
        %v1389 = vpop.xlane.xlu0 %1388
        %1390 = vadd.xlane.f32.xlu0 %v1308
        %v1391 = vpop.xlane.xlu0 %1390
        %1392 = vadd.xlane.f32.xlu0 %v1313
        %v1393 = vpop.xlane.xlu0 %1392
        %1394 = vadd.xlane.f32.xlu0 %v1318
        %v1395 = vpop.xlane.xlu0 %1394
        %1396 = vadd.xlane.f32.xlu0 %v1323
        %v1397 = vpop.xlane.xlu0 %1396
        %1398 = vadd.xlane.f32.xlu0 %v1328
        %v1399 = vpop.xlane.xlu0 %1398
        %1400 = vadd.xlane.f32.xlu0 %v1333
        %v1401 = vpop.xlane.xlu0 %1400
        %v1402 = vrcp.pop 128.0
        %v1403 = vmul.f32 %v1339, %v1402
        %v1404 = vmul.f32 %v1341, %v1402
        %v1405 = vmul.f32 %v1343, %v1402
        %v1406 = vmul.f32 %v1345, %v1402
        %v1407 = vmul.f32 %v1347, %v1402
        %v1408 = vmul.f32 %v1349, %v1402
        %v1409 = vmul.f32 %v1351, %v1402
        %v1410 = vmul.f32 %v1353, %v1402
        %v1411 = vmul.f32 %v1355, %v1402
        %v1412 = vmul.f32 %v1357, %v1402
        %v1413 = vmul.f32 %v1359, %v1402
        %v1414 = vmul.f32 %v1361, %v1402
        %v1415 = vmul.f32 %v1363, %v1402
        %v1416 = vmul.f32 %v1365, %v1402
        %v1417 = vmul.f32 %v1367, %v1402
        %v1418 = vmul.f32 %v1369, %v1402
        %v1419 = vmul.f32 %v1371, %v1402
        %v1420 = vmul.f32 %v1373, %v1402
        %v1421 = vmul.f32 %v1375, %v1402
        %v1422 = vmul.f32 %v1377, %v1402
        %v1423 = vmul.f32 %v1379, %v1402
        %v1424 = vmul.f32 %v1381, %v1402
        %v1425 = vmul.f32 %v1383, %v1402
        %v1426 = vmul.f32 %v1385, %v1402
        %v1427 = vmul.f32 %v1387, %v1402
        %v1428 = vmul.f32 %v1389, %v1402
        %v1429 = vmul.f32 %v1391, %v1402
        %v1430 = vmul.f32 %v1393, %v1402
        %v1431 = vmul.f32 %v1395, %v1402
        %v1432 = vmul.f32 %v1397, %v1402
        %v1433 = vmul.f32 %v1399, %v1402
        %v1434 = vmul.f32 %v1401, %v1402
        %v1435 = vsub.f32 %v1178, %v1403
        %v1436 = vsub.f32 %v1183, %v1404
        %v1437 = vsub.f32 %v1188, %v1405
        %v1438 = vsub.f32 %v1193, %v1406
        %v1439 = vsub.f32 %v1198, %v1407
        %v1440 = vsub.f32 %v1203, %v1408
        %v1441 = vsub.f32 %v1208, %v1409
        %v1442 = vsub.f32 %v1213, %v1410
        %v1443 = vsub.f32 %v1218, %v1411
        %v1444 = vsub.f32 %v1223, %v1412
        %v1445 = vsub.f32 %v1228, %v1413
        %v1446 = vsub.f32 %v1233, %v1414
        %v1447 = vsub.f32 %v1238, %v1415
        %v1448 = vsub.f32 %v1243, %v1416
        %v1449 = vsub.f32 %v1248, %v1417
        %v1450 = vsub.f32 %v1253, %v1418
        %v1451 = vsub.f32 %v1258, %v1419
        %v1452 = vsub.f32 %v1263, %v1420
        %v1453 = vsub.f32 %v1268, %v1421
        %v1454 = vsub.f32 %v1273, %v1422
        %v1455 = vsub.f32 %v1278, %v1423
        %v1456 = vsub.f32 %v1283, %v1424
        %v1457 = vsub.f32 %v1288, %v1425
        %v1458 = vsub.f32 %v1293, %v1426
        %v1459 = vsub.f32 %v1298, %v1427
        %v1460 = vsub.f32 %v1303, %v1428
        %v1461 = vsub.f32 %v1308, %v1429
        %v1462 = vsub.f32 %v1313, %v1430
        %v1463 = vsub.f32 %v1318, %v1431
        %v1464 = vsub.f32 %v1323, %v1432
        %v1465 = vsub.f32 %v1328, %v1433
        %v1466 = vsub.f32 %v1333, %v1434
        %v1467 = vmul.f32 %v1435, %v1435
        %v1468 = vmul.f32 %v1436, %v1436
        %v1469 = vmul.f32 %v1437, %v1437
        %v1470 = vmul.f32 %v1438, %v1438
        %v1471 = vmul.f32 %v1439, %v1439
        %v1472 = vmul.f32 %v1440, %v1440
        %v1473 = vmul.f32 %v1441, %v1441
        %v1474 = vmul.f32 %v1442, %v1442
        %v1475 = vmul.f32 %v1443, %v1443
        %v1476 = vmul.f32 %v1444, %v1444
        %v1477 = vmul.f32 %v1445, %v1445
        %v1478 = vmul.f32 %v1446, %v1446
        %v1479 = vmul.f32 %v1447, %v1447
        %v1480 = vmul.f32 %v1448, %v1448
        %v1481 = vmul.f32 %v1449, %v1449
        %v1482 = vmul.f32 %v1450, %v1450
        %v1483 = vmul.f32 %v1451, %v1451
        %v1484 = vmul.f32 %v1452, %v1452
        %v1485 = vmul.f32 %v1453, %v1453
        %v1486 = vmul.f32 %v1454, %v1454
        %v1487 = vmul.f32 %v1455, %v1455
        %v1488 = vmul.f32 %v1456, %v1456
        %v1489 = vmul.f32 %v1457, %v1457
        %v1490 = vmul.f32 %v1458, %v1458
        %v1491 = vmul.f32 %v1459, %v1459
        %v1492 = vmul.f32 %v1460, %v1460
        %v1493 = vmul.f32 %v1461, %v1461
        %v1494 = vmul.f32 %v1462, %v1462
        %v1495 = vmul.f32 %v1463, %v1463
        %v1496 = vmul.f32 %v1464, %v1464
        %v1497 = vmul.f32 %v1465, %v1465
        %v1498 = vmul.f32 %v1466, %v1466
        %1499 = vadd.xlane.f32.xlu0 %v1467
        %v1500 = vpop.xlane.xlu0 %1499
        %1501 = vadd.xlane.f32.xlu0 %v1468
        %v1502 = vpop.xlane.xlu0 %1501
        %1503 = vadd.xlane.f32.xlu0 %v1469
        %v1504 = vpop.xlane.xlu0 %1503
        %1505 = vadd.xlane.f32.xlu0 %v1470
        %v1506 = vpop.xlane.xlu0 %1505
        %1507 = vadd.xlane.f32.xlu0 %v1471
        %v1508 = vpop.xlane.xlu0 %1507
        %1509 = vadd.xlane.f32.xlu0 %v1472
        %v1510 = vpop.xlane.xlu0 %1509
        %1511 = vadd.xlane.f32.xlu0 %v1473
        %v1512 = vpop.xlane.xlu0 %1511
        %1513 = vadd.xlane.f32.xlu0 %v1474
        %v1514 = vpop.xlane.xlu0 %1513
        %1515 = vadd.xlane.f32.xlu0 %v1475
        %v1516 = vpop.xlane.xlu0 %1515
        %1517 = vadd.xlane.f32.xlu0 %v1476
        %v1518 = vpop.xlane.xlu0 %1517
        %1519 = vadd.xlane.f32.xlu0 %v1477
        %v1520 = vpop.xlane.xlu0 %1519
        %1521 = vadd.xlane.f32.xlu0 %v1478
        %v1522 = vpop.xlane.xlu0 %1521
        %1523 = vadd.xlane.f32.xlu0 %v1479
        %v1524 = vpop.xlane.xlu0 %1523
        %1525 = vadd.xlane.f32.xlu0 %v1480
        %v1526 = vpop.xlane.xlu0 %1525
        %1527 = vadd.xlane.f32.xlu0 %v1481
        %v1528 = vpop.xlane.xlu0 %1527
        %1529 = vadd.xlane.f32.xlu0 %v1482
        %v1530 = vpop.xlane.xlu0 %1529
        %1531 = vadd.xlane.f32.xlu0 %v1483
        %v1532 = vpop.xlane.xlu0 %1531
        %1533 = vadd.xlane.f32.xlu0 %v1484
        %v1534 = vpop.xlane.xlu0 %1533
        %1535 = vadd.xlane.f32.xlu0 %v1485
        %v1536 = vpop.xlane.xlu0 %1535
        %1537 = vadd.xlane.f32.xlu0 %v1486
        %v1538 = vpop.xlane.xlu0 %1537
        %1539 = vadd.xlane.f32.xlu0 %v1487
        %v1540 = vpop.xlane.xlu0 %1539
        %1541 = vadd.xlane.f32.xlu0 %v1488
        %v1542 = vpop.xlane.xlu0 %1541
        %1543 = vadd.xlane.f32.xlu0 %v1489
        %v1544 = vpop.xlane.xlu0 %1543
        %1545 = vadd.xlane.f32.xlu0 %v1490
        %v1546 = vpop.xlane.xlu0 %1545
        %1547 = vadd.xlane.f32.xlu0 %v1491
        %v1548 = vpop.xlane.xlu0 %1547
        %1549 = vadd.xlane.f32.xlu0 %v1492
        %v1550 = vpop.xlane.xlu0 %1549
        %1551 = vadd.xlane.f32.xlu0 %v1493
        %v1552 = vpop.xlane.xlu0 %1551
        %1553 = vadd.xlane.f32.xlu0 %v1494
        %v1554 = vpop.xlane.xlu0 %1553
        %1555 = vadd.xlane.f32.xlu0 %v1495
        %v1556 = vpop.xlane.xlu0 %1555
        %1557 = vadd.xlane.f32.xlu0 %v1496
        %v1558 = vpop.xlane.xlu0 %1557
        %1559 = vadd.xlane.f32.xlu0 %v1497
        %v1560 = vpop.xlane.xlu0 %1559
        %1561 = vadd.xlane.f32.xlu0 %v1498
        %v1562 = vpop.xlane.xlu0 %1561
        %v1563 = vmul.f32 %v1500, %v1402
        %v1564 = vmul.f32 %v1502, %v1402
        %v1565 = vmul.f32 %v1504, %v1402
        %v1566 = vmul.f32 %v1506, %v1402
        %v1567 = vmul.f32 %v1508, %v1402
        %v1568 = vmul.f32 %v1510, %v1402
        %v1569 = vmul.f32 %v1512, %v1402
        %v1570 = vmul.f32 %v1514, %v1402
        %v1571 = vmul.f32 %v1516, %v1402
        %v1572 = vmul.f32 %v1518, %v1402
        %v1573 = vmul.f32 %v1520, %v1402
        %v1574 = vmul.f32 %v1522, %v1402
        %v1575 = vmul.f32 %v1524, %v1402
        %v1576 = vmul.f32 %v1526, %v1402
        %v1577 = vmul.f32 %v1528, %v1402
        %v1578 = vmul.f32 %v1530, %v1402
        %v1579 = vmul.f32 %v1532, %v1402
        %v1580 = vmul.f32 %v1534, %v1402
        %v1581 = vmul.f32 %v1536, %v1402
        %v1582 = vmul.f32 %v1538, %v1402
        %v1583 = vmul.f32 %v1540, %v1402
        %v1584 = vmul.f32 %v1542, %v1402
        %v1585 = vmul.f32 %v1544, %v1402
        %v1586 = vmul.f32 %v1546, %v1402
        %v1587 = vmul.f32 %v1548, %v1402
        %v1588 = vmul.f32 %v1550, %v1402
        %v1589 = vmul.f32 %v1552, %v1402
        %v1590 = vmul.f32 %v1554, %v1402
        %v1591 = vmul.f32 %v1556, %v1402
        %v1592 = vmul.f32 %v1558, %v1402
        %v1593 = vmul.f32 %v1560, %v1402
        %v1594 = vmul.f32 %v1562, %v1402
        %v1595 = vadd.f32 %v1563, 1e-05
        %v1596 = vadd.f32 %v1564, 1e-05
        %v1597 = vadd.f32 %v1565, 1e-05
        %v1598 = vadd.f32 %v1566, 1e-05
        %v1599 = vadd.f32 %v1567, 1e-05
        %v1600 = vadd.f32 %v1568, 1e-05
        %v1601 = vadd.f32 %v1569, 1e-05
        %v1602 = vadd.f32 %v1570, 1e-05
        %v1603 = vadd.f32 %v1571, 1e-05
        %v1604 = vadd.f32 %v1572, 1e-05
        %v1605 = vadd.f32 %v1573, 1e-05
        %v1606 = vadd.f32 %v1574, 1e-05
        %v1607 = vadd.f32 %v1575, 1e-05
        %v1608 = vadd.f32 %v1576, 1e-05
        %v1609 = vadd.f32 %v1577, 1e-05
        %v1610 = vadd.f32 %v1578, 1e-05
        %v1611 = vadd.f32 %v1579, 1e-05
        %v1612 = vadd.f32 %v1580, 1e-05
        %v1613 = vadd.f32 %v1581, 1e-05
        %v1614 = vadd.f32 %v1582, 1e-05
        %v1615 = vadd.f32 %v1583, 1e-05
        %v1616 = vadd.f32 %v1584, 1e-05
        %v1617 = vadd.f32 %v1585, 1e-05
        %v1618 = vadd.f32 %v1586, 1e-05
        %v1619 = vadd.f32 %v1587, 1e-05
        %v1620 = vadd.f32 %v1588, 1e-05
        %v1621 = vadd.f32 %v1589, 1e-05
        %v1622 = vadd.f32 %v1590, 1e-05
        %v1623 = vadd.f32 %v1591, 1e-05
        %v1624 = vadd.f32 %v1592, 1e-05
        %v1625 = vadd.f32 %v1593, 1e-05
        %v1626 = vadd.f32 %v1594, 1e-05
        %v1627 = vrsqrt.pop %v1595
        %v1628 = vrsqrt.pop %v1596
        %v1629 = vrsqrt.pop %v1597
        %v1630 = vrsqrt.pop %v1598
        %v1631 = vrsqrt.pop %v1599
        %v1632 = vrsqrt.pop %v1600
        %v1633 = vrsqrt.pop %v1601
        %v1634 = vrsqrt.pop %v1602
        %v1635 = vrsqrt.pop %v1603
        %v1636 = vrsqrt.pop %v1604
        %v1637 = vrsqrt.pop %v1605
        %v1638 = vrsqrt.pop %v1606
        %v1639 = vrsqrt.pop %v1607
        %v1640 = vrsqrt.pop %v1608
        %v1641 = vrsqrt.pop %v1609
        %v1642 = vrsqrt.pop %v1610
        %v1643 = vrsqrt.pop %v1611
        %v1644 = vrsqrt.pop %v1612
        %v1645 = vrsqrt.pop %v1613
        %v1646 = vrsqrt.pop %v1614
        %v1647 = vrsqrt.pop %v1615
        %v1648 = vrsqrt.pop %v1616
        %v1649 = vrsqrt.pop %v1617
        %v1650 = vrsqrt.pop %v1618
        %v1651 = vrsqrt.pop %v1619
        %v1652 = vrsqrt.pop %v1620
        %v1653 = vrsqrt.pop %v1621
        %v1654 = vrsqrt.pop %v1622
        %v1655 = vrsqrt.pop %v1623
        %v1656 = vrsqrt.pop %v1624
        %v1657 = vrsqrt.pop %v1625
        %v1658 = vrsqrt.pop %v1626
        %v1659 = vmul.f32 %v1435, %v1627
        %v1660 = vmul.f32 %v1436, %v1628
        %v1661 = vmul.f32 %v1437, %v1629
        %v1662 = vmul.f32 %v1438, %v1630
        %v1663 = vmul.f32 %v1439, %v1631
        %v1664 = vmul.f32 %v1440, %v1632
        %v1665 = vmul.f32 %v1441, %v1633
        %v1666 = vmul.f32 %v1442, %v1634
        %v1667 = vmul.f32 %v1443, %v1635
        %v1668 = vmul.f32 %v1444, %v1636
        %v1669 = vmul.f32 %v1445, %v1637
        %v1670 = vmul.f32 %v1446, %v1638
        %v1671 = vmul.f32 %v1447, %v1639
        %v1672 = vmul.f32 %v1448, %v1640
        %v1673 = vmul.f32 %v1449, %v1641
        %v1674 = vmul.f32 %v1450, %v1642
        %v1675 = vmul.f32 %v1451, %v1643
        %v1676 = vmul.f32 %v1452, %v1644
        %v1677 = vmul.f32 %v1453, %v1645
        %v1678 = vmul.f32 %v1454, %v1646
        %v1679 = vmul.f32 %v1455, %v1647
        %v1680 = vmul.f32 %v1456, %v1648
        %v1681 = vmul.f32 %v1457, %v1649
        %v1682 = vmul.f32 %v1458, %v1650
        %v1683 = vmul.f32 %v1459, %v1651
        %v1684 = vmul.f32 %v1460, %v1652
        %v1685 = vmul.f32 %v1461, %v1653
        %v1686 = vmul.f32 %v1462, %v1654
        %v1687 = vmul.f32 %v1463, %v1655
        %v1688 = vmul.f32 %v1464, %v1656
        %v1689 = vmul.f32 %v1465, %v1657
        %v1690 = vmul.f32 %v1466, %v1658
        %v1692 = vlaneseq
        %v1693 = vshrl.u32 %v1692, 7
        %v1694 = vsub.s32 0, %v1693
        %v1695 = vrot.slane %v1336, %v1694
        %v1697 = vmul.f32 %v1659, %v1695
        %v1698 = vmul.f32 %v1660, %v1695
        %v1699 = vmul.f32 %v1661, %v1695
        %v1700 = vmul.f32 %v1662, %v1695
        %v1701 = vmul.f32 %v1663, %v1695
        %v1702 = vmul.f32 %v1664, %v1695
        %v1703 = vmul.f32 %v1665, %v1695
        %v1704 = vmul.f32 %v1666, %v1695
        %v1705 = vmul.f32 %v1667, %v1695
        %v1706 = vmul.f32 %v1668, %v1695
        %v1707 = vmul.f32 %v1669, %v1695
        %v1708 = vmul.f32 %v1670, %v1695
        %v1709 = vmul.f32 %v1671, %v1695
        %v1710 = vmul.f32 %v1672, %v1695
        %v1711 = vmul.f32 %v1673, %v1695
        %v1712 = vmul.f32 %v1674, %v1695
        %v1713 = vmul.f32 %v1675, %v1695
        %v1714 = vmul.f32 %v1676, %v1695
        %v1715 = vmul.f32 %v1677, %v1695
        %v1716 = vmul.f32 %v1678, %v1695
        %v1717 = vmul.f32 %v1679, %v1695
        %v1718 = vmul.f32 %v1680, %v1695
        %v1719 = vmul.f32 %v1681, %v1695
        %v1720 = vmul.f32 %v1682, %v1695
        %v1721 = vmul.f32 %v1683, %v1695
        %v1722 = vmul.f32 %v1684, %v1695
        %v1723 = vmul.f32 %v1685, %v1695
        %v1724 = vmul.f32 %v1686, %v1695
        %v1725 = vmul.f32 %v1687, %v1695
        %v1726 = vmul.f32 %v1688, %v1695
        %v1727 = vmul.f32 %v1689, %v1695
        %v1728 = vmul.f32 %v1690, %v1695
        %v1730 = vlaneseq
        %v1731 = vshrl.u32 %v1730, 7
        %v1732 = vsub.s32 0, %v1731
        %v1733 = vrot.slane %v1337, %v1732
        %v1735 = vadd.f32 %v1697, %v1733
        %v1736 = vadd.f32 %v1698, %v1733
        %v1737 = vadd.f32 %v1699, %v1733
        %v1738 = vadd.f32 %v1700, %v1733
        %v1739 = vadd.f32 %v1701, %v1733
        %v1740 = vadd.f32 %v1702, %v1733
        %v1741 = vadd.f32 %v1703, %v1733
        %v1742 = vadd.f32 %v1704, %v1733
        %v1743 = vadd.f32 %v1705, %v1733
        %v1744 = vadd.f32 %v1706, %v1733
        %v1745 = vadd.f32 %v1707, %v1733
        %v1746 = vadd.f32 %v1708, %v1733
        %v1747 = vadd.f32 %v1709, %v1733
        %v1748 = vadd.f32 %v1710, %v1733
        %v1749 = vadd.f32 %v1711, %v1733
        %v1750 = vadd.f32 %v1712, %v1733
        %v1751 = vadd.f32 %v1713, %v1733
        %v1752 = vadd.f32 %v1714, %v1733
        %v1753 = vadd.f32 %v1715, %v1733
        %v1754 = vadd.f32 %v1716, %v1733
        %v1755 = vadd.f32 %v1717, %v1733
        %v1756 = vadd.f32 %v1718, %v1733
        %v1757 = vadd.f32 %v1719, %v1733
        %v1758 = vadd.f32 %v1720, %v1733
        %v1759 = vadd.f32 %v1721, %v1733
        %v1760 = vadd.f32 %v1722, %v1733
        %v1761 = vadd.f32 %v1723, %v1733
        %v1762 = vadd.f32 %v1724, %v1733
        %v1763 = vadd.f32 %v1725, %v1733
        %v1764 = vadd.f32 %v1726, %v1733
        %v1765 = vadd.f32 %v1727, %v1733
        %v1766 = vadd.f32 %v1728, %v1733
        %v1767 = vpack.c.bf16 %v1736, %v1735
        %v1768 = vpack.c.bf16 %v1738, %v1737
        %v1769 = vpack.c.bf16 %v1740, %v1739
        %v1770 = vpack.c.bf16 %v1742, %v1741
        %v1771 = vpack.c.bf16 %v1744, %v1743
        %v1772 = vpack.c.bf16 %v1746, %v1745
        %v1773 = vpack.c.bf16 %v1748, %v1747
        %v1774 = vpack.c.bf16 %v1750, %v1749
        %v1775 = vpack.c.bf16 %v1752, %v1751
        %v1776 = vpack.c.bf16 %v1754, %v1753
        %v1777 = vpack.c.bf16 %v1756, %v1755
        %v1778 = vpack.c.bf16 %v1758, %v1757
        %v1779 = vpack.c.bf16 %v1760, %v1759
        %v1780 = vpack.c.bf16 %v1762, %v1761
        %v1781 = vpack.c.bf16 %v1764, %v1763
        %v1782 = vpack.c.bf16 %v1766, %v1765
        %v1799 = vunpack.c.l.b16 %v830
        %v1800 = vunpack.c.h.b16 %v830
        %v1801 = vunpack.c.l.b16 %v831
        %v1802 = vunpack.c.h.b16 %v831
        %v1803 = vunpack.c.l.b16 %v832
        %v1804 = vunpack.c.h.b16 %v832
        %v1805 = vunpack.c.l.b16 %v833
        %v1806 = vunpack.c.h.b16 %v833
        %v1807 = vunpack.c.l.b16 %v834
        %v1808 = vunpack.c.h.b16 %v834
        %v1809 = vunpack.c.l.b16 %v835
        %v1810 = vunpack.c.h.b16 %v835
        %v1811 = vunpack.c.l.b16 %v836
        %v1812 = vunpack.c.h.b16 %v836
        %v1813 = vunpack.c.l.b16 %v837
        %v1814 = vunpack.c.h.b16 %v837
        %v1815 = vunpack.c.l.b16 %v838
        %v1816 = vunpack.c.h.b16 %v838
        %v1817 = vunpack.c.l.b16 %v839
        %v1818 = vunpack.c.h.b16 %v839
        %v1819 = vunpack.c.l.b16 %v840
        %v1820 = vunpack.c.h.b16 %v840
        %v1821 = vunpack.c.l.b16 %v841
        %v1822 = vunpack.c.h.b16 %v841
        %v1823 = vunpack.c.l.b16 %v842
        %v1824 = vunpack.c.h.b16 %v842
        %v1825 = vunpack.c.l.b16 %v843
        %v1826 = vunpack.c.h.b16 %v843
        %v1827 = vunpack.c.l.b16 %v844
        %v1828 = vunpack.c.h.b16 %v844
        %v1829 = vunpack.c.l.b16 %v845
        %v1830 = vunpack.c.h.b16 %v845
        %v1831 = vpack.c.b16 %v1801, %v1799
        %v1832 = vpack.c.b16 %v1802, %v1800
        %v1833 = vpack.c.b16 %v1805, %v1803
        %v1834 = vpack.c.b16 %v1806, %v1804
        %v1835 = vpack.c.b16 %v1809, %v1807
        %v1836 = vpack.c.b16 %v1810, %v1808
        %v1837 = vpack.c.b16 %v1813, %v1811
        %v1838 = vpack.c.b16 %v1814, %v1812
        %v1839 = vpack.c.b16 %v1817, %v1815
        %v1840 = vpack.c.b16 %v1818, %v1816
        %v1841 = vpack.c.b16 %v1821, %v1819
        %v1842 = vpack.c.b16 %v1822, %v1820
        %v1843 = vpack.c.b16 %v1825, %v1823
        %v1844 = vpack.c.b16 %v1826, %v1824
        %v1845 = vpack.c.b16 %v1829, %v1827
        %v1846 = vpack.c.b16 %v1830, %v1828
        %1863 = vmatprep.subr.bf16.mxu0 0
        %1864 = vmatpush1.bf16.msra.mxu0 %v1767
        %1865 = vmatprep.subr.bf16.mxu0 0
        %1866 = vmatpush1.bf16.msra.mxu0 %v1768
        %1867 = vmatprep.subr.bf16.mxu0 0
        %1868 = vmatpush1.bf16.msra.mxu0 %v1769
        %1869 = vmatprep.subr.bf16.mxu0 0
        %1870 = vmatpush1.bf16.msra.mxu0 %v1770
        %1871 = vmatprep.subr.bf16.mxu0 0
        %1872 = vmatpush1.bf16.msra.mxu0 %v1771
        %1873 = vmatprep.subr.bf16.mxu0 0
        %1874 = vmatpush1.bf16.msra.mxu0 %v1772
        %1875 = vmatprep.subr.bf16.mxu0 0
        %1876 = vmatpush1.bf16.msra.mxu0 %v1773
        %1877 = vmatprep.subr.bf16.mxu0 0
        %1878 = vmatpush1.bf16.msra.mxu0 %v1774
        %1879 = vmatprep.subr.bf16.mxu0 0
        %1880 = vmatpush1.bf16.msra.mxu0 %v1775
        %1881 = vmatprep.subr.bf16.mxu0 0
        %1882 = vmatpush1.bf16.msra.mxu0 %v1776
        %1883 = vmatprep.subr.bf16.mxu0 0
        %1884 = vmatpush1.bf16.msra.mxu0 %v1777
        %1885 = vmatprep.subr.bf16.mxu0 0
        %1886 = vmatpush1.bf16.msra.mxu0 %v1778
        %1887 = vmatprep.subr.bf16.mxu0 0
        %1888 = vmatpush1.bf16.msra.mxu0 %v1779
        %1889 = vmatprep.subr.bf16.mxu0 0
        %1890 = vmatpush1.bf16.msra.mxu0 %v1780
        %1891 = vmatprep.subr.bf16.mxu0 0
        %1892 = vmatpush1.bf16.msra.mxu0 %v1781
        %1893 = vmatprep.subr.bf16.mxu0 0
        %1894 = vmatpush1.bf16.msra.mxu0 %v1782
        %1895 = vmatprep.mubr.bf16.mxu0 %v1832
        %1896 = vmatmul.mubr.bf16.gmra.mrb[0].mxu0 %v1831
        %v1897 = vpop.f32.mrb[0].mxu0
        %v1898 = vadd.f32 0.0, %v1897
        %v1899 = vpop.f32.mrb[0].mxu0
        %v1900 = vpop.f32.mrb[0].mxu0
        %v1901 = vadd.f32 0.0, %v1900
        %v1902 = vpop.f32.mrb[0].mxu0
        %1903 = vmatprep.mubr.bf16.mxu0 %v1834
        %1904 = vmatmul.mubr.bf16.gmra.mrb[0].mxu0 %v1833
        %v1905 = vpop.f32.mrb[0].mxu0
        %v1906 = vadd.f32 0.0, %v1905
        %v1907 = vpop.f32.mrb[0].mxu0
        %v1908 = vpop.f32.mrb[0].mxu0
        %v1909 = vadd.f32 0.0, %v1908
        %v1910 = vpop.f32.mrb[0].mxu0
        %1911 = vmatprep.mubr.bf16.mxu0 %v1836
        %1912 = vmatmul.mubr.bf16.gmra.mrb[0].mxu0 %v1835
        %v1913 = vpop.f32.mrb[0].mxu0
        %v1914 = vadd.f32 0.0, %v1913
        %v1915 = vpop.f32.mrb[0].mxu0
        %v1916 = vpop.f32.mrb[0].mxu0
        %v1917 = vadd.f32 0.0, %v1916
        %v1918 = vpop.f32.mrb[0].mxu0
        %1919 = vmatprep.mubr.bf16.mxu0 %v1838
        %1920 = vmatmul.mubr.bf16.gmra.mrb[0].mxu0 %v1837
        %v1921 = vpop.f32.mrb[0].mxu0
        %v1922 = vadd.f32 0.0, %v1921
        %v1923 = vpop.f32.mrb[0].mxu0
        %v1924 = vpop.f32.mrb[0].mxu0
        %v1925 = vadd.f32 0.0, %v1924
        %v1926 = vpop.f32.mrb[0].mxu0
        %1927 = vmatprep.mubr.bf16.mxu0 %v1840
        %1928 = vmatmul.mubr.bf16.gmra.mrb[0].mxu0 %v1839
        %v1929 = vpop.f32.mrb[0].mxu0
        %v1930 = vadd.f32 0.0, %v1929
        %v1931 = vpop.f32.mrb[0].mxu0
        %v1932 = vpop.f32.mrb[0].mxu0
        %v1933 = vadd.f32 0.0, %v1932
        %v1934 = vpop.f32.mrb[0].mxu0
        %1935 = vmatprep.mubr.bf16.mxu0 %v1842
        %1936 = vmatmul.mubr.bf16.gmra.mrb[0].mxu0 %v1841
        %v1937 = vpop.f32.mrb[0].mxu0
        %v1938 = vadd.f32 0.0, %v1937
        %v1939 = vpop.f32.mrb[0].mxu0
        %v1940 = vpop.f32.mrb[0].mxu0
        %v1941 = vadd.f32 0.0, %v1940
        %v1942 = vpop.f32.mrb[0].mxu0
        %1943 = vmatprep.mubr.bf16.mxu0 %v1844
        %1944 = vmatmul.mubr.bf16.gmra.mrb[0].mxu0 %v1843
        %v1945 = vpop.f32.mrb[0].mxu0
        %v1946 = vadd.f32 0.0, %v1945
        %v1947 = vpop.f32.mrb[0].mxu0
        %v1948 = vpop.f32.mrb[0].mxu0
        %v1949 = vadd.f32 0.0, %v1948
        %v1950 = vpop.f32.mrb[0].mxu0
        %1951 = vmatprep.mubr.bf16.mxu0 %v1846
        %1952 = vmatmul.mubr.bf16.gmra.mrb[0].mxu0 %v1845
        %v1953 = vpop.f32.mrb[0].mxu0
        %v1954 = vadd.f32 0.0, %v1953
        %v1955 = vpop.f32.mrb[0].mxu0
        %v1956 = vpop.f32.mrb[0].mxu0
        %v1957 = vadd.f32 0.0, %v1956
        %v1958 = vpop.f32.mrb[0].mxu0
        %1959 = vdwg.mxu0
        %v1960 = vld [vmem:[%s569] sm:$0x1]
        %v1961 = vld [vmem:[%s572] sm:$0x1]
        %1962 = vadd.xlane.f32.xlu0 %v1898
        %v1963 = vpop.xlane.xlu0 %1962
        %1964 = vadd.xlane.f32.xlu0 %v1901
        %v1965 = vpop.xlane.xlu0 %1964
        %1966 = vadd.xlane.f32.xlu0 %v1906
        %v1967 = vpop.xlane.xlu0 %1966
        %1968 = vadd.xlane.f32.xlu0 %v1909
        %v1969 = vpop.xlane.xlu0 %1968
        %1970 = vadd.xlane.f32.xlu0 %v1914
        %v1971 = vpop.xlane.xlu0 %1970
        %1972 = vadd.xlane.f32.xlu0 %v1917
        %v1973 = vpop.xlane.xlu0 %1972
        %1974 = vadd.xlane.f32.xlu0 %v1922
        %v1975 = vpop.xlane.xlu0 %1974
        %1976 = vadd.xlane.f32.xlu0 %v1925
        %v1977 = vpop.xlane.xlu0 %1976
        %1978 = vadd.xlane.f32.xlu0 %v1930
        %v1979 = vpop.xlane.xlu0 %1978
        %1980 = vadd.xlane.f32.xlu0 %v1933
        %v1981 = vpop.xlane.xlu0 %1980
        %1982 = vadd.xlane.f32.xlu0 %v1938
        %v1983 = vpop.xlane.xlu0 %1982
        %1984 = vadd.xlane.f32.xlu0 %v1941
        %v1985 = vpop.xlane.xlu0 %1984
        %1986 = vadd.xlane.f32.xlu0 %v1946
        %v1987 = vpop.xlane.xlu0 %1986
        %1988 = vadd.xlane.f32.xlu0 %v1949
        %v1989 = vpop.xlane.xlu0 %1988
        %1990 = vadd.xlane.f32.xlu0 %v1954
        %v1991 = vpop.xlane.xlu0 %1990
        %1992 = vadd.xlane.f32.xlu0 %v1957
        %v1993 = vpop.xlane.xlu0 %1992
        %v1994 = vmul.f32 %v1963, %v1402
        %v1995 = vmul.f32 %v1965, %v1402
        %v1996 = vmul.f32 %v1967, %v1402
        %v1997 = vmul.f32 %v1969, %v1402
        %v1998 = vmul.f32 %v1971, %v1402
        %v1999 = vmul.f32 %v1973, %v1402
        %v2000 = vmul.f32 %v1975, %v1402
        %v2001 = vmul.f32 %v1977, %v1402
        %v2002 = vmul.f32 %v1979, %v1402
        %v2003 = vmul.f32 %v1981, %v1402
        %v2004 = vmul.f32 %v1983, %v1402
        %v2005 = vmul.f32 %v1985, %v1402
        %v2006 = vmul.f32 %v1987, %v1402
        %v2007 = vmul.f32 %v1989, %v1402
        %v2008 = vmul.f32 %v1991, %v1402
        %v2009 = vmul.f32 %v1993, %v1402
        %v2010 = vsub.f32 %v1898, %v1994
        %v2011 = vsub.f32 %v1901, %v1995
        %v2012 = vsub.f32 %v1906, %v1996
        %v2013 = vsub.f32 %v1909, %v1997
        %v2014 = vsub.f32 %v1914, %v1998
        %v2015 = vsub.f32 %v1917, %v1999
        %v2016 = vsub.f32 %v1922, %v2000
        %v2017 = vsub.f32 %v1925, %v2001
        %v2018 = vsub.f32 %v1930, %v2002
        %v2019 = vsub.f32 %v1933, %v2003
        %v2020 = vsub.f32 %v1938, %v2004
        %v2021 = vsub.f32 %v1941, %v2005
        %v2022 = vsub.f32 %v1946, %v2006
        %v2023 = vsub.f32 %v1949, %v2007
        %v2024 = vsub.f32 %v1954, %v2008
        %v2025 = vsub.f32 %v1957, %v2009
        %v2026 = vmul.f32 %v2010, %v2010
        %v2027 = vmul.f32 %v2011, %v2011
        %v2028 = vmul.f32 %v2012, %v2012
        %v2029 = vmul.f32 %v2013, %v2013
        %v2030 = vmul.f32 %v2014, %v2014
        %v2031 = vmul.f32 %v2015, %v2015
        %v2032 = vmul.f32 %v2016, %v2016
        %v2033 = vmul.f32 %v2017, %v2017
        %v2034 = vmul.f32 %v2018, %v2018
        %v2035 = vmul.f32 %v2019, %v2019
        %v2036 = vmul.f32 %v2020, %v2020
        %v2037 = vmul.f32 %v2021, %v2021
        %v2038 = vmul.f32 %v2022, %v2022
        %v2039 = vmul.f32 %v2023, %v2023
        %v2040 = vmul.f32 %v2024, %v2024
        %v2041 = vmul.f32 %v2025, %v2025
        %2042 = vadd.xlane.f32.xlu0 %v2026
        %v2043 = vpop.xlane.xlu0 %2042
        %2044 = vadd.xlane.f32.xlu0 %v2027
        %v2045 = vpop.xlane.xlu0 %2044
        %2046 = vadd.xlane.f32.xlu0 %v2028
        %v2047 = vpop.xlane.xlu0 %2046
        %2048 = vadd.xlane.f32.xlu0 %v2029
        %v2049 = vpop.xlane.xlu0 %2048
        %2050 = vadd.xlane.f32.xlu0 %v2030
        %v2051 = vpop.xlane.xlu0 %2050
        %2052 = vadd.xlane.f32.xlu0 %v2031
        %v2053 = vpop.xlane.xlu0 %2052
        %2054 = vadd.xlane.f32.xlu0 %v2032
        %v2055 = vpop.xlane.xlu0 %2054
        %2056 = vadd.xlane.f32.xlu0 %v2033
        %v2057 = vpop.xlane.xlu0 %2056
        %2058 = vadd.xlane.f32.xlu0 %v2034
        %v2059 = vpop.xlane.xlu0 %2058
        %2060 = vadd.xlane.f32.xlu0 %v2035
        %v2061 = vpop.xlane.xlu0 %2060
        %2062 = vadd.xlane.f32.xlu0 %v2036
        %v2063 = vpop.xlane.xlu0 %2062
        %2064 = vadd.xlane.f32.xlu0 %v2037
        %v2065 = vpop.xlane.xlu0 %2064
        %2066 = vadd.xlane.f32.xlu0 %v2038
        %v2067 = vpop.xlane.xlu0 %2066
        %2068 = vadd.xlane.f32.xlu0 %v2039
        %v2069 = vpop.xlane.xlu0 %2068
        %2070 = vadd.xlane.f32.xlu0 %v2040
        %v2071 = vpop.xlane.xlu0 %2070
        %2072 = vadd.xlane.f32.xlu0 %v2041
        %v2073 = vpop.xlane.xlu0 %2072
        %v2074 = vmul.f32 %v2043, %v1402
        %v2075 = vmul.f32 %v2045, %v1402
        %v2076 = vmul.f32 %v2047, %v1402
        %v2077 = vmul.f32 %v2049, %v1402
        %v2078 = vmul.f32 %v2051, %v1402
        %v2079 = vmul.f32 %v2053, %v1402
        %v2080 = vmul.f32 %v2055, %v1402
        %v2081 = vmul.f32 %v2057, %v1402
        %v2082 = vmul.f32 %v2059, %v1402
        %v2083 = vmul.f32 %v2061, %v1402
        %v2084 = vmul.f32 %v2063, %v1402
        %v2085 = vmul.f32 %v2065, %v1402
        %v2086 = vmul.f32 %v2067, %v1402
        %v2087 = vmul.f32 %v2069, %v1402
        %v2088 = vmul.f32 %v2071, %v1402
        %v2089 = vmul.f32 %v2073, %v1402
        %v2090 = vadd.f32 %v2074, 1e-05
        %v2091 = vadd.f32 %v2075, 1e-05
        %v2092 = vadd.f32 %v2076, 1e-05
        %v2093 = vadd.f32 %v2077, 1e-05
        %v2094 = vadd.f32 %v2078, 1e-05
        %v2095 = vadd.f32 %v2079, 1e-05
        %v2096 = vadd.f32 %v2080, 1e-05
        %v2097 = vadd.f32 %v2081, 1e-05
        %v2098 = vadd.f32 %v2082, 1e-05
        %v2099 = vadd.f32 %v2083, 1e-05
        %v2100 = vadd.f32 %v2084, 1e-05
        %v2101 = vadd.f32 %v2085, 1e-05
        %v2102 = vadd.f32 %v2086, 1e-05
        %v2103 = vadd.f32 %v2087, 1e-05
        %v2104 = vadd.f32 %v2088, 1e-05
        %v2105 = vadd.f32 %v2089, 1e-05
        %v2106 = vrsqrt.pop %v2090
        %v2107 = vrsqrt.pop %v2091
        %v2108 = vrsqrt.pop %v2092
        %v2109 = vrsqrt.pop %v2093
        %v2110 = vrsqrt.pop %v2094
        %v2111 = vrsqrt.pop %v2095
        %v2112 = vrsqrt.pop %v2096
        %v2113 = vrsqrt.pop %v2097
        %v2114 = vrsqrt.pop %v2098
        %v2115 = vrsqrt.pop %v2099
        %v2116 = vrsqrt.pop %v2100
        %v2117 = vrsqrt.pop %v2101
        %v2118 = vrsqrt.pop %v2102
        %v2119 = vrsqrt.pop %v2103
        %v2120 = vrsqrt.pop %v2104
        %v2121 = vrsqrt.pop %v2105
        %v2122 = vmul.f32 %v2010, %v2106
        %v2123 = vmul.f32 %v2011, %v2107
        %v2124 = vmul.f32 %v2012, %v2108
        %v2125 = vmul.f32 %v2013, %v2109
        %v2126 = vmul.f32 %v2014, %v2110
        %v2127 = vmul.f32 %v2015, %v2111
        %v2128 = vmul.f32 %v2016, %v2112
        %v2129 = vmul.f32 %v2017, %v2113
        %v2130 = vmul.f32 %v2018, %v2114
        %v2131 = vmul.f32 %v2019, %v2115
        %v2132 = vmul.f32 %v2020, %v2116
        %v2133 = vmul.f32 %v2021, %v2117
        %v2134 = vmul.f32 %v2022, %v2118
        %v2135 = vmul.f32 %v2023, %v2119
        %v2136 = vmul.f32 %v2024, %v2120
        %v2137 = vmul.f32 %v2025, %v2121
        %v2139 = vlaneseq
        %v2140 = vshrl.u32 %v2139, 7
        %v2141 = vsub.s32 0, %v2140
        %v2142 = vrot.slane %v1960, %v2141
        %v2144 = vmul.f32 %v2122, %v2142
        %v2145 = vmul.f32 %v2123, %v2142
        %v2146 = vmul.f32 %v2124, %v2142
        %v2147 = vmul.f32 %v2125, %v2142
        %v2148 = vmul.f32 %v2126, %v2142
        %v2149 = vmul.f32 %v2127, %v2142
        %v2150 = vmul.f32 %v2128, %v2142
        %v2151 = vmul.f32 %v2129, %v2142
        %v2152 = vmul.f32 %v2130, %v2142
        %v2153 = vmul.f32 %v2131, %v2142
        %v2154 = vmul.f32 %v2132, %v2142
        %v2155 = vmul.f32 %v2133, %v2142
        %v2156 = vmul.f32 %v2134, %v2142
        %v2157 = vmul.f32 %v2135, %v2142
        %v2158 = vmul.f32 %v2136, %v2142
        %v2159 = vmul.f32 %v2137, %v2142
        %v2161 = vlaneseq
        %v2162 = vshrl.u32 %v2161, 7
        %v2163 = vsub.s32 0, %v2162
        %v2164 = vrot.slane %v1961, %v2163
        %v2166 = vadd.f32 %v2144, %v2164
        %v2167 = vadd.f32 %v2145, %v2164
        %v2168 = vadd.f32 %v2146, %v2164
        %v2169 = vadd.f32 %v2147, %v2164
        %v2170 = vadd.f32 %v2148, %v2164
        %v2171 = vadd.f32 %v2149, %v2164
        %v2172 = vadd.f32 %v2150, %v2164
        %v2173 = vadd.f32 %v2151, %v2164
        %v2174 = vadd.f32 %v2152, %v2164
        %v2175 = vadd.f32 %v2153, %v2164
        %v2176 = vadd.f32 %v2154, %v2164
        %v2177 = vadd.f32 %v2155, %v2164
        %v2178 = vadd.f32 %v2156, %v2164
        %v2179 = vadd.f32 %v2157, %v2164
        %v2180 = vadd.f32 %v2158, %v2164
        %v2181 = vadd.f32 %v2159, %v2164
        %vm2182 = vcmp.ge.f32.partialorder %v2166, 0.0
        %vm2183 = vcmp.ge.f32.partialorder %v2167, 0.0
        %vm2184 = vcmp.ge.f32.partialorder %v2168, 0.0
        %vm2185 = vcmp.ge.f32.partialorder %v2169, 0.0
        %vm2186 = vcmp.ge.f32.partialorder %v2170, 0.0
        %vm2187 = vcmp.ge.f32.partialorder %v2171, 0.0
        %vm2188 = vcmp.ge.f32.partialorder %v2172, 0.0
        %vm2189 = vcmp.ge.f32.partialorder %v2173, 0.0
        %vm2190 = vcmp.ge.f32.partialorder %v2174, 0.0
        %vm2191 = vcmp.ge.f32.partialorder %v2175, 0.0
        %vm2192 = vcmp.ge.f32.partialorder %v2176, 0.0
        %vm2193 = vcmp.ge.f32.partialorder %v2177, 0.0
        %vm2194 = vcmp.ge.f32.partialorder %v2178, 0.0
        %vm2195 = vcmp.ge.f32.partialorder %v2179, 0.0
        %vm2196 = vcmp.ge.f32.partialorder %v2180, 0.0
        %vm2197 = vcmp.ge.f32.partialorder %v2181, 0.0
        %v2198 = vmul.f32 %v2166, 0.2
        %v2199 = vmul.f32 %v2167, 0.2
        %v2200 = vmul.f32 %v2168, 0.2
        %v2201 = vmul.f32 %v2169, 0.2
        %v2202 = vmul.f32 %v2170, 0.2
        %v2203 = vmul.f32 %v2171, 0.2
        %v2204 = vmul.f32 %v2172, 0.2
        %v2205 = vmul.f32 %v2173, 0.2
        %v2206 = vmul.f32 %v2174, 0.2
        %v2207 = vmul.f32 %v2175, 0.2
        %v2208 = vmul.f32 %v2176, 0.2
        %v2209 = vmul.f32 %v2177, 0.2
        %v2210 = vmul.f32 %v2178, 0.2
        %v2211 = vmul.f32 %v2179, 0.2
        %v2212 = vmul.f32 %v2180, 0.2
        %v2213 = vmul.f32 %v2181, 0.2
        %v2214 = vsel %vm2182, %v2166, %v2198
        %v2215 = vsel %vm2183, %v2167, %v2199
        %v2216 = vsel %vm2184, %v2168, %v2200
        %v2217 = vsel %vm2185, %v2169, %v2201
        %v2218 = vsel %vm2186, %v2170, %v2202
        %v2219 = vsel %vm2187, %v2171, %v2203
        %v2220 = vsel %vm2188, %v2172, %v2204
        %v2221 = vsel %vm2189, %v2173, %v2205
        %v2222 = vsel %vm2190, %v2174, %v2206
        %v2223 = vsel %vm2191, %v2175, %v2207
        %v2224 = vsel %vm2192, %v2176, %v2208
        %v2225 = vsel %vm2193, %v2177, %v2209
        %v2226 = vsel %vm2194, %v2178, %v2210
        %v2227 = vsel %vm2195, %v2179, %v2211
        %v2228 = vsel %vm2196, %v2180, %v2212
        %v2229 = vsel %vm2197, %v2181, %v2213
        %v2230 = vpack.c.bf16 %v879, %v878
        %v2231 = vpack.c.bf16 %v881, %v880
        %v2232 = vpack.c.bf16 %v883, %v882
        %v2233 = vpack.c.bf16 %v885, %v884
        %v2234 = vpack.c.bf16 %v887, %v886
        %v2235 = vpack.c.bf16 %v889, %v888
        %v2236 = vpack.c.bf16 %v891, %v890
        %v2237 = vpack.c.bf16 %v893, %v892
        %v2238 = vpack.c.bf16 %v895, %v894
        %v2239 = vpack.c.bf16 %v897, %v896
        %v2240 = vpack.c.bf16 %v899, %v898
        %v2241 = vpack.c.bf16 %v901, %v900
        %v2242 = vpack.c.bf16 %v903, %v902
        %v2243 = vpack.c.bf16 %v905, %v904
        %v2244 = vpack.c.bf16 %v907, %v906
        %v2245 = vpack.c.bf16 %v909, %v908
        %2246 = vmatprep.subr.bf16.mxu0 0
        %2247 = vmatpush1.bf16.msra.mxu0 %v2230
        %2248 = vmatprep.subr.bf16.mxu0 0
        %2249 = vmatpush1.bf16.msra.mxu0 %v2231
        %2250 = vmatprep.subr.bf16.mxu0 0
        %2251 = vmatpush1.bf16.msra.mxu0 %v2232
        %2252 = vmatprep.subr.bf16.mxu0 0
        %2253 = vmatpush1.bf16.msra.mxu0 %v2233
        %2254 = vmatprep.subr.bf16.mxu0 0
        %2255 = vmatpush1.bf16.msra.mxu0 %v2234
        %2256 = vmatprep.subr.bf16.mxu0 0
        %2257 = vmatpush1.bf16.msra.mxu0 %v2235
        %2258 = vmatprep.subr.bf16.mxu0 0
        %2259 = vmatpush1.bf16.msra.mxu0 %v2236
        %2260 = vmatprep.subr.bf16.mxu0 0
        %2261 = vmatpush1.bf16.msra.mxu0 %v2237
        %2262 = vmatprep.subr.bf16.mxu0 0
        %2263 = vmatpush1.bf16.msra.mxu0 %v2238
        %2264 = vmatprep.subr.bf16.mxu0 0
        %2265 = vmatpush1.bf16.msra.mxu0 %v2239
        %2266 = vmatprep.subr.bf16.mxu0 0
        %2267 = vmatpush1.bf16.msra.mxu0 %v2240
        %2268 = vmatprep.subr.bf16.mxu0 0
        %2269 = vmatpush1.bf16.msra.mxu0 %v2241
        %2270 = vmatprep.subr.bf16.mxu0 0
        %2271 = vmatpush1.bf16.msra.mxu0 %v2242
        %2272 = vmatprep.subr.bf16.mxu0 0
        %2273 = vmatpush1.bf16.msra.mxu0 %v2243
        %2274 = vmatprep.subr.bf16.mxu0 0
        %2275 = vmatpush1.bf16.msra.mxu0 %v2244
        %2276 = vmatprep.subr.bf16.mxu0 0
        %2277 = vmatpush1.bf16.msra.mxu0 %v2245
        %2278 = vmatprep.mubr.bf16.mxu0 %v1832
        %2279 = vmatmul.mubr.bf16.gmra.mrb[0].mxu0 %v1831
        %v2280 = vpop.f32.mrb[0].mxu0
        %v2281 = vadd.f32 0.0, %v2280
        %v2282 = vpop.f32.mrb[0].mxu0
        %v2283 = vpop.f32.mrb[0].mxu0
        %v2284 = vadd.f32 0.0, %v2283
        %v2285 = vpop.f32.mrb[0].mxu0
        %2286 = vmatprep.mubr.bf16.mxu0 %v1834
        %2287 = vmatmul.mubr.bf16.gmra.mrb[0].mxu0 %v1833
        %v2288 = vpop.f32.mrb[0].mxu0
        %v2289 = vadd.f32 0.0, %v2288
        %v2290 = vpop.f32.mrb[0].mxu0
        %v2291 = vpop.f32.mrb[0].mxu0
        %v2292 = vadd.f32 0.0, %v2291
        %v2293 = vpop.f32.mrb[0].mxu0
        %2294 = vmatprep.mubr.bf16.mxu0 %v1836
        %2295 = vmatmul.mubr.bf16.gmra.mrb[0].mxu0 %v1835
        %v2296 = vpop.f32.mrb[0].mxu0
        %v2297 = vadd.f32 0.0, %v2296
        %v2298 = vpop.f32.mrb[0].mxu0
        %v2299 = vpop.f32.mrb[0].mxu0
        %v2300 = vadd.f32 0.0, %v2299
        %v2301 = vpop.f32.mrb[0].mxu0
        %2302 = vmatprep.mubr.bf16.mxu0 %v1838
        %2303 = vmatmul.mubr.bf16.gmra.mrb[0].mxu0 %v1837
        %v2304 = vpop.f32.mrb[0].mxu0
        %v2305 = vadd.f32 0.0, %v2304
        %v2306 = vpop.f32.mrb[0].mxu0
        %v2307 = vpop.f32.mrb[0].mxu0
        %v2308 = vadd.f32 0.0, %v2307
        %v2309 = vpop.f32.mrb[0].mxu0
        %2310 = vmatprep.mubr.bf16.mxu0 %v1840
        %2311 = vmatmul.mubr.bf16.gmra.mrb[0].mxu0 %v1839
        %v2312 = vpop.f32.mrb[0].mxu0
        %v2313 = vadd.f32 0.0, %v2312
        %v2314 = vpop.f32.mrb[0].mxu0
        %v2315 = vpop.f32.mrb[0].mxu0
        %v2316 = vadd.f32 0.0, %v2315
        %v2317 = vpop.f32.mrb[0].mxu0
        %2318 = vmatprep.mubr.bf16.mxu0 %v1842
        %2319 = vmatmul.mubr.bf16.gmra.mrb[0].mxu0 %v1841
        %v2320 = vpop.f32.mrb[0].mxu0
        %v2321 = vadd.f32 0.0, %v2320
        %v2322 = vpop.f32.mrb[0].mxu0
        %v2323 = vpop.f32.mrb[0].mxu0
        %v2324 = vadd.f32 0.0, %v2323
        %v2325 = vpop.f32.mrb[0].mxu0
        %2326 = vmatprep.mubr.bf16.mxu0 %v1844
        %2327 = vmatmul.mubr.bf16.gmra.mrb[0].mxu0 %v1843
        %v2328 = vpop.f32.mrb[0].mxu0
        %v2329 = vadd.f32 0.0, %v2328
        %v2330 = vpop.f32.mrb[0].mxu0
        %v2331 = vpop.f32.mrb[0].mxu0
        %v2332 = vadd.f32 0.0, %v2331
        %v2333 = vpop.f32.mrb[0].mxu0
        %2334 = vmatprep.mubr.bf16.mxu0 %v1846
        %2335 = vmatmul.mubr.bf16.gmra.mrb[0].mxu0 %v1845
        %v2336 = vpop.f32.mrb[0].mxu0
        %v2337 = vadd.f32 0.0, %v2336
        %v2338 = vpop.f32.mrb[0].mxu0
        %v2339 = vpop.f32.mrb[0].mxu0
        %v2340 = vadd.f32 0.0, %v2339
        %v2341 = vpop.f32.mrb[0].mxu0
        %2342 = vdwg.mxu0
        %2343 = vmatprep.subr.mxu0 0.0
        %2344 = vmatpush1.msra.mxu0 %v926
        %2345 = vmatprep.subr.mxu0 0.0
        %2346 = vmatpush1.msra.mxu0 %v927
        %2347 = vmatprep.subr.mxu0 0.0
        %2348 = vmatpush1.msra.mxu0 %v928
        %2349 = vmatprep.subr.mxu0 0.0
        %2350 = vmatpush1.msra.mxu0 %v929
        %2351 = vmatprep.subr.mxu0 0.0
        %2352 = vmatpush1.msra.mxu0 %v930
        %2353 = vmatprep.subr.mxu0 0.0
        %2354 = vmatpush1.msra.mxu0 %v931
        %2355 = vmatprep.subr.mxu0 0.0
        %2356 = vmatpush1.msra.mxu0 %v932
        %2357 = vmatprep.subr.mxu0 0.0
        %2358 = vmatpush1.msra.mxu0 %v933
        %2359 = vmatprep.subr.mxu0 0.0
        %2360 = vmatpush1.msra.mxu0 %v934
        %2361 = vmatprep.subr.mxu0 0.0
        %2362 = vmatpush1.msra.mxu0 %v935
        %2363 = vmatprep.subr.mxu0 0.0
        %2364 = vmatpush1.msra.mxu0 %v936
        %2365 = vmatprep.subr.mxu0 0.0
        %2366 = vmatpush1.msra.mxu0 %v937
        %2367 = vmatprep.subr.mxu0 0.0
        %2368 = vmatpush1.msra.mxu0 %v938
        %2369 = vmatprep.subr.mxu0 0.0
        %2370 = vmatpush1.msra.mxu0 %v939
        %2371 = vmatprep.subr.mxu0 0.0
        %2372 = vmatpush1.msra.mxu0 %v940
        %2373 = vmatprep.subr.mxu0 0.0
        %2374 = vmatpush1.msra.mxu0 %v941
        %2375 = vmatprep.subr.mxu0 0.0
        %2376 = vmatpush1.msra.mxu0 0.0
        %2377 = vmatprep.subr.mxu0 0.0
        %2378 = vmatpush1.msra.mxu0 0.0
        %2379 = vmatprep.subr.mxu0 0.0
        %2380 = vmatpush1.msra.mxu0 0.0
        %2381 = vmatprep.subr.mxu0 0.0
        %2382 = vmatpush1.msra.mxu0 0.0
        %2383 = vmatprep.subr.mxu0 0.0
        %2384 = vmatpush1.msra.mxu0 0.0
        %2385 = vmatprep.subr.mxu0 0.0
        %2386 = vmatpush1.msra.mxu0 0.0
        %2387 = vmatprep.subr.mxu0 0.0
        %2388 = vmatpush1.msra.mxu0 0.0
        %2389 = vmatprep.subr.mxu0 0.0
        %2390 = vmatpush1.msra.mxu0 0.0
        %2391 = vmatprep.subr.mxu0 0.0
        %2392 = vmatpush1.msra.mxu0 0.0
        %2393 = vmatprep.subr.mxu0 0.0
        %2394 = vmatpush1.msra.mxu0 0.0
        %2395 = vmatprep.subr.mxu0 0.0
        %2396 = vmatpush1.msra.mxu0 0.0
        %2397 = vmatprep.subr.mxu0 0.0
        %2398 = vmatpush1.msra.mxu0 0.0
        %2399 = vmatprep.subr.mxu0 0.0
        %2400 = vmatpush1.msra.mxu0 0.0
        %2401 = vmatprep.subr.mxu0 0.0
        %2402 = vmatpush1.msra.mxu0 0.0
        %2403 = vmatprep.subr.mxu0 0.0
        %2404 = vmatpush1.msra.mxu0 0.0
        %2405 = vmatprep.subr.mxu0 0.0
        %2406 = vmatpush1.msra.mxu0 0.0
        %2407 = vmatprep.mubr.f32.mxu0 0.0
        %2408 = vmatmul.mubr.f32.gmra.mrb[0].mxu0 %v2281
        %v2409 = vpop.f32.mrb[0].mxu0
        %v2410 = vadd.f32 0.0, %v2409
        %v2411 = vpop.f32.mrb[0].mxu0
        %2412 = vmatprep.mubr.f32.mxu0 0.0
        %2413 = vmatmul.mubr.f32.gmra.mrb[0].mxu0 %v2284
        %v2414 = vpop.f32.mrb[0].mxu0
        %v2415 = vadd.f32 0.0, %v2414
        %v2416 = vpop.f32.mrb[0].mxu0
        %2417 = vmatprep.mubr.f32.mxu0 0.0
        %2418 = vmatmul.mubr.f32.gmra.mrb[0].mxu0 %v2289
        %v2419 = vpop.f32.mrb[0].mxu0
        %v2420 = vadd.f32 0.0, %v2419
        %v2421 = vpop.f32.mrb[0].mxu0
        %2422 = vmatprep.mubr.f32.mxu0 0.0
        %2423 = vmatmul.mubr.f32.gmra.mrb[0].mxu0 %v2292
        %v2424 = vpop.f32.mrb[0].mxu0
        %v2425 = vadd.f32 0.0, %v2424
        %v2426 = vpop.f32.mrb[0].mxu0
        %2427 = vmatprep.mubr.f32.mxu0 0.0
        %2428 = vmatmul.mubr.f32.gmra.mrb[0].mxu0 %v2297
        %v2429 = vpop.f32.mrb[0].mxu0
        %v2430 = vadd.f32 0.0, %v2429
        %v2431 = vpop.f32.mrb[0].mxu0
        %2432 = vmatprep.mubr.f32.mxu0 0.0
        %2433 = vmatmul.mubr.f32.gmra.mrb[0].mxu0 %v2300
        %v2434 = vpop.f32.mrb[0].mxu0
        %v2435 = vadd.f32 0.0, %v2434
        %v2436 = vpop.f32.mrb[0].mxu0
        %2437 = vmatprep.mubr.f32.mxu0 0.0
        %2438 = vmatmul.mubr.f32.gmra.mrb[0].mxu0 %v2305
        %v2439 = vpop.f32.mrb[0].mxu0
        %v2440 = vadd.f32 0.0, %v2439
        %v2441 = vpop.f32.mrb[0].mxu0
        %2442 = vmatprep.mubr.f32.mxu0 0.0
        %2443 = vmatmul.mubr.f32.gmra.mrb[0].mxu0 %v2308
        %v2444 = vpop.f32.mrb[0].mxu0
        %v2445 = vadd.f32 0.0, %v2444
        %v2446 = vpop.f32.mrb[0].mxu0
        %2447 = vmatprep.mubr.f32.mxu0 0.0
        %2448 = vmatmul.mubr.f32.gmra.mrb[0].mxu0 %v2313
        %v2449 = vpop.f32.mrb[0].mxu0
        %v2450 = vadd.f32 0.0, %v2449
        %v2451 = vpop.f32.mrb[0].mxu0
        %2452 = vmatprep.mubr.f32.mxu0 0.0
        %2453 = vmatmul.mubr.f32.gmra.mrb[0].mxu0 %v2316
        %v2454 = vpop.f32.mrb[0].mxu0
        %v2455 = vadd.f32 0.0, %v2454
        %v2456 = vpop.f32.mrb[0].mxu0
        %2457 = vmatprep.mubr.f32.mxu0 0.0
        %2458 = vmatmul.mubr.f32.gmra.mrb[0].mxu0 %v2321
        %v2459 = vpop.f32.mrb[0].mxu0
        %v2460 = vadd.f32 0.0, %v2459
        %v2461 = vpop.f32.mrb[0].mxu0
        %2462 = vmatprep.mubr.f32.mxu0 0.0
        %2463 = vmatmul.mubr.f32.gmra.mrb[0].mxu0 %v2324
        %v2464 = vpop.f32.mrb[0].mxu0
        %v2465 = vadd.f32 0.0, %v2464
        %v2466 = vpop.f32.mrb[0].mxu0
        %2467 = vmatprep.mubr.f32.mxu0 0.0
        %2468 = vmatmul.mubr.f32.gmra.mrb[0].mxu0 %v2329
        %v2469 = vpop.f32.mrb[0].mxu0
        %v2470 = vadd.f32 0.0, %v2469
        %v2471 = vpop.f32.mrb[0].mxu0
        %2472 = vmatprep.mubr.f32.mxu0 0.0
        %2473 = vmatmul.mubr.f32.gmra.mrb[0].mxu0 %v2332
        %v2474 = vpop.f32.mrb[0].mxu0
        %v2475 = vadd.f32 0.0, %v2474
        %v2476 = vpop.f32.mrb[0].mxu0
        %2477 = vmatprep.mubr.f32.mxu0 0.0
        %2478 = vmatmul.mubr.f32.gmra.mrb[0].mxu0 %v2337
        %v2479 = vpop.f32.mrb[0].mxu0
        %v2480 = vadd.f32 0.0, %v2479
        %v2481 = vpop.f32.mrb[0].mxu0
        %2482 = vmatprep.mubr.f32.mxu0 0.0
        %2483 = vmatmul.mubr.f32.gmra.mrb[0].mxu0 %v2340
        %v2484 = vpop.f32.mrb[0].mxu0
        %v2485 = vadd.f32 0.0, %v2484
        %v2486 = vpop.f32.mrb[0].mxu0
        %2487 = vdwg.mxu0
        %v2488 = vld [vmem:[%s575] sm:$0x1]
        %v2489 = vld [vmem:[%s578] sm:$0x1]
        %2490 = vadd.xlane.f32.xlu0 %v2410
        %v2491 = vpop.xlane.xlu0 %2490
        %2492 = vadd.xlane.f32.xlu0 %v2415
        %v2493 = vpop.xlane.xlu0 %2492
        %2494 = vadd.xlane.f32.xlu0 %v2420
        %v2495 = vpop.xlane.xlu0 %2494
        %2496 = vadd.xlane.f32.xlu0 %v2425
        %v2497 = vpop.xlane.xlu0 %2496
        %2498 = vadd.xlane.f32.xlu0 %v2430
        %v2499 = vpop.xlane.xlu0 %2498
        %2500 = vadd.xlane.f32.xlu0 %v2435
        %v2501 = vpop.xlane.xlu0 %2500
        %2502 = vadd.xlane.f32.xlu0 %v2440
        %v2503 = vpop.xlane.xlu0 %2502
        %2504 = vadd.xlane.f32.xlu0 %v2445
        %v2505 = vpop.xlane.xlu0 %2504
        %2506 = vadd.xlane.f32.xlu0 %v2450
        %v2507 = vpop.xlane.xlu0 %2506
        %2508 = vadd.xlane.f32.xlu0 %v2455
        %v2509 = vpop.xlane.xlu0 %2508
        %2510 = vadd.xlane.f32.xlu0 %v2460
        %v2511 = vpop.xlane.xlu0 %2510
        %2512 = vadd.xlane.f32.xlu0 %v2465
        %v2513 = vpop.xlane.xlu0 %2512
        %2514 = vadd.xlane.f32.xlu0 %v2470
        %v2515 = vpop.xlane.xlu0 %2514
        %2516 = vadd.xlane.f32.xlu0 %v2475
        %v2517 = vpop.xlane.xlu0 %2516
        %2518 = vadd.xlane.f32.xlu0 %v2480
        %v2519 = vpop.xlane.xlu0 %2518
        %2520 = vadd.xlane.f32.xlu0 %v2485
        %v2521 = vpop.xlane.xlu0 %2520
        %v2522 = vmul.f32 %v2491, %v1402
        %v2523 = vmul.f32 %v2493, %v1402
        %v2524 = vmul.f32 %v2495, %v1402
        %v2525 = vmul.f32 %v2497, %v1402
        %v2526 = vmul.f32 %v2499, %v1402
        %v2527 = vmul.f32 %v2501, %v1402
        %v2528 = vmul.f32 %v2503, %v1402
        %v2529 = vmul.f32 %v2505, %v1402
        %v2530 = vmul.f32 %v2507, %v1402
        %v2531 = vmul.f32 %v2509, %v1402
        %v2532 = vmul.f32 %v2511, %v1402
        %v2533 = vmul.f32 %v2513, %v1402
        %v2534 = vmul.f32 %v2515, %v1402
        %v2535 = vmul.f32 %v2517, %v1402
        %v2536 = vmul.f32 %v2519, %v1402
        %v2537 = vmul.f32 %v2521, %v1402
        %v2538 = vsub.f32 %v2410, %v2522
        %v2539 = vsub.f32 %v2415, %v2523
        %v2540 = vsub.f32 %v2420, %v2524
        %v2541 = vsub.f32 %v2425, %v2525
        %v2542 = vsub.f32 %v2430, %v2526
        %v2543 = vsub.f32 %v2435, %v2527
        %v2544 = vsub.f32 %v2440, %v2528
        %v2545 = vsub.f32 %v2445, %v2529
        %v2546 = vsub.f32 %v2450, %v2530
        %v2547 = vsub.f32 %v2455, %v2531
        %v2548 = vsub.f32 %v2460, %v2532
        %v2549 = vsub.f32 %v2465, %v2533
        %v2550 = vsub.f32 %v2470, %v2534
        %v2551 = vsub.f32 %v2475, %v2535
        %v2552 = vsub.f32 %v2480, %v2536
        %v2553 = vsub.f32 %v2485, %v2537
        %v2554 = vmul.f32 %v2538, %v2538
        %v2555 = vmul.f32 %v2539, %v2539
        %v2556 = vmul.f32 %v2540, %v2540
        %v2557 = vmul.f32 %v2541, %v2541
        %v2558 = vmul.f32 %v2542, %v2542
        %v2559 = vmul.f32 %v2543, %v2543
        %v2560 = vmul.f32 %v2544, %v2544
        %v2561 = vmul.f32 %v2545, %v2545
        %v2562 = vmul.f32 %v2546, %v2546
        %v2563 = vmul.f32 %v2547, %v2547
        %v2564 = vmul.f32 %v2548, %v2548
        %v2565 = vmul.f32 %v2549, %v2549
        %v2566 = vmul.f32 %v2550, %v2550
        %v2567 = vmul.f32 %v2551, %v2551
        %v2568 = vmul.f32 %v2552, %v2552
        %v2569 = vmul.f32 %v2553, %v2553
        %2570 = vadd.xlane.f32.xlu0 %v2554
        %v2571 = vpop.xlane.xlu0 %2570
        %2572 = vadd.xlane.f32.xlu0 %v2555
        %v2573 = vpop.xlane.xlu0 %2572
        %2574 = vadd.xlane.f32.xlu0 %v2556
        %v2575 = vpop.xlane.xlu0 %2574
        %2576 = vadd.xlane.f32.xlu0 %v2557
        %v2577 = vpop.xlane.xlu0 %2576
        %2578 = vadd.xlane.f32.xlu0 %v2558
        %v2579 = vpop.xlane.xlu0 %2578
        %2580 = vadd.xlane.f32.xlu0 %v2559
        %v2581 = vpop.xlane.xlu0 %2580
        %2582 = vadd.xlane.f32.xlu0 %v2560
        %v2583 = vpop.xlane.xlu0 %2582
        %2584 = vadd.xlane.f32.xlu0 %v2561
        %v2585 = vpop.xlane.xlu0 %2584
        %2586 = vadd.xlane.f32.xlu0 %v2562
        %v2587 = vpop.xlane.xlu0 %2586
        %2588 = vadd.xlane.f32.xlu0 %v2563
        %v2589 = vpop.xlane.xlu0 %2588
        %2590 = vadd.xlane.f32.xlu0 %v2564
        %v2591 = vpop.xlane.xlu0 %2590
        %2592 = vadd.xlane.f32.xlu0 %v2565
        %v2593 = vpop.xlane.xlu0 %2592
        %2594 = vadd.xlane.f32.xlu0 %v2566
        %v2595 = vpop.xlane.xlu0 %2594
        %2596 = vadd.xlane.f32.xlu0 %v2567
        %v2597 = vpop.xlane.xlu0 %2596
        %2598 = vadd.xlane.f32.xlu0 %v2568
        %v2599 = vpop.xlane.xlu0 %2598
        %2600 = vadd.xlane.f32.xlu0 %v2569
        %v2601 = vpop.xlane.xlu0 %2600
        %v2602 = vmul.f32 %v2571, %v1402
        %v2603 = vmul.f32 %v2573, %v1402
        %v2604 = vmul.f32 %v2575, %v1402
        %v2605 = vmul.f32 %v2577, %v1402
        %v2606 = vmul.f32 %v2579, %v1402
        %v2607 = vmul.f32 %v2581, %v1402
        %v2608 = vmul.f32 %v2583, %v1402
        %v2609 = vmul.f32 %v2585, %v1402
        %v2610 = vmul.f32 %v2587, %v1402
        %v2611 = vmul.f32 %v2589, %v1402
        %v2612 = vmul.f32 %v2591, %v1402
        %v2613 = vmul.f32 %v2593, %v1402
        %v2614 = vmul.f32 %v2595, %v1402
        %v2615 = vmul.f32 %v2597, %v1402
        %v2616 = vmul.f32 %v2599, %v1402
        %v2617 = vmul.f32 %v2601, %v1402
        %v2618 = vadd.f32 %v2602, 1e-05
        %v2619 = vadd.f32 %v2603, 1e-05
        %v2620 = vadd.f32 %v2604, 1e-05
        %v2621 = vadd.f32 %v2605, 1e-05
        %v2622 = vadd.f32 %v2606, 1e-05
        %v2623 = vadd.f32 %v2607, 1e-05
        %v2624 = vadd.f32 %v2608, 1e-05
        %v2625 = vadd.f32 %v2609, 1e-05
        %v2626 = vadd.f32 %v2610, 1e-05
        %v2627 = vadd.f32 %v2611, 1e-05
        %v2628 = vadd.f32 %v2612, 1e-05
        %v2629 = vadd.f32 %v2613, 1e-05
        %v2630 = vadd.f32 %v2614, 1e-05
        %v2631 = vadd.f32 %v2615, 1e-05
        %v2632 = vadd.f32 %v2616, 1e-05
        %v2633 = vadd.f32 %v2617, 1e-05
        %v2634 = vrsqrt.pop %v2618
        %v2635 = vrsqrt.pop %v2619
        %v2636 = vrsqrt.pop %v2620
        %v2637 = vrsqrt.pop %v2621
        %v2638 = vrsqrt.pop %v2622
        %v2639 = vrsqrt.pop %v2623
        %v2640 = vrsqrt.pop %v2624
        %v2641 = vrsqrt.pop %v2625
        %v2642 = vrsqrt.pop %v2626
        %v2643 = vrsqrt.pop %v2627
        %v2644 = vrsqrt.pop %v2628
        %v2645 = vrsqrt.pop %v2629
        %v2646 = vrsqrt.pop %v2630
        %v2647 = vrsqrt.pop %v2631
        %v2648 = vrsqrt.pop %v2632
        %v2649 = vrsqrt.pop %v2633
        %v2650 = vmul.f32 %v2538, %v2634
        %v2651 = vmul.f32 %v2539, %v2635
        %v2652 = vmul.f32 %v2540, %v2636
        %v2653 = vmul.f32 %v2541, %v2637
        %v2654 = vmul.f32 %v2542, %v2638
        %v2655 = vmul.f32 %v2543, %v2639
        %v2656 = vmul.f32 %v2544, %v2640
        %v2657 = vmul.f32 %v2545, %v2641
        %v2658 = vmul.f32 %v2546, %v2642
        %v2659 = vmul.f32 %v2547, %v2643
        %v2660 = vmul.f32 %v2548, %v2644
        %v2661 = vmul.f32 %v2549, %v2645
        %v2662 = vmul.f32 %v2550, %v2646
        %v2663 = vmul.f32 %v2551, %v2647
        %v2664 = vmul.f32 %v2552, %v2648
        %v2665 = vmul.f32 %v2553, %v2649
        %v2667 = vlaneseq
        %v2668 = vshrl.u32 %v2667, 7
        %v2669 = vsub.s32 0, %v2668
        %v2670 = vrot.slane %v2488, %v2669
        %v2672 = vmul.f32 %v2650, %v2670
        %v2673 = vmul.f32 %v2651, %v2670
        %v2674 = vmul.f32 %v2652, %v2670
        %v2675 = vmul.f32 %v2653, %v2670
        %v2676 = vmul.f32 %v2654, %v2670
        %v2677 = vmul.f32 %v2655, %v2670
        %v2678 = vmul.f32 %v2656, %v2670
        %v2679 = vmul.f32 %v2657, %v2670
        %v2680 = vmul.f32 %v2658, %v2670
        %v2681 = vmul.f32 %v2659, %v2670
        %v2682 = vmul.f32 %v2660, %v2670
        %v2683 = vmul.f32 %v2661, %v2670
        %v2684 = vmul.f32 %v2662, %v2670
        %v2685 = vmul.f32 %v2663, %v2670
        %v2686 = vmul.f32 %v2664, %v2670
        %v2687 = vmul.f32 %v2665, %v2670
        %v2689 = vlaneseq
        %v2690 = vshrl.u32 %v2689, 7
        %v2691 = vsub.s32 0, %v2690
        %v2692 = vrot.slane %v2489, %v2691
        %v2694 = vadd.f32 %v2672, %v2692
        %v2695 = vadd.f32 %v2673, %v2692
        %v2696 = vadd.f32 %v2674, %v2692
        %v2697 = vadd.f32 %v2675, %v2692
        %v2698 = vadd.f32 %v2676, %v2692
        %v2699 = vadd.f32 %v2677, %v2692
        %v2700 = vadd.f32 %v2678, %v2692
        %v2701 = vadd.f32 %v2679, %v2692
        %v2702 = vadd.f32 %v2680, %v2692
        %v2703 = vadd.f32 %v2681, %v2692
        %v2704 = vadd.f32 %v2682, %v2692
        %v2705 = vadd.f32 %v2683, %v2692
        %v2706 = vadd.f32 %v2684, %v2692
        %v2707 = vadd.f32 %v2685, %v2692
        %v2708 = vadd.f32 %v2686, %v2692
        %v2709 = vadd.f32 %v2687, %v2692
        %v2710 = vpack.c.bf16 %v2695, %v2694
        %v2711 = vpack.c.bf16 %v2697, %v2696
        %v2712 = vpack.c.bf16 %v2699, %v2698
        %v2713 = vpack.c.bf16 %v2701, %v2700
        %v2714 = vpack.c.bf16 %v2703, %v2702
        %v2715 = vpack.c.bf16 %v2705, %v2704
        %v2716 = vpack.c.bf16 %v2707, %v2706
        %v2717 = vpack.c.bf16 %v2709, %v2708
        %2718 = vmatprep.subr.bf16.mxu0 0
        %2719 = vmatpush1.bf16.msra.mxu0 %v2710
        %2720 = vmatprep.subr.bf16.mxu0 0
        %2721 = vmatpush1.bf16.msra.mxu0 %v2711
        %2722 = vmatprep.subr.bf16.mxu0 0
        %2723 = vmatpush1.bf16.msra.mxu0 %v2712
        %2724 = vmatprep.subr.bf16.mxu0 0
        %2725 = vmatpush1.bf16.msra.mxu0 %v2713
        %2726 = vmatprep.subr.bf16.mxu0 0
        %2727 = vmatpush1.bf16.msra.mxu0 %v2714
        %2728 = vmatprep.subr.bf16.mxu0 0
        %2729 = vmatpush1.bf16.msra.mxu0 %v2715
        %2730 = vmatprep.subr.bf16.mxu0 0
        %2731 = vmatpush1.bf16.msra.mxu0 %v2716
        %2732 = vmatprep.subr.bf16.mxu0 0
        %2733 = vmatpush1.bf16.msra.mxu0 %v2717
        %2734 = vmatprep.subr.bf16.mxu0 0
        %2735 = vmatpush1.bf16.msra.mxu0 0
        %2736 = vmatprep.subr.bf16.mxu0 0
        %2737 = vmatpush1.bf16.msra.mxu0 0
        %2738 = vmatprep.subr.bf16.mxu0 0
        %2739 = vmatpush1.bf16.msra.mxu0 0
        %2740 = vmatprep.subr.bf16.mxu0 0
        %2741 = vmatpush1.bf16.msra.mxu0 0
        %2742 = vmatprep.subr.bf16.mxu0 0
        %2743 = vmatpush1.bf16.msra.mxu0 0
        %2744 = vmatprep.subr.bf16.mxu0 0
        %2745 = vmatpush1.bf16.msra.mxu0 0
        %2746 = vmatprep.subr.bf16.mxu0 0
        %2747 = vmatpush1.bf16.msra.mxu0 0
        %2748 = vmatprep.subr.bf16.mxu0 0
        %2749 = vmatpush1.bf16.msra.mxu0 0
        %2750 = vmatprep.mubr.bf16.mxu0 0
        %2751 = vmatmul.mubr.bf16.gmra.mrb[0].mxu0 %v846
        %v2752 = vpop.f32.mrb[0].mxu0
        %v2753 = vadd.f32 0.0, %v2752
        %v2754 = vpop.f32.mrb[0].mxu0
        %v2755 = vpop.f32.mrb[0].mxu0
        %v2756 = vadd.f32 0.0, %v2755
        %v2757 = vpop.f32.mrb[0].mxu0
        %2758 = vmatprep.mubr.bf16.mxu0 0
        %2759 = vmatmul.mubr.bf16.gmra.mrb[0].mxu0 %v847
        %v2760 = vpop.f32.mrb[0].mxu0
        %v2761 = vadd.f32 0.0, %v2760
        %v2762 = vpop.f32.mrb[0].mxu0
        %v2763 = vpop.f32.mrb[0].mxu0
        %v2764 = vadd.f32 0.0, %v2763
        %v2765 = vpop.f32.mrb[0].mxu0
        %2766 = vmatprep.mubr.bf16.mxu0 0
        %2767 = vmatmul.mubr.bf16.gmra.mrb[0].mxu0 %v848
        %v2768 = vpop.f32.mrb[0].mxu0
        %v2769 = vadd.f32 0.0, %v2768
        %v2770 = vpop.f32.mrb[0].mxu0
        %v2771 = vpop.f32.mrb[0].mxu0
        %v2772 = vadd.f32 0.0, %v2771
        %v2773 = vpop.f32.mrb[0].mxu0
        %2774 = vmatprep.mubr.bf16.mxu0 0
        %2775 = vmatmul.mubr.bf16.gmra.mrb[0].mxu0 %v849
        %v2776 = vpop.f32.mrb[0].mxu0
        %v2777 = vadd.f32 0.0, %v2776
        %v2778 = vpop.f32.mrb[0].mxu0
        %v2779 = vpop.f32.mrb[0].mxu0
        %v2780 = vadd.f32 0.0, %v2779
        %v2781 = vpop.f32.mrb[0].mxu0
        %2782 = vmatprep.mubr.bf16.mxu0 0
        %2783 = vmatmul.mubr.bf16.gmra.mrb[0].mxu0 %v850
        %v2784 = vpop.f32.mrb[0].mxu0
        %v2785 = vadd.f32 0.0, %v2784
        %v2786 = vpop.f32.mrb[0].mxu0
        %v2787 = vpop.f32.mrb[0].mxu0
        %v2788 = vadd.f32 0.0, %v2787
        %v2789 = vpop.f32.mrb[0].mxu0
        %2790 = vmatprep.mubr.bf16.mxu0 0
        %2791 = vmatmul.mubr.bf16.gmra.mrb[0].mxu0 %v851
        %v2792 = vpop.f32.mrb[0].mxu0
        %v2793 = vadd.f32 0.0, %v2792
        %v2794 = vpop.f32.mrb[0].mxu0
        %v2795 = vpop.f32.mrb[0].mxu0
        %v2796 = vadd.f32 0.0, %v2795
        %v2797 = vpop.f32.mrb[0].mxu0
        %2798 = vmatprep.mubr.bf16.mxu0 0
        %2799 = vmatmul.mubr.bf16.gmra.mrb[0].mxu0 %v852
        %v2800 = vpop.f32.mrb[0].mxu0
        %v2801 = vadd.f32 0.0, %v2800
        %v2802 = vpop.f32.mrb[0].mxu0
        %v2803 = vpop.f32.mrb[0].mxu0
        %v2804 = vadd.f32 0.0, %v2803
        %v2805 = vpop.f32.mrb[0].mxu0
        %2806 = vmatprep.mubr.bf16.mxu0 0
        %2807 = vmatmul.mubr.bf16.gmra.mrb[0].mxu0 %v853
        %v2808 = vpop.f32.mrb[0].mxu0
        %v2809 = vadd.f32 0.0, %v2808
        %v2810 = vpop.f32.mrb[0].mxu0
        %v2811 = vpop.f32.mrb[0].mxu0
        %v2812 = vadd.f32 0.0, %v2811
        %v2813 = vpop.f32.mrb[0].mxu0
        %2814 = vmatprep.mubr.bf16.mxu0 0
        %2815 = vmatmul.mubr.bf16.gmra.mrb[0].mxu0 %v854
        %v2816 = vpop.f32.mrb[0].mxu0
        %v2817 = vadd.f32 0.0, %v2816
        %v2818 = vpop.f32.mrb[0].mxu0
        %v2819 = vpop.f32.mrb[0].mxu0
        %v2820 = vadd.f32 0.0, %v2819
        %v2821 = vpop.f32.mrb[0].mxu0
        %2822 = vmatprep.mubr.bf16.mxu0 0
        %2823 = vmatmul.mubr.bf16.gmra.mrb[0].mxu0 %v855
        %v2824 = vpop.f32.mrb[0].mxu0
        %v2825 = vadd.f32 0.0, %v2824
        %v2826 = vpop.f32.mrb[0].mxu0
        %v2827 = vpop.f32.mrb[0].mxu0
        %v2828 = vadd.f32 0.0, %v2827
        %v2829 = vpop.f32.mrb[0].mxu0
        %2830 = vmatprep.mubr.bf16.mxu0 0
        %2831 = vmatmul.mubr.bf16.gmra.mrb[0].mxu0 %v856
        %v2832 = vpop.f32.mrb[0].mxu0
        %v2833 = vadd.f32 0.0, %v2832
        %v2834 = vpop.f32.mrb[0].mxu0
        %v2835 = vpop.f32.mrb[0].mxu0
        %v2836 = vadd.f32 0.0, %v2835
        %v2837 = vpop.f32.mrb[0].mxu0
        %2838 = vmatprep.mubr.bf16.mxu0 0
        %2839 = vmatmul.mubr.bf16.gmra.mrb[0].mxu0 %v857
        %v2840 = vpop.f32.mrb[0].mxu0
        %v2841 = vadd.f32 0.0, %v2840
        %v2842 = vpop.f32.mrb[0].mxu0
        %v2843 = vpop.f32.mrb[0].mxu0
        %v2844 = vadd.f32 0.0, %v2843
        %v2845 = vpop.f32.mrb[0].mxu0
        %2846 = vmatprep.mubr.bf16.mxu0 0
        %2847 = vmatmul.mubr.bf16.gmra.mrb[0].mxu0 %v858
        %v2848 = vpop.f32.mrb[0].mxu0
        %v2849 = vadd.f32 0.0, %v2848
        %v2850 = vpop.f32.mrb[0].mxu0
        %v2851 = vpop.f32.mrb[0].mxu0
        %v2852 = vadd.f32 0.0, %v2851
        %v2853 = vpop.f32.mrb[0].mxu0
        %2854 = vmatprep.mubr.bf16.mxu0 0
        %2855 = vmatmul.mubr.bf16.gmra.mrb[0].mxu0 %v859
        %v2856 = vpop.f32.mrb[0].mxu0
        %v2857 = vadd.f32 0.0, %v2856
        %v2858 = vpop.f32.mrb[0].mxu0
        %v2859 = vpop.f32.mrb[0].mxu0
        %v2860 = vadd.f32 0.0, %v2859
        %v2861 = vpop.f32.mrb[0].mxu0
        %2862 = vmatprep.mubr.bf16.mxu0 0
        %2863 = vmatmul.mubr.bf16.gmra.mrb[0].mxu0 %v860
        %v2864 = vpop.f32.mrb[0].mxu0
        %v2865 = vadd.f32 0.0, %v2864
        %v2866 = vpop.f32.mrb[0].mxu0
        %v2867 = vpop.f32.mrb[0].mxu0
        %v2868 = vadd.f32 0.0, %v2867
        %v2869 = vpop.f32.mrb[0].mxu0
        %2870 = vmatprep.mubr.bf16.mxu0 0
        %2871 = vmatmul.mubr.bf16.gmra.mrb[0].mxu0 %v861
        %v2872 = vpop.f32.mrb[0].mxu0
        %v2873 = vadd.f32 0.0, %v2872
        %v2874 = vpop.f32.mrb[0].mxu0
        %v2875 = vpop.f32.mrb[0].mxu0
        %v2876 = vadd.f32 0.0, %v2875
        %v2877 = vpop.f32.mrb[0].mxu0
        %2878 = vdwg.mxu0
        %v2879 = vld [vmem:[%s581] sm:$0x1]
        %v2880 = vld [vmem:[%s584] sm:$0x1]
        %2881 = vadd.xlane.f32.xlu0 %v2753
        %v2882 = vpop.xlane.xlu0 %2881
        %2883 = vadd.xlane.f32.xlu0 %v2756
        %v2884 = vpop.xlane.xlu0 %2883
        %2885 = vadd.xlane.f32.xlu0 %v2761
        %v2886 = vpop.xlane.xlu0 %2885
        %2887 = vadd.xlane.f32.xlu0 %v2764
        %v2888 = vpop.xlane.xlu0 %2887
        %2889 = vadd.xlane.f32.xlu0 %v2769
        %v2890 = vpop.xlane.xlu0 %2889
        %2891 = vadd.xlane.f32.xlu0 %v2772
        %v2892 = vpop.xlane.xlu0 %2891
        %2893 = vadd.xlane.f32.xlu0 %v2777
        %v2894 = vpop.xlane.xlu0 %2893
        %2895 = vadd.xlane.f32.xlu0 %v2780
        %v2896 = vpop.xlane.xlu0 %2895
        %2897 = vadd.xlane.f32.xlu0 %v2785
        %v2898 = vpop.xlane.xlu0 %2897
        %2899 = vadd.xlane.f32.xlu0 %v2788
        %v2900 = vpop.xlane.xlu0 %2899
        %2901 = vadd.xlane.f32.xlu0 %v2793
        %v2902 = vpop.xlane.xlu0 %2901
        %2903 = vadd.xlane.f32.xlu0 %v2796
        %v2904 = vpop.xlane.xlu0 %2903
        %2905 = vadd.xlane.f32.xlu0 %v2801
        %v2906 = vpop.xlane.xlu0 %2905
        %2907 = vadd.xlane.f32.xlu0 %v2804
        %v2908 = vpop.xlane.xlu0 %2907
        %2909 = vadd.xlane.f32.xlu0 %v2809
        %v2910 = vpop.xlane.xlu0 %2909
        %2911 = vadd.xlane.f32.xlu0 %v2812
        %v2912 = vpop.xlane.xlu0 %2911
        %2913 = vadd.xlane.f32.xlu0 %v2817
        %v2914 = vpop.xlane.xlu0 %2913
        %2915 = vadd.xlane.f32.xlu0 %v2820
        %v2916 = vpop.xlane.xlu0 %2915
        %2917 = vadd.xlane.f32.xlu0 %v2825
        %v2918 = vpop.xlane.xlu0 %2917
        %2919 = vadd.xlane.f32.xlu0 %v2828
        %v2920 = vpop.xlane.xlu0 %2919
        %2921 = vadd.xlane.f32.xlu0 %v2833
        %v2922 = vpop.xlane.xlu0 %2921
        %2923 = vadd.xlane.f32.xlu0 %v2836
        %v2924 = vpop.xlane.xlu0 %2923
        %2925 = vadd.xlane.f32.xlu0 %v2841
        %v2926 = vpop.xlane.xlu0 %2925
        %2927 = vadd.xlane.f32.xlu0 %v2844
        %v2928 = vpop.xlane.xlu0 %2927
        %2929 = vadd.xlane.f32.xlu0 %v2849
        %v2930 = vpop.xlane.xlu0 %2929
        %2931 = vadd.xlane.f32.xlu0 %v2852
        %v2932 = vpop.xlane.xlu0 %2931
        %2933 = vadd.xlane.f32.xlu0 %v2857
        %v2934 = vpop.xlane.xlu0 %2933
        %2935 = vadd.xlane.f32.xlu0 %v2860
        %v2936 = vpop.xlane.xlu0 %2935
        %2937 = vadd.xlane.f32.xlu0 %v2865
        %v2938 = vpop.xlane.xlu0 %2937
        %2939 = vadd.xlane.f32.xlu0 %v2868
        %v2940 = vpop.xlane.xlu0 %2939
        %2941 = vadd.xlane.f32.xlu0 %v2873
        %v2942 = vpop.xlane.xlu0 %2941
        %2943 = vadd.xlane.f32.xlu0 %v2876
        %v2944 = vpop.xlane.xlu0 %2943
        %v2945 = vmul.f32 %v2882, %v1402
        %v2946 = vmul.f32 %v2884, %v1402
        %v2947 = vmul.f32 %v2886, %v1402
        %v2948 = vmul.f32 %v2888, %v1402
        %v2949 = vmul.f32 %v2890, %v1402
        %v2950 = vmul.f32 %v2892, %v1402
        %v2951 = vmul.f32 %v2894, %v1402
        %v2952 = vmul.f32 %v2896, %v1402
        %v2953 = vmul.f32 %v2898, %v1402
        %v2954 = vmul.f32 %v2900, %v1402
        %v2955 = vmul.f32 %v2902, %v1402
        %v2956 = vmul.f32 %v2904, %v1402
        %v2957 = vmul.f32 %v2906, %v1402
        %v2958 = vmul.f32 %v2908, %v1402
        %v2959 = vmul.f32 %v2910, %v1402
        %v2960 = vmul.f32 %v2912, %v1402
        %v2961 = vmul.f32 %v2914, %v1402
        %v2962 = vmul.f32 %v2916, %v1402
        %v2963 = vmul.f32 %v2918, %v1402
        %v2964 = vmul.f32 %v2920, %v1402
        %v2965 = vmul.f32 %v2922, %v1402
        %v2966 = vmul.f32 %v2924, %v1402
        %v2967 = vmul.f32 %v2926, %v1402
        %v2968 = vmul.f32 %v2928, %v1402
        %v2969 = vmul.f32 %v2930, %v1402
        %v2970 = vmul.f32 %v2932, %v1402
        %v2971 = vmul.f32 %v2934, %v1402
        %v2972 = vmul.f32 %v2936, %v1402
        %v2973 = vmul.f32 %v2938, %v1402
        %v2974 = vmul.f32 %v2940, %v1402
        %v2975 = vmul.f32 %v2942, %v1402
        %v2976 = vmul.f32 %v2944, %v1402
        %v2977 = vsub.f32 %v2753, %v2945
        %v2978 = vsub.f32 %v2756, %v2946
        %v2979 = vsub.f32 %v2761, %v2947
        %v2980 = vsub.f32 %v2764, %v2948
        %v2981 = vsub.f32 %v2769, %v2949
        %v2982 = vsub.f32 %v2772, %v2950
        %v2983 = vsub.f32 %v2777, %v2951
        %v2984 = vsub.f32 %v2780, %v2952
        %v2985 = vsub.f32 %v2785, %v2953
        %v2986 = vsub.f32 %v2788, %v2954
        %v2987 = vsub.f32 %v2793, %v2955
        %v2988 = vsub.f32 %v2796, %v2956
        %v2989 = vsub.f32 %v2801, %v2957
        %v2990 = vsub.f32 %v2804, %v2958
        %v2991 = vsub.f32 %v2809, %v2959
        %v2992 = vsub.f32 %v2812, %v2960
        %v2993 = vsub.f32 %v2817, %v2961
        %v2994 = vsub.f32 %v2820, %v2962
        %v2995 = vsub.f32 %v2825, %v2963
        %v2996 = vsub.f32 %v2828, %v2964
        %v2997 = vsub.f32 %v2833, %v2965
        %v2998 = vsub.f32 %v2836, %v2966
        %v2999 = vsub.f32 %v2841, %v2967
        %v3000 = vsub.f32 %v2844, %v2968
        %v3001 = vsub.f32 %v2849, %v2969
        %v3002 = vsub.f32 %v2852, %v2970
        %v3003 = vsub.f32 %v2857, %v2971
        %v3004 = vsub.f32 %v2860, %v2972
        %v3005 = vsub.f32 %v2865, %v2973
        %v3006 = vsub.f32 %v2868, %v2974
        %v3007 = vsub.f32 %v2873, %v2975
        %v3008 = vsub.f32 %v2876, %v2976
        %v3009 = vmul.f32 %v2977, %v2977
        %v3010 = vmul.f32 %v2978, %v2978
        %v3011 = vmul.f32 %v2979, %v2979
        %v3012 = vmul.f32 %v2980, %v2980
        %v3013 = vmul.f32 %v2981, %v2981
        %v3014 = vmul.f32 %v2982, %v2982
        %v3015 = vmul.f32 %v2983, %v2983
        %v3016 = vmul.f32 %v2984, %v2984
        %v3017 = vmul.f32 %v2985, %v2985
        %v3018 = vmul.f32 %v2986, %v2986
        %v3019 = vmul.f32 %v2987, %v2987
        %v3020 = vmul.f32 %v2988, %v2988
        %v3021 = vmul.f32 %v2989, %v2989
        %v3022 = vmul.f32 %v2990, %v2990
        %v3023 = vmul.f32 %v2991, %v2991
        %v3024 = vmul.f32 %v2992, %v2992
        %v3025 = vmul.f32 %v2993, %v2993
        %v3026 = vmul.f32 %v2994, %v2994
        %v3027 = vmul.f32 %v2995, %v2995
        %v3028 = vmul.f32 %v2996, %v2996
        %v3029 = vmul.f32 %v2997, %v2997
        %v3030 = vmul.f32 %v2998, %v2998
        %v3031 = vmul.f32 %v2999, %v2999
        %v3032 = vmul.f32 %v3000, %v3000
        %v3033 = vmul.f32 %v3001, %v3001
        %v3034 = vmul.f32 %v3002, %v3002
        %v3035 = vmul.f32 %v3003, %v3003
        %v3036 = vmul.f32 %v3004, %v3004
        %v3037 = vmul.f32 %v3005, %v3005
        %v3038 = vmul.f32 %v3006, %v3006
        %v3039 = vmul.f32 %v3007, %v3007
        %v3040 = vmul.f32 %v3008, %v3008
        %3041 = vadd.xlane.f32.xlu0 %v3009
        %v3042 = vpop.xlane.xlu0 %3041
        %3043 = vadd.xlane.f32.xlu0 %v3010
        %v3044 = vpop.xlane.xlu0 %3043
        %3045 = vadd.xlane.f32.xlu0 %v3011
        %v3046 = vpop.xlane.xlu0 %3045
        %3047 = vadd.xlane.f32.xlu0 %v3012
        %v3048 = vpop.xlane.xlu0 %3047
        %3049 = vadd.xlane.f32.xlu0 %v3013
        %v3050 = vpop.xlane.xlu0 %3049
        %3051 = vadd.xlane.f32.xlu0 %v3014
        %v3052 = vpop.xlane.xlu0 %3051
        %3053 = vadd.xlane.f32.xlu0 %v3015
        %v3054 = vpop.xlane.xlu0 %3053
        %3055 = vadd.xlane.f32.xlu0 %v3016
        %v3056 = vpop.xlane.xlu0 %3055
        %3057 = vadd.xlane.f32.xlu0 %v3017
        %v3058 = vpop.xlane.xlu0 %3057
        %3059 = vadd.xlane.f32.xlu0 %v3018
        %v3060 = vpop.xlane.xlu0 %3059
        %3061 = vadd.xlane.f32.xlu0 %v3019
        %v3062 = vpop.xlane.xlu0 %3061
        %3063 = vadd.xlane.f32.xlu0 %v3020
        %v3064 = vpop.xlane.xlu0 %3063
        %3065 = vadd.xlane.f32.xlu0 %v3021
        %v3066 = vpop.xlane.xlu0 %3065
        %3067 = vadd.xlane.f32.xlu0 %v3022
        %v3068 = vpop.xlane.xlu0 %3067
        %3069 = vadd.xlane.f32.xlu0 %v3023
        %v3070 = vpop.xlane.xlu0 %3069
        %3071 = vadd.xlane.f32.xlu0 %v3024
        %v3072 = vpop.xlane.xlu0 %3071
        %3073 = vadd.xlane.f32.xlu0 %v3025
        %v3074 = vpop.xlane.xlu0 %3073
        %3075 = vadd.xlane.f32.xlu0 %v3026
        %v3076 = vpop.xlane.xlu0 %3075
        %3077 = vadd.xlane.f32.xlu0 %v3027
        %v3078 = vpop.xlane.xlu0 %3077
        %3079 = vadd.xlane.f32.xlu0 %v3028
        %v3080 = vpop.xlane.xlu0 %3079
        %3081 = vadd.xlane.f32.xlu0 %v3029
        %v3082 = vpop.xlane.xlu0 %3081
        %3083 = vadd.xlane.f32.xlu0 %v3030
        %v3084 = vpop.xlane.xlu0 %3083
        %3085 = vadd.xlane.f32.xlu0 %v3031
        %v3086 = vpop.xlane.xlu0 %3085
        %3087 = vadd.xlane.f32.xlu0 %v3032
        %v3088 = vpop.xlane.xlu0 %3087
        %3089 = vadd.xlane.f32.xlu0 %v3033
        %v3090 = vpop.xlane.xlu0 %3089
        %3091 = vadd.xlane.f32.xlu0 %v3034
        %v3092 = vpop.xlane.xlu0 %3091
        %3093 = vadd.xlane.f32.xlu0 %v3035
        %v3094 = vpop.xlane.xlu0 %3093
        %3095 = vadd.xlane.f32.xlu0 %v3036
        %v3096 = vpop.xlane.xlu0 %3095
        %3097 = vadd.xlane.f32.xlu0 %v3037
        %v3098 = vpop.xlane.xlu0 %3097
        %3099 = vadd.xlane.f32.xlu0 %v3038
        %v3100 = vpop.xlane.xlu0 %3099
        %3101 = vadd.xlane.f32.xlu0 %v3039
        %v3102 = vpop.xlane.xlu0 %3101
        %3103 = vadd.xlane.f32.xlu0 %v3040
        %v3104 = vpop.xlane.xlu0 %3103
        %v3105 = vmul.f32 %v3042, %v1402
        %v3106 = vmul.f32 %v3044, %v1402
        %v3107 = vmul.f32 %v3046, %v1402
        %v3108 = vmul.f32 %v3048, %v1402
        %v3109 = vmul.f32 %v3050, %v1402
        %v3110 = vmul.f32 %v3052, %v1402
        %v3111 = vmul.f32 %v3054, %v1402
        %v3112 = vmul.f32 %v3056, %v1402
        %v3113 = vmul.f32 %v3058, %v1402
        %v3114 = vmul.f32 %v3060, %v1402
        %v3115 = vmul.f32 %v3062, %v1402
        %v3116 = vmul.f32 %v3064, %v1402
        %v3117 = vmul.f32 %v3066, %v1402
        %v3118 = vmul.f32 %v3068, %v1402
        %v3119 = vmul.f32 %v3070, %v1402
        %v3120 = vmul.f32 %v3072, %v1402
        %v3121 = vmul.f32 %v3074, %v1402
        %v3122 = vmul.f32 %v3076, %v1402
        %v3123 = vmul.f32 %v3078, %v1402
        %v3124 = vmul.f32 %v3080, %v1402
        %v3125 = vmul.f32 %v3082, %v1402
        %v3126 = vmul.f32 %v3084, %v1402
        %v3127 = vmul.f32 %v3086, %v1402
        %v3128 = vmul.f32 %v3088, %v1402
        %v3129 = vmul.f32 %v3090, %v1402
        %v3130 = vmul.f32 %v3092, %v1402
        %v3131 = vmul.f32 %v3094, %v1402
        %v3132 = vmul.f32 %v3096, %v1402
        %v3133 = vmul.f32 %v3098, %v1402
        %v3134 = vmul.f32 %v3100, %v1402
        %v3135 = vmul.f32 %v3102, %v1402
        %v3136 = vmul.f32 %v3104, %v1402
        %v3137 = vadd.f32 %v3105, 1e-05
        %v3138 = vadd.f32 %v3106, 1e-05
        %v3139 = vadd.f32 %v3107, 1e-05
        %v3140 = vadd.f32 %v3108, 1e-05
        %v3141 = vadd.f32 %v3109, 1e-05
        %v3142 = vadd.f32 %v3110, 1e-05
        %v3143 = vadd.f32 %v3111, 1e-05
        %v3144 = vadd.f32 %v3112, 1e-05
        %v3145 = vadd.f32 %v3113, 1e-05
        %v3146 = vadd.f32 %v3114, 1e-05
        %v3147 = vadd.f32 %v3115, 1e-05
        %v3148 = vadd.f32 %v3116, 1e-05
        %v3149 = vadd.f32 %v3117, 1e-05
        %v3150 = vadd.f32 %v3118, 1e-05
        %v3151 = vadd.f32 %v3119, 1e-05
        %v3152 = vadd.f32 %v3120, 1e-05
        %v3153 = vadd.f32 %v3121, 1e-05
        %v3154 = vadd.f32 %v3122, 1e-05
        %v3155 = vadd.f32 %v3123, 1e-05
        %v3156 = vadd.f32 %v3124, 1e-05
        %v3157 = vadd.f32 %v3125, 1e-05
        %v3158 = vadd.f32 %v3126, 1e-05
        %v3159 = vadd.f32 %v3127, 1e-05
        %v3160 = vadd.f32 %v3128, 1e-05
        %v3161 = vadd.f32 %v3129, 1e-05
        %v3162 = vadd.f32 %v3130, 1e-05
        %v3163 = vadd.f32 %v3131, 1e-05
        %v3164 = vadd.f32 %v3132, 1e-05
        %v3165 = vadd.f32 %v3133, 1e-05
        %v3166 = vadd.f32 %v3134, 1e-05
        %v3167 = vadd.f32 %v3135, 1e-05
        %v3168 = vadd.f32 %v3136, 1e-05
        %v3169 = vrsqrt.pop %v3137
        %v3170 = vrsqrt.pop %v3138
        %v3171 = vrsqrt.pop %v3139
        %v3172 = vrsqrt.pop %v3140
        %v3173 = vrsqrt.pop %v3141
        %v3174 = vrsqrt.pop %v3142
        %v3175 = vrsqrt.pop %v3143
        %v3176 = vrsqrt.pop %v3144
        %v3177 = vrsqrt.pop %v3145
        %v3178 = vrsqrt.pop %v3146
        %v3179 = vrsqrt.pop %v3147
        %v3180 = vrsqrt.pop %v3148
        %v3181 = vrsqrt.pop %v3149
        %v3182 = vrsqrt.pop %v3150
        %v3183 = vrsqrt.pop %v3151
        %v3184 = vrsqrt.pop %v3152
        %v3185 = vrsqrt.pop %v3153
        %v3186 = vrsqrt.pop %v3154
        %v3187 = vrsqrt.pop %v3155
        %v3188 = vrsqrt.pop %v3156
        %v3189 = vrsqrt.pop %v3157
        %v3190 = vrsqrt.pop %v3158
        %v3191 = vrsqrt.pop %v3159
        %v3192 = vrsqrt.pop %v3160
        %v3193 = vrsqrt.pop %v3161
        %v3194 = vrsqrt.pop %v3162
        %v3195 = vrsqrt.pop %v3163
        %v3196 = vrsqrt.pop %v3164
        %v3197 = vrsqrt.pop %v3165
        %v3198 = vrsqrt.pop %v3166
        %v3199 = vrsqrt.pop %v3167
        %v3200 = vrsqrt.pop %v3168
        %v3201 = vmul.f32 %v2977, %v3169
        %v3202 = vmul.f32 %v2978, %v3170
        %v3203 = vmul.f32 %v2979, %v3171
        %v3204 = vmul.f32 %v2980, %v3172
        %v3205 = vmul.f32 %v2981, %v3173
        %v3206 = vmul.f32 %v2982, %v3174
        %v3207 = vmul.f32 %v2983, %v3175
        %v3208 = vmul.f32 %v2984, %v3176
        %v3209 = vmul.f32 %v2985, %v3177
        %v3210 = vmul.f32 %v2986, %v3178
        %v3211 = vmul.f32 %v2987, %v3179
        %v3212 = vmul.f32 %v2988, %v3180
        %v3213 = vmul.f32 %v2989, %v3181
        %v3214 = vmul.f32 %v2990, %v3182
        %v3215 = vmul.f32 %v2991, %v3183
        %v3216 = vmul.f32 %v2992, %v3184
        %v3217 = vmul.f32 %v2993, %v3185
        %v3218 = vmul.f32 %v2994, %v3186
        %v3219 = vmul.f32 %v2995, %v3187
        %v3220 = vmul.f32 %v2996, %v3188
        %v3221 = vmul.f32 %v2997, %v3189
        %v3222 = vmul.f32 %v2998, %v3190
        %v3223 = vmul.f32 %v2999, %v3191
        %v3224 = vmul.f32 %v3000, %v3192
        %v3225 = vmul.f32 %v3001, %v3193
        %v3226 = vmul.f32 %v3002, %v3194
        %v3227 = vmul.f32 %v3003, %v3195
        %v3228 = vmul.f32 %v3004, %v3196
        %v3229 = vmul.f32 %v3005, %v3197
        %v3230 = vmul.f32 %v3006, %v3198
        %v3231 = vmul.f32 %v3007, %v3199
        %v3232 = vmul.f32 %v3008, %v3200
        %v3234 = vlaneseq
        %v3235 = vshrl.u32 %v3234, 7
        %v3236 = vsub.s32 0, %v3235
        %v3237 = vrot.slane %v2879, %v3236
        %v3239 = vmul.f32 %v3201, %v3237
        %v3240 = vmul.f32 %v3202, %v3237
        %v3241 = vmul.f32 %v3203, %v3237
        %v3242 = vmul.f32 %v3204, %v3237
        %v3243 = vmul.f32 %v3205, %v3237
        %v3244 = vmul.f32 %v3206, %v3237
        %v3245 = vmul.f32 %v3207, %v3237
        %v3246 = vmul.f32 %v3208, %v3237
        %v3247 = vmul.f32 %v3209, %v3237
        %v3248 = vmul.f32 %v3210, %v3237
        %v3249 = vmul.f32 %v3211, %v3237
        %v3250 = vmul.f32 %v3212, %v3237
        %v3251 = vmul.f32 %v3213, %v3237
        %v3252 = vmul.f32 %v3214, %v3237
        %v3253 = vmul.f32 %v3215, %v3237
        %v3254 = vmul.f32 %v3216, %v3237
        %v3255 = vmul.f32 %v3217, %v3237
        %v3256 = vmul.f32 %v3218, %v3237
        %v3257 = vmul.f32 %v3219, %v3237
        %v3258 = vmul.f32 %v3220, %v3237
        %v3259 = vmul.f32 %v3221, %v3237
        %v3260 = vmul.f32 %v3222, %v3237
        %v3261 = vmul.f32 %v3223, %v3237
        %v3262 = vmul.f32 %v3224, %v3237
        %v3263 = vmul.f32 %v3225, %v3237
        %v3264 = vmul.f32 %v3226, %v3237
        %v3265 = vmul.f32 %v3227, %v3237
        %v3266 = vmul.f32 %v3228, %v3237
        %v3267 = vmul.f32 %v3229, %v3237
        %v3268 = vmul.f32 %v3230, %v3237
        %v3269 = vmul.f32 %v3231, %v3237
        %v3270 = vmul.f32 %v3232, %v3237
        %v3272 = vlaneseq
        %v3273 = vshrl.u32 %v3272, 7
        %v3274 = vsub.s32 0, %v3273
        %v3275 = vrot.slane %v2880, %v3274
        %v3277 = vadd.f32 %v3239, %v3275
        %v3278 = vadd.f32 %v3240, %v3275
        %v3279 = vadd.f32 %v3241, %v3275
        %v3280 = vadd.f32 %v3242, %v3275
        %v3281 = vadd.f32 %v3243, %v3275
        %v3282 = vadd.f32 %v3244, %v3275
        %v3283 = vadd.f32 %v3245, %v3275
        %v3284 = vadd.f32 %v3246, %v3275
        %v3285 = vadd.f32 %v3247, %v3275
        %v3286 = vadd.f32 %v3248, %v3275
        %v3287 = vadd.f32 %v3249, %v3275
        %v3288 = vadd.f32 %v3250, %v3275
        %v3289 = vadd.f32 %v3251, %v3275
        %v3290 = vadd.f32 %v3252, %v3275
        %v3291 = vadd.f32 %v3253, %v3275
        %v3292 = vadd.f32 %v3254, %v3275
        %v3293 = vadd.f32 %v3255, %v3275
        %v3294 = vadd.f32 %v3256, %v3275
        %v3295 = vadd.f32 %v3257, %v3275
        %v3296 = vadd.f32 %v3258, %v3275
        %v3297 = vadd.f32 %v3259, %v3275
        %v3298 = vadd.f32 %v3260, %v3275
        %v3299 = vadd.f32 %v3261, %v3275
        %v3300 = vadd.f32 %v3262, %v3275
        %v3301 = vadd.f32 %v3263, %v3275
        %v3302 = vadd.f32 %v3264, %v3275
        %v3303 = vadd.f32 %v3265, %v3275
        %v3304 = vadd.f32 %v3266, %v3275
        %v3305 = vadd.f32 %v3267, %v3275
        %v3306 = vadd.f32 %v3268, %v3275
        %v3307 = vadd.f32 %v3269, %v3275
        %v3308 = vadd.f32 %v3270, %v3275
        %vm3309 = vcmp.ge.f32.partialorder %v3277, 0.0
        %vm3310 = vcmp.ge.f32.partialorder %v3278, 0.0
        %vm3311 = vcmp.ge.f32.partialorder %v3279, 0.0
        %vm3312 = vcmp.ge.f32.partialorder %v3280, 0.0
        %vm3313 = vcmp.ge.f32.partialorder %v3281, 0.0
        %vm3314 = vcmp.ge.f32.partialorder %v3282, 0.0
        %vm3315 = vcmp.ge.f32.partialorder %v3283, 0.0
        %vm3316 = vcmp.ge.f32.partialorder %v3284, 0.0
        %vm3317 = vcmp.ge.f32.partialorder %v3285, 0.0
        %vm3318 = vcmp.ge.f32.partialorder %v3286, 0.0
        %vm3319 = vcmp.ge.f32.partialorder %v3287, 0.0
        %vm3320 = vcmp.ge.f32.partialorder %v3288, 0.0
        %vm3321 = vcmp.ge.f32.partialorder %v3289, 0.0
        %vm3322 = vcmp.ge.f32.partialorder %v3290, 0.0
        %vm3323 = vcmp.ge.f32.partialorder %v3291, 0.0
        %vm3324 = vcmp.ge.f32.partialorder %v3292, 0.0
        %vm3325 = vcmp.ge.f32.partialorder %v3293, 0.0
        %vm3326 = vcmp.ge.f32.partialorder %v3294, 0.0
        %vm3327 = vcmp.ge.f32.partialorder %v3295, 0.0
        %vm3328 = vcmp.ge.f32.partialorder %v3296, 0.0
        %vm3329 = vcmp.ge.f32.partialorder %v3297, 0.0
        %vm3330 = vcmp.ge.f32.partialorder %v3298, 0.0
        %vm3331 = vcmp.ge.f32.partialorder %v3299, 0.0
        %vm3332 = vcmp.ge.f32.partialorder %v3300, 0.0
        %vm3333 = vcmp.ge.f32.partialorder %v3301, 0.0
        %vm3334 = vcmp.ge.f32.partialorder %v3302, 0.0
        %vm3335 = vcmp.ge.f32.partialorder %v3303, 0.0
        %vm3336 = vcmp.ge.f32.partialorder %v3304, 0.0
        %vm3337 = vcmp.ge.f32.partialorder %v3305, 0.0
        %vm3338 = vcmp.ge.f32.partialorder %v3306, 0.0
        %vm3339 = vcmp.ge.f32.partialorder %v3307, 0.0
        %vm3340 = vcmp.ge.f32.partialorder %v3308, 0.0
        %v3341 = vmul.f32 %v3277, 0.2
        %v3342 = vmul.f32 %v3278, 0.2
        %v3343 = vmul.f32 %v3279, 0.2
        %v3344 = vmul.f32 %v3280, 0.2
        %v3345 = vmul.f32 %v3281, 0.2
        %v3346 = vmul.f32 %v3282, 0.2
        %v3347 = vmul.f32 %v3283, 0.2
        %v3348 = vmul.f32 %v3284, 0.2
        %v3349 = vmul.f32 %v3285, 0.2
        %v3350 = vmul.f32 %v3286, 0.2
        %v3351 = vmul.f32 %v3287, 0.2
        %v3352 = vmul.f32 %v3288, 0.2
        %v3353 = vmul.f32 %v3289, 0.2
        %v3354 = vmul.f32 %v3290, 0.2
        %v3355 = vmul.f32 %v3291, 0.2
        %v3356 = vmul.f32 %v3292, 0.2
        %v3357 = vmul.f32 %v3293, 0.2
        %v3358 = vmul.f32 %v3294, 0.2
        %v3359 = vmul.f32 %v3295, 0.2
        %v3360 = vmul.f32 %v3296, 0.2
        %v3361 = vmul.f32 %v3297, 0.2
        %v3362 = vmul.f32 %v3298, 0.2
        %v3363 = vmul.f32 %v3299, 0.2
        %v3364 = vmul.f32 %v3300, 0.2
        %v3365 = vmul.f32 %v3301, 0.2
        %v3366 = vmul.f32 %v3302, 0.2
        %v3367 = vmul.f32 %v3303, 0.2
        %v3368 = vmul.f32 %v3304, 0.2
        %v3369 = vmul.f32 %v3305, 0.2
        %v3370 = vmul.f32 %v3306, 0.2
        %v3371 = vmul.f32 %v3307, 0.2
        %v3372 = vmul.f32 %v3308, 0.2
        %v3373 = vsel %vm3309, %v3277, %v3341
        %v3374 = vsel %vm3310, %v3278, %v3342
        %v3375 = vsel %vm3311, %v3279, %v3343
        %v3376 = vsel %vm3312, %v3280, %v3344
        %v3377 = vsel %vm3313, %v3281, %v3345
        %v3378 = vsel %vm3314, %v3282, %v3346
        %v3379 = vsel %vm3315, %v3283, %v3347
        %v3380 = vsel %vm3316, %v3284, %v3348
        %v3381 = vsel %vm3317, %v3285, %v3349
        %v3382 = vsel %vm3318, %v3286, %v3350
        %v3383 = vsel %vm3319, %v3287, %v3351
        %v3384 = vsel %vm3320, %v3288, %v3352
        %v3385 = vsel %vm3321, %v3289, %v3353
        %v3386 = vsel %vm3322, %v3290, %v3354
        %v3387 = vsel %vm3323, %v3291, %v3355
        %v3388 = vsel %vm3324, %v3292, %v3356
        %v3389 = vsel %vm3325, %v3293, %v3357
        %v3390 = vsel %vm3326, %v3294, %v3358
        %v3391 = vsel %vm3327, %v3295, %v3359
        %v3392 = vsel %vm3328, %v3296, %v3360
        %v3393 = vsel %vm3329, %v3297, %v3361
        %v3394 = vsel %vm3330, %v3298, %v3362
        %v3395 = vsel %vm3331, %v3299, %v3363
        %v3396 = vsel %vm3332, %v3300, %v3364
        %v3397 = vsel %vm3333, %v3301, %v3365
        %v3398 = vsel %vm3334, %v3302, %v3366
        %v3399 = vsel %vm3335, %v3303, %v3367
        %v3400 = vsel %vm3336, %v3304, %v3368
        %v3401 = vsel %vm3337, %v3305, %v3369
        %v3402 = vsel %vm3338, %v3306, %v3370
        %v3403 = vsel %vm3339, %v3307, %v3371
        %v3404 = vsel %vm3340, %v3308, %v3372
        %p3405 = scmp.eq.s32.totalorder %s28, 1
        %s3406 = scalar_select %p3405, 0.33333334, 1.0
        %v3407 = vadd.f32 %v862, %v2214
        %v3408 = vadd.f32 %v863, %v2215
        %v3409 = vadd.f32 %v864, %v2216
        %v3410 = vadd.f32 %v865, %v2217
        %v3411 = vadd.f32 %v866, %v2218
        %v3412 = vadd.f32 %v867, %v2219
        %v3413 = vadd.f32 %v868, %v2220
        %v3414 = vadd.f32 %v869, %v2221
        %v3415 = vadd.f32 %v870, %v2222
        %v3416 = vadd.f32 %v871, %v2223
        %v3417 = vadd.f32 %v872, %v2224
        %v3418 = vadd.f32 %v873, %v2225
        %v3419 = vadd.f32 %v874, %v2226
        %v3420 = vadd.f32 %v875, %v2227
        %v3421 = vadd.f32 %v876, %v2228
        %v3422 = vadd.f32 %v877, %v2229
        %v3423 = vstv %s3406
        %v3424 = vmul.f32 %v3407, %v3423
        %v3425 = vmul.f32 %v3408, %v3423
        %v3426 = vmul.f32 %v3409, %v3423
        %v3427 = vmul.f32 %v3410, %v3423
        %v3428 = vmul.f32 %v3411, %v3423
        %v3429 = vmul.f32 %v3412, %v3423
        %v3430 = vmul.f32 %v3413, %v3423
        %v3431 = vmul.f32 %v3414, %v3423
        %v3432 = vmul.f32 %v3415, %v3423
        %v3433 = vmul.f32 %v3416, %v3423
        %v3434 = vmul.f32 %v3417, %v3423
        %v3435 = vmul.f32 %v3418, %v3423
        %v3436 = vmul.f32 %v3419, %v3423
        %v3437 = vmul.f32 %v3420, %v3423
        %v3438 = vmul.f32 %v3421, %v3423
        %v3439 = vmul.f32 %v3422, %v3423
        %3440 = vst [vmem:[#allocation3] sm:$0xff] %v3424
        %3441 = vst [vmem:[#allocation3 + $0x8] sm:$0xff] %v3425
        %3442 = vst [vmem:[#allocation3 + $0x10] sm:$0xff] %v3426
        %3443 = vst [vmem:[#allocation3 + $0x18] sm:$0xff] %v3427
        %3444 = vst [vmem:[#allocation3 + $0x20] sm:$0xff] %v3428
        %3445 = vst [vmem:[#allocation3 + $0x28] sm:$0xff] %v3429
        %3446 = vst [vmem:[#allocation3 + $0x30] sm:$0xff] %v3430
        %3447 = vst [vmem:[#allocation3 + $0x38] sm:$0xff] %v3431
        %3448 = vst [vmem:[#allocation3 + $0x40] sm:$0xff] %v3432
        %3449 = vst [vmem:[#allocation3 + $0x48] sm:$0xff] %v3433
        %3450 = vst [vmem:[#allocation3 + $0x50] sm:$0xff] %v3434
        %3451 = vst [vmem:[#allocation3 + $0x58] sm:$0xff] %v3435
        %3452 = vst [vmem:[#allocation3 + $0x60] sm:$0xff] %v3436
        %3453 = vst [vmem:[#allocation3 + $0x68] sm:$0xff] %v3437
        %3454 = vst [vmem:[#allocation3 + $0x70] sm:$0xff] %v3438
        %3455 = vst [vmem:[#allocation3 + $0x78] sm:$0xff] %v3439
        %v3456 = vadd.f32 %v878, %v3373
        %v3457 = vadd.f32 %v879, %v3374
        %v3458 = vadd.f32 %v880, %v3375
        %v3459 = vadd.f32 %v881, %v3376
        %v3460 = vadd.f32 %v882, %v3377
        %v3461 = vadd.f32 %v883, %v3378
        %v3462 = vadd.f32 %v884, %v3379
        %v3463 = vadd.f32 %v885, %v3380
        %v3464 = vadd.f32 %v886, %v3381
        %v3465 = vadd.f32 %v887, %v3382
        %v3466 = vadd.f32 %v888, %v3383
        %v3467 = vadd.f32 %v889, %v3384
        %v3468 = vadd.f32 %v890, %v3385
        %v3469 = vadd.f32 %v891, %v3386
        %v3470 = vadd.f32 %v892, %v3387
        %v3471 = vadd.f32 %v893, %v3388
        %v3472 = vadd.f32 %v894, %v3389
        %v3473 = vadd.f32 %v895, %v3390
        %v3474 = vadd.f32 %v896, %v3391
        %v3475 = vadd.f32 %v897, %v3392
        %v3476 = vadd.f32 %v898, %v3393
        %v3477 = vadd.f32 %v899, %v3394
        %v3478 = vadd.f32 %v900, %v3395
        %v3479 = vadd.f32 %v901, %v3396
        %v3480 = vadd.f32 %v902, %v3397
        %v3481 = vadd.f32 %v903, %v3398
        %v3482 = vadd.f32 %v904, %v3399
        %v3483 = vadd.f32 %v905, %v3400
        %v3484 = vadd.f32 %v906, %v3401
        %v3485 = vadd.f32 %v907, %v3402
        %v3486 = vadd.f32 %v908, %v3403
        %v3487 = vadd.f32 %v909, %v3404
        %v3488 = vmul.f32 %v3456, %v3423
        %v3489 = vmul.f32 %v3457, %v3423
        %v3490 = vmul.f32 %v3458, %v3423
        %v3491 = vmul.f32 %v3459, %v3423
        %v3492 = vmul.f32 %v3460, %v3423
        %v3493 = vmul.f32 %v3461, %v3423
        %v3494 = vmul.f32 %v3462, %v3423
        %v3495 = vmul.f32 %v3463, %v3423
        %v3496 = vmul.f32 %v3464, %v3423
        %v3497 = vmul.f32 %v3465, %v3423
        %v3498 = vmul.f32 %v3466, %v3423
        %v3499 = vmul.f32 %v3467, %v3423
        %v3500 = vmul.f32 %v3468, %v3423
        %v3501 = vmul.f32 %v3469, %v3423
        %v3502 = vmul.f32 %v3470, %v3423
        %v3503 = vmul.f32 %v3471, %v3423
        %v3504 = vmul.f32 %v3472, %v3423
        %v3505 = vmul.f32 %v3473, %v3423
        %v3506 = vmul.f32 %v3474, %v3423
        %v3507 = vmul.f32 %v3475, %v3423
        %v3508 = vmul.f32 %v3476, %v3423
        %v3509 = vmul.f32 %v3477, %v3423
        %v3510 = vmul.f32 %v3478, %v3423
        %v3511 = vmul.f32 %v3479, %v3423
        %v3512 = vmul.f32 %v3480, %v3423
        %v3513 = vmul.f32 %v3481, %v3423
        %v3514 = vmul.f32 %v3482, %v3423
        %v3515 = vmul.f32 %v3483, %v3423
        %v3516 = vmul.f32 %v3484, %v3423
        %v3517 = vmul.f32 %v3485, %v3423
        %v3518 = vmul.f32 %v3486, %v3423
        %v3519 = vmul.f32 %v3487, %v3423
        %3520 = vst [vmem:[#allocation5] sm:$0xff] %v3488
        %3521 = vst [vmem:[#allocation5 + $0x8] sm:$0xff] %v3489
        %3522 = vst [vmem:[#allocation5 + $0x10] sm:$0xff] %v3490
        %3523 = vst [vmem:[#allocation5 + $0x18] sm:$0xff] %v3491
        %3524 = vst [vmem:[#allocation5 + $0x20] sm:$0xff] %v3492
        %3525 = vst [vmem:[#allocation5 + $0x28] sm:$0xff] %v3493
        %3526 = vst [vmem:[#allocation5 + $0x30] sm:$0xff] %v3494
        %3527 = vst [vmem:[#allocation5 + $0x38] sm:$0xff] %v3495
        %3528 = vst [vmem:[#allocation5 + $0x40] sm:$0xff] %v3496
        %3529 = vst [vmem:[#allocation5 + $0x48] sm:$0xff] %v3497
        %3530 = vst [vmem:[#allocation5 + $0x50] sm:$0xff] %v3498
        %3531 = vst [vmem:[#allocation5 + $0x58] sm:$0xff] %v3499
        %3532 = vst [vmem:[#allocation5 + $0x60] sm:$0xff] %v3500
        %3533 = vst [vmem:[#allocation5 + $0x68] sm:$0xff] %v3501
        %3534 = vst [vmem:[#allocation5 + $0x70] sm:$0xff] %v3502
        %3535 = vst [vmem:[#allocation5 + $0x78] sm:$0xff] %v3503
        %3536 = vst [vmem:[#allocation5 + $0x80] sm:$0xff] %v3504
        %3537 = vst [vmem:[#allocation5 + $0x88] sm:$0xff] %v3505
        %3538 = vst [vmem:[#allocation5 + $0x90] sm:$0xff] %v3506
        %3539 = vst [vmem:[#allocation5 + $0x98] sm:$0xff] %v3507
        %3540 = vst [vmem:[#allocation5 + $0xa0] sm:$0xff] %v3508
        %3541 = vst [vmem:[#allocation5 + $0xa8] sm:$0xff] %v3509
        %3542 = vst [vmem:[#allocation5 + $0xb0] sm:$0xff] %v3510
        %3543 = vst [vmem:[#allocation5 + $0xb8] sm:$0xff] %v3511
        %3544 = vst [vmem:[#allocation5 + $0xc0] sm:$0xff] %v3512
        %3545 = vst [vmem:[#allocation5 + $0xc8] sm:$0xff] %v3513
        %3546 = vst [vmem:[#allocation5 + $0xd0] sm:$0xff] %v3514
        %3547 = vst [vmem:[#allocation5 + $0xd8] sm:$0xff] %v3515
        %3548 = vst [vmem:[#allocation5 + $0xe0] sm:$0xff] %v3516
        %3549 = vst [vmem:[#allocation5 + $0xe8] sm:$0xff] %v3517
        %3550 = vst [vmem:[#allocation5 + $0xf0] sm:$0xff] %v3518
        %3551 = vst [vmem:[#allocation5 + $0xf8] sm:$0xff] %v3519
        // Predicated region
        $region77: #{hgnn_model_forward_cf.5} parent=71 // pred_check
          %p3552 = pneg %p364
        $region78: #{hgnn_model_forward_cf.5} parent=71 // pred_check_branch
          %3554 = sbr.rel (%p3552) target = $region80
        $region79: #{hgnn_model_forward_cf.5} parent=71 // pred_region
          %s3556 = ssub.s32 2048, 2048
          %3557 = vsyncadd [#allocation4], %s3556
          %s3558 = sshll.u32 [#allocation3], 4
          %s3559 = int_to_ptr.vmem [resolvable:$true] %s3558
          %3564 = dma.vmem_to_hbm [thread:$0]  %s3559, 2048, %s13, [#allocation4], 128, 128, 8
        $region80: #{hgnn_model_forward_cf.5} parent=71 // pred_fallthru
          _
        // Predicated region
        $region81: #{hgnn_model_forward_cf.5} parent=71 // pred_check
          %p3565 = pneg %p385
        $region82: #{hgnn_model_forward_cf.5} parent=71 // pred_check_branch
          %3567 = sbr.rel (%p3565) target = $region84
        $region83: #{hgnn_model_forward_cf.5} parent=71 // pred_region
          %s3569 = ssub.s32 4096, 4096
          %3570 = vsyncadd [#allocation6], %s3569
          %s3571 = sshll.u32 [#allocation5], 4
          %s3572 = int_to_ptr.vmem [resolvable:$true] %s3571
          %3577 = dma.vmem_to_hbm [thread:$0]  %s3572, 4096, %s14, [#allocation6], 128, 128, 8
        $region84: #{hgnn_model_forward_cf.5} parent=71 // pred_fallthru
          _
        // Predicated region
        $region85: #{hgnn_model_forward_cf.5} parent=71 // pred_check
          %p3578 = pneg %p364
        $region86: #{hgnn_model_forward_cf.5} parent=71 // pred_check_branch
          %3580 = sbr.rel (%p3578) target = $region88
        $region87: #{hgnn_model_forward_cf.5} parent=71 // pred_region
          %3581 = dma.done [#allocation4], 2048
        $region88: #{hgnn_model_forward_cf.5} parent=71 // pred_fallthru
          _
        // Predicated region
        $region89: #{hgnn_model_forward_cf.5} parent=71 // pred_check
          %p3582 = pneg %p385
        $region90: #{hgnn_model_forward_cf.5} parent=71 // pred_check_branch
          %3584 = sbr.rel (%p3582) target = $region92
        $region91: #{hgnn_model_forward_cf.5} parent=71 // pred_region
          %3585 = dma.done [#allocation6], 4096
        $region92: #{hgnn_model_forward_cf.5} parent=71 // pred_fallthru
          _
      $region72: #{hgnn_model_forward_cf.5} parent=5 // pred_fallthru
        _
      %p3586 = scmp.le.s32.totalorder 2, %s23
      // Predicated region
      $region93: #{hgnn_model_forward_cf.5} parent=5 // pred_check
        %p3587 = pneg %p3586
      $region94: #{hgnn_model_forward_cf.5} parent=5 // pred_check_branch
        %3589 = sbr.rel (%p3587) target = $region96
      $region95: #{hgnn_model_forward_cf.5} parent=5 // pred_region
        %s3590 = ssub.s32 %s23, 2
      $region96: #{hgnn_model_forward_cf.5} parent=5 // pred_fallthru
        _
    $region6: #{hgnn_model_forward_cf.5} parent=1 // loop_footer
      %s27 = sadd.s32 1, %s23
    $region7: #{hgnn_model_forward_cf.5} parent=1 // loop_footer_branch
      %22 = sbr.rel target = $region3
    $region8: #{hgnn_model_forward_cf.5} parent=1 // loop_exit
      _
    %3591 = vsyncpa [#allocation4], 1
    %s3592 = scalar_lea.sflag [#allocation4], 1
    %3593 = vsyncpa %s3592, 1
    %3594 = vsyncpa [#allocation6], 1

</llo_original>
